<compile_context>
chip_gen: v7x
topology: tpu7x:2x2x1
jax: 0.10.0
libtpu: 0.0.40
codegen_flags: <defaults>
</compile_context>

<pallas_src>
import functools
import math

import jax
import jax.numpy as jnp
from jax.experimental import pallas as pl
from jax.experimental.pallas import tpu as pltpu


# ----------------------------------------------------------------------------- kernel
def _bert_enc_kernel(
    mask_ref, x_ref,
    emb_g_ref, emb_b_ref,
    wqkv_ref, bqkv_ref, wo_ref, bo_ref, ln1g_ref, ln1b_ref,
    wi_ref, bi_ref, wf_ref, bf_ref, ln2g_ref, ln2b_ref,
    hw1_ref, hb1_ref, hw2_ref, hb2_ref,
    o_ref,
    *, num_layers, num_heads, head_dim, scale, eps):
    """Processes one full sequence (S tokens) per grid step, entirely in VMEM."""
    hidden = num_heads * head_dim

    def layernorm(h, g, b):
        mean = jnp.mean(h, axis=-1, keepdims=True)
        var = jnp.mean((h - mean) ** 2, axis=-1, keepdims=True)
        return (h - mean) * jax.lax.rsqrt(var + eps) * g + b

    def gelu(y):
        # TODO(synk): HF BERT uses exact erf-GELU; tanh approximation used here.
        c = math.sqrt(2.0 / math.pi)
        return 0.5 * y * (1.0 + jnp.tanh(c * (y + 0.044715 * y * y * y)))

    mask = mask_ref[0]                                    # (1, S) additive key mask, f32

    # ---- embedding LayerNorm (no zero residual) ----
    x = layernorm(x_ref[...].astype(jnp.float32), emb_g_ref[...], emb_b_ref[...])

    for l in range(num_layers):                           # static unrolled layer loop
        # ---- fused QKV projection: one MXU pass, 3*H-wide lane-dense output ----
        qkv = jnp.dot(x.astype(jnp.bfloat16), wqkv_ref[l],
                      preferred_element_type=jnp.float32) + bqkv_ref[l]   # (S, 3H) f32

        # ---- per-head attention (static loop; scores/ctx live in vregs) ----
        ctx_heads = []
        for hh in range(num_heads):
            q_h = qkv[:, hh * head_dim:(hh + 1) * head_dim].astype(jnp.bfloat16)
            k_h = qkv[:, hidden + hh * head_dim:
                         hidden + (hh + 1) * head_dim].astype(jnp.bfloat16)
            v_h = qkv[:, 2 * hidden + hh * head_dim:
                         2 * hidden + (hh + 1) * head_dim].astype(jnp.bfloat16)
            s = jax.lax.dot_general(q_h, k_h, (((1,), (1,)), ((), ())),
                                    preferred_element_type=jnp.float32) * scale  # (S, S)
            s = s + mask
            s = s - jnp.max(s, axis=-1, keepdims=True)
            p = jnp.exp(s)
            p = p * pl.reciprocal(jnp.sum(p, axis=-1, keepdims=True), approx=True)
            ctx_heads.append(jnp.dot(p.astype(jnp.bfloat16), v_h,
                                     preferred_element_type=jnp.float32))  # (S, hd)
        ctx = jnp.concatenate(ctx_heads, axis=-1)                          # (S, H)

        # ---- output projection, fused residual + LayerNorm epilogue ----
        attn_out = jnp.dot(ctx.astype(jnp.bfloat16), wo_ref[l],
                           preferred_element_type=jnp.float32) + bo_ref[l]
        x = layernorm(attn_out + x, ln1g_ref[l], ln1b_ref[l])

        # ---- FFN with fused GELU and residual + LayerNorm epilogue ----
        inter = jnp.dot(x.astype(jnp.bfloat16), wi_ref[l],
                        preferred_element_type=jnp.float32) + bi_ref[l]
        inter = gelu(inter)
        ffn = jnp.dot(inter.astype(jnp.bfloat16), wf_ref[l],
                      preferred_element_type=jnp.float32) + bf_ref[l]
        x = layernorm(ffn + x, ln2g_ref[l], ln2b_ref[l])

    # ---- enc_head: Linear(H -> 2T) -> ReLU -> Linear(2T -> T), fused ----
    h1 = jnp.dot(x.astype(jnp.bfloat16), hw1_ref[...],
                 preferred_element_type=jnp.float32) + hb1_ref[...]
    h1 = jnp.maximum(h1, 0.0)
    out = jnp.dot(h1.astype(jnp.bfloat16), hw2_ref[...],
                  preferred_element_type=jnp.float32) + hb2_ref[...]
    o_ref[...] = out.astype(o_ref.dtype)


# ----------------------------------------------------------------------------- params
def init_params(key, *, vocab=100, hidden=32, num_heads=4, num_layers=2,
                intermediate=64, max_pos=16, target_dim=16):
    keys = iter(jax.random.split(key, 64))

    def n(shape):
        return (0.02 * jax.random.normal(next(keys), shape)).astype(jnp.float32)

    wdt = jnp.bfloat16  # MXU-operand weights stored in bf16 (halves weight DMA bytes)

    wqkv, bqkv, wo, bo = [], [], [], []
    ln1g, ln1b, wi, bi, wf, bf, ln2g, ln2b = [], [], [], [], [], [], [], []
    for _ in range(num_layers):
        wq, wk, wv = n((hidden, hidden)), n((hidden, hidden)), n((hidden, hidden))
        wqkv.append(jnp.concatenate([wq, wk, wv], axis=1))            # (H, 3H)
        bqkv.append(jnp.zeros((1, 3 * hidden), jnp.float32))
        wo.append(n((hidden, hidden)))
        bo.append(jnp.zeros((1, hidden), jnp.float32))
        ln1g.append(jnp.ones((1, hidden), jnp.float32))
        ln1b.append(jnp.zeros((1, hidden), jnp.float32))
        wi.append(n((hidden, intermediate)))
        bi.append(jnp.zeros((1, intermediate), jnp.float32))
        wf.append(n((intermediate, hidden)))
        bf.append(jnp.zeros((1, hidden), jnp.float32))
        ln2g.append(jnp.ones((1, hidden), jnp.float32))
        ln2b.append(jnp.zeros((1, hidden), jnp.float32))

    return {
        "num_heads": num_heads,
        "word_emb": n((vocab, hidden)),
        "pos_emb": n((max_pos, hidden)),
        "type_emb": n((2, hidden)),
        "emb_ln_g": jnp.ones((1, hidden), jnp.float32),
        "emb_ln_b": jnp.zeros((1, hidden), jnp.float32),
        "w_qkv": jnp.stack(wqkv).astype(wdt),    # (L, H, 3H) bf16
        "b_qkv": jnp.stack(bqkv),                # (L, 1, 3H) f32
        "w_o": jnp.stack(wo).astype(wdt),
        "b_o": jnp.stack(bo),
        "ln1_g": jnp.stack(ln1g), "ln1_b": jnp.stack(ln1b),
        "w_i": jnp.stack(wi).astype(wdt), "b_i": jnp.stack(bi),
        "w_f": jnp.stack(wf).astype(wdt), "b_f": jnp.stack(bf),
        "ln2_g": jnp.stack(ln2g), "ln2_b": jnp.stack(ln2b),
        "head_w1": n((hidden, 2 * target_dim)).astype(wdt),
        "head_b1": jnp.zeros((1, 2 * target_dim), jnp.float32),
        "head_w2": n((2 * target_dim, target_dim)).astype(wdt),
        "head_b2": jnp.zeros((1, target_dim), jnp.float32),
    }


# ----------------------------------------------------------------------------- forward
def bert_enc_forward(params, input_ids, token_type_ids, attention_mask):
    """Mirrors BertEnc.forward: BERT last_hidden_state -> 2-layer MLP head."""
    B, S = input_ids.shape
    H = params["word_emb"].shape[1]
    nH = params["num_heads"]
    hd = H // nH
    L = params["w_qkv"].shape[0]
    T = params["head_w2"].shape[1]

    # ---- embeddings (gather is plain-JAX glue) ----
    pos = jnp.arange(S)
    emb = (params["word_emb"][input_ids]
           + params["pos_emb"][pos][None, :, :]
           + params["type_emb"][token_type_ids])
    x = emb.reshape(B * S, H).astype(jnp.float32)

    # HF-style extended additive attention mask
    ext_mask = ((1.0 - attention_mask.astype(jnp.float32)) * -1e4).reshape(B, 1, S)

    weights = (
        params["emb_ln_g"], params["emb_ln_b"],
        params["w_qkv"], params["b_qkv"], params["w_o"], params["b_o"],
        params["ln1_g"], params["ln1_b"],
        params["w_i"], params["b_i"], params["w_f"], params["b_f"],
        params["ln2_g"], params["ln2_b"],
        params["head_w1"], params["head_b1"], params["head_w2"], params["head_b2"],
    )

    def _const_index_map(ndim):
        zeros = (0,) * ndim

        def idx(b):                      # exactly one grid index argument
            return zeros

        return idx

    def full_spec(a):
        # Whole array resident in VMEM; constant index -> fetched once, reused
        # across all grid steps.
        return pl.BlockSpec(a.shape, _const_index_map(a.ndim))

    kernel = functools.partial(
        _bert_enc_kernel, num_layers=L, num_heads=nH, head_dim=hd,
        scale=1.0 / math.sqrt(hd), eps=1e-12)

    out = pl.pallas_call(
        kernel,
        out_shape=jax.ShapeDtypeStruct((B * S, T), jnp.float32),
        grid=(B,),
        in_specs=[pl.BlockSpec((1, 1, S), lambda b: (b, 0, 0)),   # additive mask
                  pl.BlockSpec((S, H), lambda b: (b, 0))]         # embedded tokens
                 + [full_spec(w) for w in weights],               # resident weights
        out_specs=pl.BlockSpec((S, T), lambda b: (b, 0)),
        compiler_params=pltpu.CompilerParams(
            dimension_semantics=("parallel",)),
    )(ext_mask, x, *weights)
    return out.reshape(B, S, T)


# ----------------------------------------------------------------------------- reference
def bert_enc_reference(params, input_ids, token_type_ids, attention_mask):
    """Pure-JAX mirror of the kernel math (same bf16 casts) for verification."""
    B, S = input_ids.shape
    H = params["word_emb"].shape[1]
    nH = params["num_heads"]
    hd = H // nH
    L = params["w_qkv"].shape[0]
    eps = 1e-12
    scale = 1.0 / math.sqrt(hd)
    cgelu = math.sqrt(2.0 / math.pi)

    def ln(h, g, b):
        mean = jnp.mean(h, axis=-1, keepdims=True)
        var = jnp.mean((h - mean) ** 2, axis=-1, keepdims=True)
        return (h - mean) * jax.lax.rsqrt(var + eps) * g + b

    def mm(a, w):
        return jnp.einsum("bsh,hk->bsk", a.astype(jnp.bfloat16), w,
                          preferred_element_type=jnp.float32)

    pos = jnp.arange(S)
    emb = (params["word_emb"][input_ids] + params["pos_emb"][pos][None, :, :]
           + params["type_emb"][token_type_ids]).astype(jnp.float32)
    mask = ((1.0 - attention_mask.astype(jnp.float32)) * -1e4)[:, None, None, :]

    x = ln(emb, params["emb_ln_g"][0], params["emb_ln_b"][0])
    for l in range(L):
        qkv = mm(x, params["w_qkv"][l]) + params["b_qkv"][l][0]
        q, k, v = jnp.split(qkv, 3, axis=-1)
        q = q.reshape(B, S, nH, hd).transpose(0, 2, 1, 3)
        k = k.reshape(B, S, nH, hd).transpose(0, 2, 1, 3)
        v = v.reshape(B, S, nH, hd).transpose(0, 2, 1, 3)
        s = jnp.einsum("bhqd,bhkd->bhqk", q.astype(jnp.bfloat16),
                       k.astype(jnp.bfloat16),
                       preferred_element_type=jnp.float32) * scale + mask
        p = jax.nn.softmax(s, axis=-1)
        ctx = jnp.einsum("bhqk,bhkd->bhqd", p.astype(jnp.bfloat16),
                         v.astype(jnp.bfloat16),
                         preferred_element_type=jnp.float32)
        ctx = ctx.transpose(0, 2, 1, 3).reshape(B, S, H)
        attn = mm(ctx, params["w_o"][l]) + params["b_o"][l][0]
        x = ln(attn + x, params["ln1_g"][l][0], params["ln1_b"][l][0])
        inter = mm(x, params["w_i"][l]) + params["b_i"][l][0]
        inter = 0.5 * inter * (1.0 + jnp.tanh(cgelu * (inter + 0.044715 * inter ** 3)))
        ffn = mm(inter, params["w_f"][l]) + params["b_f"][l][0]
        x = ln(ffn + x, params["ln2_g"][l][0], params["ln2_b"][l][0])

    h1 = jnp.maximum(mm(x, params["head_w1"]) + params["head_b1"][0], 0.0)
    return mm(h1, params["head_w2"]) + params["head_b2"][0]


# ----------------------------------------------------------------------------- main
if __name__ == "__main__":
    key = jax.random.PRNGKey(0)
    k_params, k_ids = jax.random.split(key)

    B, S = 2, 8
    VOCAB, HIDDEN, TARGET = 100, 32, 16

    params = init_params(k_params, vocab=VOCAB, hidden=HIDDEN, num_heads=4,
                         num_layers=2, intermediate=64, max_pos=16,
                         target_dim=TARGET)

    # deterministic synthetic "encoded_input"
    input_ids = jax.random.randint(k_ids, (B, S), 0, VOCAB, dtype=jnp.int32)
    token_type_ids = jnp.zeros((B, S), jnp.int32)
    attention_mask = jnp.array(
        [[1, 1, 1, 1, 1, 1, 1, 1],
         [1, 1, 1, 1, 1, 1, 0, 0]], dtype=jnp.int32)  # second example is padded

    fwd = jax.jit(functools.partial(bert_enc_forward, params))
    out = fwd(input_ids, token_type_ids, attention_mask)
    out = jax.block_until_ready(out)

    ref = bert_enc_reference(params, input_ids, token_type_ids, attention_mask)
    ref = jax.block_until_ready(ref)

    assert out.shape == (B, S, TARGET), out.shape
    assert bool(jnp.all(jnp.isfinite(out)))
    # approx reciprocal in softmax + bf16 MXU -> small tolerance
    assert bool(jnp.allclose(out, ref, atol=2e-2, rtol=0.0)), (
        float(jnp.max(jnp.abs(out - ref))))
    print("KERNEL_OK")
</pallas_src>

<mosaic_0001>
module attributes {stable_mosaic.version = 11 : i64} {
  func.func @_bert_enc_kernel(%arg0: i32, %arg1: memref<1x1x8xf32, #tpu.memory_space<vmem>>, %arg2: memref<8x32xf32, #tpu.memory_space<vmem>>, %arg3: memref<1x32xf32, #tpu.memory_space<vmem>>, %arg4: memref<1x32xf32, #tpu.memory_space<vmem>>, %arg5: memref<2x32x96xbf16, #tpu.memory_space<vmem>>, %arg6: memref<2x1x96xf32, #tpu.memory_space<vmem>>, %arg7: memref<2x32x32xbf16, #tpu.memory_space<vmem>>, %arg8: memref<2x1x32xf32, #tpu.memory_space<vmem>>, %arg9: memref<2x1x32xf32, #tpu.memory_space<vmem>>, %arg10: memref<2x1x32xf32, #tpu.memory_space<vmem>>, %arg11: memref<2x32x64xbf16, #tpu.memory_space<vmem>>, %arg12: memref<2x1x64xf32, #tpu.memory_space<vmem>>, %arg13: memref<2x64x32xbf16, #tpu.memory_space<vmem>>, %arg14: memref<2x1x32xf32, #tpu.memory_space<vmem>>, %arg15: memref<2x1x32xf32, #tpu.memory_space<vmem>>, %arg16: memref<2x1x32xf32, #tpu.memory_space<vmem>>, %arg17: memref<32x32xbf16, #tpu.memory_space<vmem>>, %arg18: memref<1x32xf32, #tpu.memory_space<vmem>>, %arg19: memref<32x16xbf16, #tpu.memory_space<vmem>>, %arg20: memref<1x16xf32, #tpu.memory_space<vmem>>, %arg21: memref<8x16xf32, #tpu.memory_space<vmem>>) attributes {dimension_semantics = [#tpu.dimension_semantics<parallel>], iteration_bounds = array<i64: 2>, scalar_prefetch = 0 : i64, scratch_operands = 0 : i64, tpu.core_type = #tpu.core_type<tc>, window_params = [{transform_indices = @transform_0, window_bounds = array<i64: 1, 1, 8>}, {transform_indices = @transform_1, window_bounds = array<i64: 8, 32>}, {pipeline_mode = #tpu.pipeline_mode<synchronous>, transform_indices = @transform_2, window_bounds = array<i64: 1, 32>}, {pipeline_mode = #tpu.pipeline_mode<synchronous>, transform_indices = @transform_3, window_bounds = array<i64: 1, 32>}, {pipeline_mode = #tpu.pipeline_mode<synchronous>, transform_indices = @transform_4, window_bounds = array<i64: 2, 32, 96>}, {pipeline_mode = #tpu.pipeline_mode<synchronous>, transform_indices = @transform_5, window_bounds = array<i64: 2, 1, 96>}, {pipeline_mode = #tpu.pipeline_mode<synchronous>, transform_indices = @transform_6, window_bounds = array<i64: 2, 32, 32>}, {pipeline_mode = #tpu.pipeline_mode<synchronous>, transform_indices = @transform_7, window_bounds = array<i64: 2, 1, 32>}, {pipeline_mode = #tpu.pipeline_mode<synchronous>, transform_indices = @transform_8, window_bounds = array<i64: 2, 1, 32>}, {pipeline_mode = #tpu.pipeline_mode<synchronous>, transform_indices = @transform_9, window_bounds = array<i64: 2, 1, 32>}, {pipeline_mode = #tpu.pipeline_mode<synchronous>, transform_indices = @transform_10, window_bounds = array<i64: 2, 32, 64>}, {pipeline_mode = #tpu.pipeline_mode<synchronous>, transform_indices = @transform_11, window_bounds = array<i64: 2, 1, 64>}, {pipeline_mode = #tpu.pipeline_mode<synchronous>, transform_indices = @transform_12, window_bounds = array<i64: 2, 64, 32>}, {pipeline_mode = #tpu.pipeline_mode<synchronous>, transform_indices = @transform_13, window_bounds = array<i64: 2, 1, 32>}, {pipeline_mode = #tpu.pipeline_mode<synchronous>, transform_indices = @transform_14, window_bounds = array<i64: 2, 1, 32>}, {pipeline_mode = #tpu.pipeline_mode<synchronous>, transform_indices = @transform_15, window_bounds = array<i64: 2, 1, 32>}, {pipeline_mode = #tpu.pipeline_mode<synchronous>, transform_indices = @transform_16, window_bounds = array<i64: 32, 32>}, {pipeline_mode = #tpu.pipeline_mode<synchronous>, transform_indices = @transform_17, window_bounds = array<i64: 1, 32>}, {pipeline_mode = #tpu.pipeline_mode<synchronous>, transform_indices = @transform_18, window_bounds = array<i64: 32, 16>}, {pipeline_mode = #tpu.pipeline_mode<synchronous>, transform_indices = @transform_19, window_bounds = array<i64: 1, 16>}, {transform_indices = @transform_20, window_bounds = array<i64: 8, 16>}]} {
    %c0 = arith.constant 0 : index
    %c0_0 = arith.constant 0 : index
    %c0_1 = arith.constant 0 : index
    %0 = vector.load %arg1[%c0, %c0_0, %c0_1] : memref<1x1x8xf32, #tpu.memory_space<vmem>>, vector<1x1x8xf32>
    %1 = vector.shape_cast %0 : vector<1x1x8xf32> to vector<1x8xf32>
    %c0_2 = arith.constant 0 : index
    %c0_3 = arith.constant 0 : index
    %2 = vector.load %arg2[%c0_2, %c0_3] : memref<8x32xf32, #tpu.memory_space<vmem>>, vector<8x32xf32>
    %c0_4 = arith.constant 0 : index
    %c0_5 = arith.constant 0 : index
    %3 = vector.load %arg3[%c0_4, %c0_5] : memref<1x32xf32, #tpu.memory_space<vmem>>, vector<1x32xf32>
    %c0_6 = arith.constant 0 : index
    %c0_7 = arith.constant 0 : index
    %4 = vector.load %arg4[%c0_6, %c0_7] : memref<1x32xf32, #tpu.memory_space<vmem>>, vector<1x32xf32>
    %cst = arith.constant dense<0.000000e+00> : vector<8xf32>
    %5 = vector.multi_reduction <add>, %2, %cst [1] : vector<8x32xf32> to vector<8xf32>
    %6 = vector.shape_cast %5 : vector<8xf32> to vector<8x1xf32>
    %cst_8 = arith.constant 3.200000e+01 : f32
    %7 = vector.broadcast %cst_8 : f32 to vector<8x1xf32>
    %8 = arith.divf %6, %7 : vector<8x1xf32>
    %9 = vector.broadcast %8 : vector<8x1xf32> to vector<8x32xf32>
    %10 = arith.subf %2, %9 : vector<8x32xf32>
    %11 = arith.mulf %10, %10 : vector<8x32xf32>
    %cst_9 = arith.constant dense<0.000000e+00> : vector<8xf32>
    %12 = vector.multi_reduction <add>, %11, %cst_9 [1] : vector<8x32xf32> to vector<8xf32>
    %13 = vector.shape_cast %12 : vector<8xf32> to vector<8x1xf32>
    %cst_10 = arith.constant 3.200000e+01 : f32
    %14 = vector.broadcast %cst_10 : f32 to vector<8x1xf32>
    %15 = arith.divf %13, %14 : vector<8x1xf32>
    %16 = vector.broadcast %8 : vector<8x1xf32> to vector<8x32xf32>
    %17 = arith.subf %2, %16 : vector<8x32xf32>
    %cst_11 = arith.constant 9.99999996E-13 : f32
    %18 = vector.broadcast %cst_11 : f32 to vector<8x1xf32>
    %19 = arith.addf %15, %18 : vector<8x1xf32>
    %20 = math.rsqrt %19 : vector<8x1xf32>
    %21 = vector.broadcast %20 : vector<8x1xf32> to vector<8x32xf32>
    %22 = arith.mulf %17, %21 : vector<8x32xf32>
    %23 = vector.broadcast %3 : vector<1x32xf32> to vector<8x32xf32>
    %24 = arith.mulf %22, %23 : vector<8x32xf32>
    %25 = vector.broadcast %4 : vector<1x32xf32> to vector<8x32xf32>
    %26 = arith.addf %24, %25 : vector<8x32xf32>
    %27 = arith.truncf %26 : vector<8x32xf32> to vector<8x32xbf16>
    %c0_12 = arith.constant 0 : index
    %c0_13 = arith.constant 0 : index
    %c0_14 = arith.constant 0 : index
    %28 = vector.load %arg5[%c0_12, %c0_13, %c0_14] : memref<2x32x96xbf16, #tpu.memory_space<vmem>>, vector<1x32x96xbf16>
    %29 = vector.shape_cast %28 : vector<1x32x96xbf16> to vector<32x96xbf16>
    %cst_15 = arith.constant dense<0.000000e+00> : vector<8x96xf32>
    %30 = tpu.matmul %27, %29, %cst_15 {dimension_numbers = #tpu.dot_dimension_numbers<[1], [0], [0], [1], [0, 0, 1, 1], [], []>} : vector<8x32xbf16>, vector<32x96xbf16>, vector<8x96xf32> -> vector<8x96xf32>
    %c0_16 = arith.constant 0 : index
    %c0_17 = arith.constant 0 : index
    %c0_18 = arith.constant 0 : index
    %31 = vector.load %arg6[%c0_16, %c0_17, %c0_18] : memref<2x1x96xf32, #tpu.memory_space<vmem>>, vector<1x1x96xf32>
    %32 = vector.shape_cast %31 : vector<1x1x96xf32> to vector<1x96xf32>
    %33 = vector.broadcast %32 : vector<1x96xf32> to vector<8x96xf32>
    %34 = arith.addf %30, %33 : vector<8x96xf32>
    %35 = vector.extract_strided_slice %34 {offsets = [0, 0], sizes = [8, 8], strides = [1, 1]} : vector<8x96xf32> to vector<8x8xf32>
    %36 = arith.truncf %35 : vector<8x8xf32> to vector<8x8xbf16>
    %37 = vector.extract_strided_slice %34 {offsets = [0, 32], sizes = [8, 8], strides = [1, 1]} : vector<8x96xf32> to vector<8x8xf32>
    %38 = arith.truncf %37 : vector<8x8xf32> to vector<8x8xbf16>
    %39 = vector.extract_strided_slice %34 {offsets = [0, 64], sizes = [8, 8], strides = [1, 1]} : vector<8x96xf32> to vector<8x8xf32>
    %40 = arith.truncf %39 : vector<8x8xf32> to vector<8x8xbf16>
    %cst_19 = arith.constant dense<0.000000e+00> : vector<8x8xf32>
    %41 = tpu.matmul %36, %38, %cst_19 {dimension_numbers = #tpu.dot_dimension_numbers<[1], [1], [0], [0], [0, 0, 1, 0], [], []>} : vector<8x8xbf16>, vector<8x8xbf16>, vector<8x8xf32> -> vector<8x8xf32>
    %cst_20 = arith.constant 0.353553385 : f32
    %42 = vector.broadcast %cst_20 : f32 to vector<8x8xf32>
    %43 = arith.mulf %41, %42 : vector<8x8xf32>
    %44 = vector.broadcast %1 : vector<1x8xf32> to vector<8x8xf32>
    %45 = arith.addf %43, %44 : vector<8x8xf32>
    %cst_21 = arith.constant dense<0xFF800000> : vector<8xf32>
    %46 = vector.multi_reduction <maximumf>, %45, %cst_21 [1] : vector<8x8xf32> to vector<8xf32>
    %47 = vector.shape_cast %46 : vector<8xf32> to vector<8x1xf32>
    %48 = vector.broadcast %47 : vector<8x1xf32> to vector<8x8xf32>
    %49 = arith.subf %45, %48 : vector<8x8xf32>
    %50 = math.exp %49 : vector<8x8xf32>
    %cst_22 = arith.constant dense<0.000000e+00> : vector<8xf32>
    %51 = vector.multi_reduction <add>, %50, %cst_22 [1] : vector<8x8xf32> to vector<8xf32>
    %52 = vector.shape_cast %51 : vector<8xf32> to vector<8x1xf32>
    %53 = tpu.reciprocal %52 {approx = true} : vector<8x1xf32> -> vector<8x1xf32>
    %54 = vector.broadcast %53 : vector<8x1xf32> to vector<8x8xf32>
    %55 = arith.mulf %50, %54 : vector<8x8xf32>
    %56 = arith.truncf %55 : vector<8x8xf32> to vector<8x8xbf16>
    %cst_23 = arith.constant dense<0.000000e+00> : vector<8x8xf32>
    %57 = tpu.matmul %56, %40, %cst_23 {dimension_numbers = #tpu.dot_dimension_numbers<[1], [0], [0], [1], [0, 0, 1, 1], [], []>} : vector<8x8xbf16>, vector<8x8xbf16>, vector<8x8xf32> -> vector<8x8xf32>
    %58 = vector.extract_strided_slice %34 {offsets = [0, 8], sizes = [8, 8], strides = [1, 1]} : vector<8x96xf32> to vector<8x8xf32>
    %59 = arith.truncf %58 : vector<8x8xf32> to vector<8x8xbf16>
    %60 = vector.extract_strided_slice %34 {offsets = [0, 40], sizes = [8, 8], strides = [1, 1]} : vector<8x96xf32> to vector<8x8xf32>
    %61 = arith.truncf %60 : vector<8x8xf32> to vector<8x8xbf16>
    %62 = vector.extract_strided_slice %34 {offsets = [0, 72], sizes = [8, 8], strides = [1, 1]} : vector<8x96xf32> to vector<8x8xf32>
    %63 = arith.truncf %62 : vector<8x8xf32> to vector<8x8xbf16>
    %cst_24 = arith.constant dense<0.000000e+00> : vector<8x8xf32>
    %64 = tpu.matmul %59, %61, %cst_24 {dimension_numbers = #tpu.dot_dimension_numbers<[1], [1], [0], [0], [0, 0, 1, 0], [], []>} : vector<8x8xbf16>, vector<8x8xbf16>, vector<8x8xf32> -> vector<8x8xf32>
    %cst_25 = arith.constant 0.353553385 : f32
    %65 = vector.broadcast %cst_25 : f32 to vector<8x8xf32>
    %66 = arith.mulf %64, %65 : vector<8x8xf32>
    %67 = vector.broadcast %1 : vector<1x8xf32> to vector<8x8xf32>
    %68 = arith.addf %66, %67 : vector<8x8xf32>
    %cst_26 = arith.constant dense<0xFF800000> : vector<8xf32>
    %69 = vector.multi_reduction <maximumf>, %68, %cst_26 [1] : vector<8x8xf32> to vector<8xf32>
    %70 = vector.shape_cast %69 : vector<8xf32> to vector<8x1xf32>
    %71 = vector.broadcast %70 : vector<8x1xf32> to vector<8x8xf32>
    %72 = arith.subf %68, %71 : vector<8x8xf32>
    %73 = math.exp %72 : vector<8x8xf32>
    %cst_27 = arith.constant dense<0.000000e+00> : vector<8xf32>
    %74 = vector.multi_reduction <add>, %73, %cst_27 [1] : vector<8x8xf32> to vector<8xf32>
    %75 = vector.shape_cast %74 : vector<8xf32> to vector<8x1xf32>
    %76 = tpu.reciprocal %75 {approx = true} : vector<8x1xf32> -> vector<8x1xf32>
    %77 = vector.broadcast %76 : vector<8x1xf32> to vector<8x8xf32>
    %78 = arith.mulf %73, %77 : vector<8x8xf32>
    %79 = arith.truncf %78 : vector<8x8xf32> to vector<8x8xbf16>
    %cst_28 = arith.constant dense<0.000000e+00> : vector<8x8xf32>
    %80 = tpu.matmul %79, %63, %cst_28 {dimension_numbers = #tpu.dot_dimension_numbers<[1], [0], [0], [1], [0, 0, 1, 1], [], []>} : vector<8x8xbf16>, vector<8x8xbf16>, vector<8x8xf32> -> vector<8x8xf32>
    %81 = vector.extract_strided_slice %34 {offsets = [0, 16], sizes = [8, 8], strides = [1, 1]} : vector<8x96xf32> to vector<8x8xf32>
    %82 = arith.truncf %81 : vector<8x8xf32> to vector<8x8xbf16>
    %83 = vector.extract_strided_slice %34 {offsets = [0, 48], sizes = [8, 8], strides = [1, 1]} : vector<8x96xf32> to vector<8x8xf32>
    %84 = arith.truncf %83 : vector<8x8xf32> to vector<8x8xbf16>
    %85 = vector.extract_strided_slice %34 {offsets = [0, 80], sizes = [8, 8], strides = [1, 1]} : vector<8x96xf32> to vector<8x8xf32>
    %86 = arith.truncf %85 : vector<8x8xf32> to vector<8x8xbf16>
    %cst_29 = arith.constant dense<0.000000e+00> : vector<8x8xf32>
    %87 = tpu.matmul %82, %84, %cst_29 {dimension_numbers = #tpu.dot_dimension_numbers<[1], [1], [0], [0], [0, 0, 1, 0], [], []>} : vector<8x8xbf16>, vector<8x8xbf16>, vector<8x8xf32> -> vector<8x8xf32>
    %cst_30 = arith.constant 0.353553385 : f32
    %88 = vector.broadcast %cst_30 : f32 to vector<8x8xf32>
    %89 = arith.mulf %87, %88 : vector<8x8xf32>
    %90 = vector.broadcast %1 : vector<1x8xf32> to vector<8x8xf32>
    %91 = arith.addf %89, %90 : vector<8x8xf32>
    %cst_31 = arith.constant dense<0xFF800000> : vector<8xf32>
    %92 = vector.multi_reduction <maximumf>, %91, %cst_31 [1] : vector<8x8xf32> to vector<8xf32>
    %93 = vector.shape_cast %92 : vector<8xf32> to vector<8x1xf32>
    %94 = vector.broadcast %93 : vector<8x1xf32> to vector<8x8xf32>
    %95 = arith.subf %91, %94 : vector<8x8xf32>
    %96 = math.exp %95 : vector<8x8xf32>
    %cst_32 = arith.constant dense<0.000000e+00> : vector<8xf32>
    %97 = vector.multi_reduction <add>, %96, %cst_32 [1] : vector<8x8xf32> to vector<8xf32>
    %98 = vector.shape_cast %97 : vector<8xf32> to vector<8x1xf32>
    %99 = tpu.reciprocal %98 {approx = true} : vector<8x1xf32> -> vector<8x1xf32>
    %100 = vector.broadcast %99 : vector<8x1xf32> to vector<8x8xf32>
    %101 = arith.mulf %96, %100 : vector<8x8xf32>
    %102 = arith.truncf %101 : vector<8x8xf32> to vector<8x8xbf16>
    %cst_33 = arith.constant dense<0.000000e+00> : vector<8x8xf32>
    %103 = tpu.matmul %102, %86, %cst_33 {dimension_numbers = #tpu.dot_dimension_numbers<[1], [0], [0], [1], [0, 0, 1, 1], [], []>} : vector<8x8xbf16>, vector<8x8xbf16>, vector<8x8xf32> -> vector<8x8xf32>
    %104 = vector.extract_strided_slice %34 {offsets = [0, 24], sizes = [8, 8], strides = [1, 1]} : vector<8x96xf32> to vector<8x8xf32>
    %105 = arith.truncf %104 : vector<8x8xf32> to vector<8x8xbf16>
    %106 = vector.extract_strided_slice %34 {offsets = [0, 56], sizes = [8, 8], strides = [1, 1]} : vector<8x96xf32> to vector<8x8xf32>
    %107 = arith.truncf %106 : vector<8x8xf32> to vector<8x8xbf16>
    %108 = vector.extract_strided_slice %34 {offsets = [0, 88], sizes = [8, 8], strides = [1, 1]} : vector<8x96xf32> to vector<8x8xf32>
    %109 = arith.truncf %108 : vector<8x8xf32> to vector<8x8xbf16>
    %cst_34 = arith.constant dense<0.000000e+00> : vector<8x8xf32>
    %110 = tpu.matmul %105, %107, %cst_34 {dimension_numbers = #tpu.dot_dimension_numbers<[1], [1], [0], [0], [0, 0, 1, 0], [], []>} : vector<8x8xbf16>, vector<8x8xbf16>, vector<8x8xf32> -> vector<8x8xf32>
    %cst_35 = arith.constant 0.353553385 : f32
    %111 = vector.broadcast %cst_35 : f32 to vector<8x8xf32>
    %112 = arith.mulf %110, %111 : vector<8x8xf32>
    %113 = vector.broadcast %1 : vector<1x8xf32> to vector<8x8xf32>
    %114 = arith.addf %112, %113 : vector<8x8xf32>
    %cst_36 = arith.constant dense<0xFF800000> : vector<8xf32>
    %115 = vector.multi_reduction <maximumf>, %114, %cst_36 [1] : vector<8x8xf32> to vector<8xf32>
    %116 = vector.shape_cast %115 : vector<8xf32> to vector<8x1xf32>
    %117 = vector.broadcast %116 : vector<8x1xf32> to vector<8x8xf32>
    %118 = arith.subf %114, %117 : vector<8x8xf32>
    %119 = math.exp %118 : vector<8x8xf32>
    %cst_37 = arith.constant dense<0.000000e+00> : vector<8xf32>
    %120 = vector.multi_reduction <add>, %119, %cst_37 [1] : vector<8x8xf32> to vector<8xf32>
    %121 = vector.shape_cast %120 : vector<8xf32> to vector<8x1xf32>
    %122 = tpu.reciprocal %121 {approx = true} : vector<8x1xf32> -> vector<8x1xf32>
    %123 = vector.broadcast %122 : vector<8x1xf32> to vector<8x8xf32>
    %124 = arith.mulf %119, %123 : vector<8x8xf32>
    %125 = arith.truncf %124 : vector<8x8xf32> to vector<8x8xbf16>
    %cst_38 = arith.constant dense<0.000000e+00> : vector<8x8xf32>
    %126 = tpu.matmul %125, %109, %cst_38 {dimension_numbers = #tpu.dot_dimension_numbers<[1], [0], [0], [1], [0, 0, 1, 1], [], []>} : vector<8x8xbf16>, vector<8x8xbf16>, vector<8x8xf32> -> vector<8x8xf32>
    %127 = tpu.concatenate %57, %80, %103, %126 in 1 : vector<8x8xf32>, vector<8x8xf32>, vector<8x8xf32>, vector<8x8xf32> -> vector<8x32xf32>
    %128 = arith.truncf %127 : vector<8x32xf32> to vector<8x32xbf16>
    %c0_39 = arith.constant 0 : index
    %c0_40 = arith.constant 0 : index
    %c0_41 = arith.constant 0 : index
    %129 = vector.load %arg7[%c0_39, %c0_40, %c0_41] : memref<2x32x32xbf16, #tpu.memory_space<vmem>>, vector<1x32x32xbf16>
    %130 = vector.shape_cast %129 : vector<1x32x32xbf16> to vector<32x32xbf16>
    %cst_42 = arith.constant dense<0.000000e+00> : vector<8x32xf32>
    %131 = tpu.matmul %128, %130, %cst_42 {dimension_numbers = #tpu.dot_dimension_numbers<[1], [0], [0], [1], [0, 0, 1, 1], [], []>} : vector<8x32xbf16>, vector<32x32xbf16>, vector<8x32xf32> -> vector<8x32xf32>
    %c0_43 = arith.constant 0 : index
    %c0_44 = arith.constant 0 : index
    %c0_45 = arith.constant 0 : index
    %132 = vector.load %arg8[%c0_43, %c0_44, %c0_45] : memref<2x1x32xf32, #tpu.memory_space<vmem>>, vector<1x1x32xf32>
    %133 = vector.shape_cast %132 : vector<1x1x32xf32> to vector<1x32xf32>
    %134 = vector.broadcast %133 : vector<1x32xf32> to vector<8x32xf32>
    %135 = arith.addf %131, %134 : vector<8x32xf32>
    %136 = arith.addf %135, %26 : vector<8x32xf32>
    %c0_46 = arith.constant 0 : index
    %c0_47 = arith.constant 0 : index
    %c0_48 = arith.constant 0 : index
    %137 = vector.load %arg9[%c0_46, %c0_47, %c0_48] : memref<2x1x32xf32, #tpu.memory_space<vmem>>, vector<1x1x32xf32>
    %138 = vector.shape_cast %137 : vector<1x1x32xf32> to vector<1x32xf32>
    %c0_49 = arith.constant 0 : index
    %c0_50 = arith.constant 0 : index
    %c0_51 = arith.constant 0 : index
    %139 = vector.load %arg10[%c0_49, %c0_50, %c0_51] : memref<2x1x32xf32, #tpu.memory_space<vmem>>, vector<1x1x32xf32>
    %140 = vector.shape_cast %139 : vector<1x1x32xf32> to vector<1x32xf32>
    %cst_52 = arith.constant dense<0.000000e+00> : vector<8xf32>
    %141 = vector.multi_reduction <add>, %136, %cst_52 [1] : vector<8x32xf32> to vector<8xf32>
    %142 = vector.shape_cast %141 : vector<8xf32> to vector<8x1xf32>
    %cst_53 = arith.constant 3.200000e+01 : f32
    %143 = vector.broadcast %cst_53 : f32 to vector<8x1xf32>
    %144 = arith.divf %142, %143 : vector<8x1xf32>
    %145 = vector.broadcast %144 : vector<8x1xf32> to vector<8x32xf32>
    %146 = arith.subf %136, %145 : vector<8x32xf32>
    %147 = arith.mulf %146, %146 : vector<8x32xf32>
    %cst_54 = arith.constant dense<0.000000e+00> : vector<8xf32>
    %148 = vector.multi_reduction <add>, %147, %cst_54 [1] : vector<8x32xf32> to vector<8xf32>
    %149 = vector.shape_cast %148 : vector<8xf32> to vector<8x1xf32>
    %cst_55 = arith.constant 3.200000e+01 : f32
    %150 = vector.broadcast %cst_55 : f32 to vector<8x1xf32>
    %151 = arith.divf %149, %150 : vector<8x1xf32>
    %152 = vector.broadcast %144 : vector<8x1xf32> to vector<8x32xf32>
    %153 = arith.subf %136, %152 : vector<8x32xf32>
    %cst_56 = arith.constant 9.99999996E-13 : f32
    %154 = vector.broadcast %cst_56 : f32 to vector<8x1xf32>
    %155 = arith.addf %151, %154 : vector<8x1xf32>
    %156 = math.rsqrt %155 : vector<8x1xf32>
    %157 = vector.broadcast %156 : vector<8x1xf32> to vector<8x32xf32>
    %158 = arith.mulf %153, %157 : vector<8x32xf32>
    %159 = vector.broadcast %138 : vector<1x32xf32> to vector<8x32xf32>
    %160 = arith.mulf %158, %159 : vector<8x32xf32>
    %161 = vector.broadcast %140 : vector<1x32xf32> to vector<8x32xf32>
    %162 = arith.addf %160, %161 : vector<8x32xf32>
    %163 = arith.truncf %162 : vector<8x32xf32> to vector<8x32xbf16>
    %c0_57 = arith.constant 0 : index
    %c0_58 = arith.constant 0 : index
    %c0_59 = arith.constant 0 : index
    %164 = vector.load %arg11[%c0_57, %c0_58, %c0_59] : memref<2x32x64xbf16, #tpu.memory_space<vmem>>, vector<1x32x64xbf16>
    %165 = vector.shape_cast %164 : vector<1x32x64xbf16> to vector<32x64xbf16>
    %cst_60 = arith.constant dense<0.000000e+00> : vector<8x64xf32>
    %166 = tpu.matmul %163, %165, %cst_60 {dimension_numbers = #tpu.dot_dimension_numbers<[1], [0], [0], [1], [0, 0, 1, 1], [], []>} : vector<8x32xbf16>, vector<32x64xbf16>, vector<8x64xf32> -> vector<8x64xf32>
    %c0_61 = arith.constant 0 : index
    %c0_62 = arith.constant 0 : index
    %c0_63 = arith.constant 0 : index
    %167 = vector.load %arg12[%c0_61, %c0_62, %c0_63] : memref<2x1x64xf32, #tpu.memory_space<vmem>>, vector<1x1x64xf32>
    %168 = vector.shape_cast %167 : vector<1x1x64xf32> to vector<1x64xf32>
    %169 = vector.broadcast %168 : vector<1x64xf32> to vector<8x64xf32>
    %170 = arith.addf %166, %169 : vector<8x64xf32>
    %cst_64 = arith.constant 5.000000e-01 : f32
    %171 = vector.broadcast %cst_64 : f32 to vector<8x64xf32>
    %172 = arith.mulf %171, %170 : vector<8x64xf32>
    %cst_65 = arith.constant 4.471500e-02 : f32
    %173 = vector.broadcast %cst_65 : f32 to vector<8x64xf32>
    %174 = arith.mulf %173, %170 : vector<8x64xf32>
    %175 = arith.mulf %174, %170 : vector<8x64xf32>
    %176 = arith.mulf %175, %170 : vector<8x64xf32>
    %177 = arith.addf %170, %176 : vector<8x64xf32>
    %cst_66 = arith.constant 0.797884583 : f32
    %178 = vector.broadcast %cst_66 : f32 to vector<8x64xf32>
    %179 = arith.mulf %178, %177 : vector<8x64xf32>
    %180 = math.tanh %179 : vector<8x64xf32>
    %cst_67 = arith.constant 1.000000e+00 : f32
    %181 = vector.broadcast %cst_67 : f32 to vector<8x64xf32>
    %182 = arith.addf %181, %180 : vector<8x64xf32>
    %183 = arith.mulf %172, %182 : vector<8x64xf32>
    %184 = arith.truncf %183 : vector<8x64xf32> to vector<8x64xbf16>
    %c0_68 = arith.constant 0 : index
    %c0_69 = arith.constant 0 : index
    %c0_70 = arith.constant 0 : index
    %185 = vector.load %arg13[%c0_68, %c0_69, %c0_70] : memref<2x64x32xbf16, #tpu.memory_space<vmem>>, vector<1x64x32xbf16>
    %186 = vector.shape_cast %185 : vector<1x64x32xbf16> to vector<64x32xbf16>
    %cst_71 = arith.constant dense<0.000000e+00> : vector<8x32xf32>
    %187 = tpu.matmul %184, %186, %cst_71 {dimension_numbers = #tpu.dot_dimension_numbers<[1], [0], [0], [1], [0, 0, 1, 1], [], []>} : vector<8x64xbf16>, vector<64x32xbf16>, vector<8x32xf32> -> vector<8x32xf32>
    %c0_72 = arith.constant 0 : index
    %c0_73 = arith.constant 0 : index
    %c0_74 = arith.constant 0 : index
    %188 = vector.load %arg14[%c0_72, %c0_73, %c0_74] : memref<2x1x32xf32, #tpu.memory_space<vmem>>, vector<1x1x32xf32>
    %189 = vector.shape_cast %188 : vector<1x1x32xf32> to vector<1x32xf32>
    %190 = vector.broadcast %189 : vector<1x32xf32> to vector<8x32xf32>
    %191 = arith.addf %187, %190 : vector<8x32xf32>
    %192 = arith.addf %191, %162 : vector<8x32xf32>
    %c0_75 = arith.constant 0 : index
    %c0_76 = arith.constant 0 : index
    %c0_77 = arith.constant 0 : index
    %193 = vector.load %arg15[%c0_75, %c0_76, %c0_77] : memref<2x1x32xf32, #tpu.memory_space<vmem>>, vector<1x1x32xf32>
    %194 = vector.shape_cast %193 : vector<1x1x32xf32> to vector<1x32xf32>
    %c0_78 = arith.constant 0 : index
    %c0_79 = arith.constant 0 : index
    %c0_80 = arith.constant 0 : index
    %195 = vector.load %arg16[%c0_78, %c0_79, %c0_80] : memref<2x1x32xf32, #tpu.memory_space<vmem>>, vector<1x1x32xf32>
    %196 = vector.shape_cast %195 : vector<1x1x32xf32> to vector<1x32xf32>
    %cst_81 = arith.constant dense<0.000000e+00> : vector<8xf32>
    %197 = vector.multi_reduction <add>, %192, %cst_81 [1] : vector<8x32xf32> to vector<8xf32>
    %198 = vector.shape_cast %197 : vector<8xf32> to vector<8x1xf32>
    %cst_82 = arith.constant 3.200000e+01 : f32
    %199 = vector.broadcast %cst_82 : f32 to vector<8x1xf32>
    %200 = arith.divf %198, %199 : vector<8x1xf32>
    %201 = vector.broadcast %200 : vector<8x1xf32> to vector<8x32xf32>
    %202 = arith.subf %192, %201 : vector<8x32xf32>
    %203 = arith.mulf %202, %202 : vector<8x32xf32>
    %cst_83 = arith.constant dense<0.000000e+00> : vector<8xf32>
    %204 = vector.multi_reduction <add>, %203, %cst_83 [1] : vector<8x32xf32> to vector<8xf32>
    %205 = vector.shape_cast %204 : vector<8xf32> to vector<8x1xf32>
    %cst_84 = arith.constant 3.200000e+01 : f32
    %206 = vector.broadcast %cst_84 : f32 to vector<8x1xf32>
    %207 = arith.divf %205, %206 : vector<8x1xf32>
    %208 = vector.broadcast %200 : vector<8x1xf32> to vector<8x32xf32>
    %209 = arith.subf %192, %208 : vector<8x32xf32>
    %cst_85 = arith.constant 9.99999996E-13 : f32
    %210 = vector.broadcast %cst_85 : f32 to vector<8x1xf32>
    %211 = arith.addf %207, %210 : vector<8x1xf32>
    %212 = math.rsqrt %211 : vector<8x1xf32>
    %213 = vector.broadcast %212 : vector<8x1xf32> to vector<8x32xf32>
    %214 = arith.mulf %209, %213 : vector<8x32xf32>
    %215 = vector.broadcast %194 : vector<1x32xf32> to vector<8x32xf32>
    %216 = arith.mulf %214, %215 : vector<8x32xf32>
    %217 = vector.broadcast %196 : vector<1x32xf32> to vector<8x32xf32>
    %218 = arith.addf %216, %217 : vector<8x32xf32>
    %219 = arith.truncf %218 : vector<8x32xf32> to vector<8x32xbf16>
    %c1 = arith.constant 1 : index
    %c0_86 = arith.constant 0 : index
    %c0_87 = arith.constant 0 : index
    %220 = vector.load %arg5[%c1, %c0_86, %c0_87] : memref<2x32x96xbf16, #tpu.memory_space<vmem>>, vector<1x32x96xbf16>
    %221 = vector.shape_cast %220 : vector<1x32x96xbf16> to vector<32x96xbf16>
    %cst_88 = arith.constant dense<0.000000e+00> : vector<8x96xf32>
    %222 = tpu.matmul %219, %221, %cst_88 {dimension_numbers = #tpu.dot_dimension_numbers<[1], [0], [0], [1], [0, 0, 1, 1], [], []>} : vector<8x32xbf16>, vector<32x96xbf16>, vector<8x96xf32> -> vector<8x96xf32>
    %c1_89 = arith.constant 1 : index
    %c0_90 = arith.constant 0 : index
    %c0_91 = arith.constant 0 : index
    %223 = vector.load %arg6[%c1_89, %c0_90, %c0_91] : memref<2x1x96xf32, #tpu.memory_space<vmem>>, vector<1x1x96xf32>
    %224 = vector.shape_cast %223 : vector<1x1x96xf32> to vector<1x96xf32>
    %225 = vector.broadcast %224 : vector<1x96xf32> to vector<8x96xf32>
    %226 = arith.addf %222, %225 : vector<8x96xf32>
    %227 = vector.extract_strided_slice %226 {offsets = [0, 0], sizes = [8, 8], strides = [1, 1]} : vector<8x96xf32> to vector<8x8xf32>
    %228 = arith.truncf %227 : vector<8x8xf32> to vector<8x8xbf16>
    %229 = vector.extract_strided_slice %226 {offsets = [0, 32], sizes = [8, 8], strides = [1, 1]} : vector<8x96xf32> to vector<8x8xf32>
    %230 = arith.truncf %229 : vector<8x8xf32> to vector<8x8xbf16>
    %231 = vector.extract_strided_slice %226 {offsets = [0, 64], sizes = [8, 8], strides = [1, 1]} : vector<8x96xf32> to vector<8x8xf32>
    %232 = arith.truncf %231 : vector<8x8xf32> to vector<8x8xbf16>
    %cst_92 = arith.constant dense<0.000000e+00> : vector<8x8xf32>
    %233 = tpu.matmul %228, %230, %cst_92 {dimension_numbers = #tpu.dot_dimension_numbers<[1], [1], [0], [0], [0, 0, 1, 0], [], []>} : vector<8x8xbf16>, vector<8x8xbf16>, vector<8x8xf32> -> vector<8x8xf32>
    %cst_93 = arith.constant 0.353553385 : f32
    %234 = vector.broadcast %cst_93 : f32 to vector<8x8xf32>
    %235 = arith.mulf %233, %234 : vector<8x8xf32>
    %236 = vector.broadcast %1 : vector<1x8xf32> to vector<8x8xf32>
    %237 = arith.addf %235, %236 : vector<8x8xf32>
    %cst_94 = arith.constant dense<0xFF800000> : vector<8xf32>
    %238 = vector.multi_reduction <maximumf>, %237, %cst_94 [1] : vector<8x8xf32> to vector<8xf32>
    %239 = vector.shape_cast %238 : vector<8xf32> to vector<8x1xf32>
    %240 = vector.broadcast %239 : vector<8x1xf32> to vector<8x8xf32>
    %241 = arith.subf %237, %240 : vector<8x8xf32>
    %242 = math.exp %241 : vector<8x8xf32>
    %cst_95 = arith.constant dense<0.000000e+00> : vector<8xf32>
    %243 = vector.multi_reduction <add>, %242, %cst_95 [1] : vector<8x8xf32> to vector<8xf32>
    %244 = vector.shape_cast %243 : vector<8xf32> to vector<8x1xf32>
    %245 = tpu.reciprocal %244 {approx = true} : vector<8x1xf32> -> vector<8x1xf32>
    %246 = vector.broadcast %245 : vector<8x1xf32> to vector<8x8xf32>
    %247 = arith.mulf %242, %246 : vector<8x8xf32>
    %248 = arith.truncf %247 : vector<8x8xf32> to vector<8x8xbf16>
    %cst_96 = arith.constant dense<0.000000e+00> : vector<8x8xf32>
    %249 = tpu.matmul %248, %232, %cst_96 {dimension_numbers = #tpu.dot_dimension_numbers<[1], [0], [0], [1], [0, 0, 1, 1], [], []>} : vector<8x8xbf16>, vector<8x8xbf16>, vector<8x8xf32> -> vector<8x8xf32>
    %250 = vector.extract_strided_slice %226 {offsets = [0, 8], sizes = [8, 8], strides = [1, 1]} : vector<8x96xf32> to vector<8x8xf32>
    %251 = arith.truncf %250 : vector<8x8xf32> to vector<8x8xbf16>
    %252 = vector.extract_strided_slice %226 {offsets = [0, 40], sizes = [8, 8], strides = [1, 1]} : vector<8x96xf32> to vector<8x8xf32>
    %253 = arith.truncf %252 : vector<8x8xf32> to vector<8x8xbf16>
    %254 = vector.extract_strided_slice %226 {offsets = [0, 72], sizes = [8, 8], strides = [1, 1]} : vector<8x96xf32> to vector<8x8xf32>
    %255 = arith.truncf %254 : vector<8x8xf32> to vector<8x8xbf16>
    %cst_97 = arith.constant dense<0.000000e+00> : vector<8x8xf32>
    %256 = tpu.matmul %251, %253, %cst_97 {dimension_numbers = #tpu.dot_dimension_numbers<[1], [1], [0], [0], [0, 0, 1, 0], [], []>} : vector<8x8xbf16>, vector<8x8xbf16>, vector<8x8xf32> -> vector<8x8xf32>
    %cst_98 = arith.constant 0.353553385 : f32
    %257 = vector.broadcast %cst_98 : f32 to vector<8x8xf32>
    %258 = arith.mulf %256, %257 : vector<8x8xf32>
    %259 = vector.broadcast %1 : vector<1x8xf32> to vector<8x8xf32>
    %260 = arith.addf %258, %259 : vector<8x8xf32>
    %cst_99 = arith.constant dense<0xFF800000> : vector<8xf32>
    %261 = vector.multi_reduction <maximumf>, %260, %cst_99 [1] : vector<8x8xf32> to vector<8xf32>
    %262 = vector.shape_cast %261 : vector<8xf32> to vector<8x1xf32>
    %263 = vector.broadcast %262 : vector<8x1xf32> to vector<8x8xf32>
    %264 = arith.subf %260, %263 : vector<8x8xf32>
    %265 = math.exp %264 : vector<8x8xf32>
    %cst_100 = arith.constant dense<0.000000e+00> : vector<8xf32>
    %266 = vector.multi_reduction <add>, %265, %cst_100 [1] : vector<8x8xf32> to vector<8xf32>
    %267 = vector.shape_cast %266 : vector<8xf32> to vector<8x1xf32>
    %268 = tpu.reciprocal %267 {approx = true} : vector<8x1xf32> -> vector<8x1xf32>
    %269 = vector.broadcast %268 : vector<8x1xf32> to vector<8x8xf32>
    %270 = arith.mulf %265, %269 : vector<8x8xf32>
    %271 = arith.truncf %270 : vector<8x8xf32> to vector<8x8xbf16>
    %cst_101 = arith.constant dense<0.000000e+00> : vector<8x8xf32>
    %272 = tpu.matmul %271, %255, %cst_101 {dimension_numbers = #tpu.dot_dimension_numbers<[1], [0], [0], [1], [0, 0, 1, 1], [], []>} : vector<8x8xbf16>, vector<8x8xbf16>, vector<8x8xf32> -> vector<8x8xf32>
    %273 = vector.extract_strided_slice %226 {offsets = [0, 16], sizes = [8, 8], strides = [1, 1]} : vector<8x96xf32> to vector<8x8xf32>
    %274 = arith.truncf %273 : vector<8x8xf32> to vector<8x8xbf16>
    %275 = vector.extract_strided_slice %226 {offsets = [0, 48], sizes = [8, 8], strides = [1, 1]} : vector<8x96xf32> to vector<8x8xf32>
    %276 = arith.truncf %275 : vector<8x8xf32> to vector<8x8xbf16>
    %277 = vector.extract_strided_slice %226 {offsets = [0, 80], sizes = [8, 8], strides = [1, 1]} : vector<8x96xf32> to vector<8x8xf32>
    %278 = arith.truncf %277 : vector<8x8xf32> to vector<8x8xbf16>
    %cst_102 = arith.constant dense<0.000000e+00> : vector<8x8xf32>
    %279 = tpu.matmul %274, %276, %cst_102 {dimension_numbers = #tpu.dot_dimension_numbers<[1], [1], [0], [0], [0, 0, 1, 0], [], []>} : vector<8x8xbf16>, vector<8x8xbf16>, vector<8x8xf32> -> vector<8x8xf32>
    %cst_103 = arith.constant 0.353553385 : f32
    %280 = vector.broadcast %cst_103 : f32 to vector<8x8xf32>
    %281 = arith.mulf %279, %280 : vector<8x8xf32>
    %282 = vector.broadcast %1 : vector<1x8xf32> to vector<8x8xf32>
    %283 = arith.addf %281, %282 : vector<8x8xf32>
    %cst_104 = arith.constant dense<0xFF800000> : vector<8xf32>
    %284 = vector.multi_reduction <maximumf>, %283, %cst_104 [1] : vector<8x8xf32> to vector<8xf32>
    %285 = vector.shape_cast %284 : vector<8xf32> to vector<8x1xf32>
    %286 = vector.broadcast %285 : vector<8x1xf32> to vector<8x8xf32>
    %287 = arith.subf %283, %286 : vector<8x8xf32>
    %288 = math.exp %287 : vector<8x8xf32>
    %cst_105 = arith.constant dense<0.000000e+00> : vector<8xf32>
    %289 = vector.multi_reduction <add>, %288, %cst_105 [1] : vector<8x8xf32> to vector<8xf32>
    %290 = vector.shape_cast %289 : vector<8xf32> to vector<8x1xf32>
    %291 = tpu.reciprocal %290 {approx = true} : vector<8x1xf32> -> vector<8x1xf32>
    %292 = vector.broadcast %291 : vector<8x1xf32> to vector<8x8xf32>
    %293 = arith.mulf %288, %292 : vector<8x8xf32>
    %294 = arith.truncf %293 : vector<8x8xf32> to vector<8x8xbf16>
    %cst_106 = arith.constant dense<0.000000e+00> : vector<8x8xf32>
    %295 = tpu.matmul %294, %278, %cst_106 {dimension_numbers = #tpu.dot_dimension_numbers<[1], [0], [0], [1], [0, 0, 1, 1], [], []>} : vector<8x8xbf16>, vector<8x8xbf16>, vector<8x8xf32> -> vector<8x8xf32>
    %296 = vector.extract_strided_slice %226 {offsets = [0, 24], sizes = [8, 8], strides = [1, 1]} : vector<8x96xf32> to vector<8x8xf32>
    %297 = arith.truncf %296 : vector<8x8xf32> to vector<8x8xbf16>
    %298 = vector.extract_strided_slice %226 {offsets = [0, 56], sizes = [8, 8], strides = [1, 1]} : vector<8x96xf32> to vector<8x8xf32>
    %299 = arith.truncf %298 : vector<8x8xf32> to vector<8x8xbf16>
    %300 = vector.extract_strided_slice %226 {offsets = [0, 88], sizes = [8, 8], strides = [1, 1]} : vector<8x96xf32> to vector<8x8xf32>
    %301 = arith.truncf %300 : vector<8x8xf32> to vector<8x8xbf16>
    %cst_107 = arith.constant dense<0.000000e+00> : vector<8x8xf32>
    %302 = tpu.matmul %297, %299, %cst_107 {dimension_numbers = #tpu.dot_dimension_numbers<[1], [1], [0], [0], [0, 0, 1, 0], [], []>} : vector<8x8xbf16>, vector<8x8xbf16>, vector<8x8xf32> -> vector<8x8xf32>
    %cst_108 = arith.constant 0.353553385 : f32
    %303 = vector.broadcast %cst_108 : f32 to vector<8x8xf32>
    %304 = arith.mulf %302, %303 : vector<8x8xf32>
    %305 = vector.broadcast %1 : vector<1x8xf32> to vector<8x8xf32>
    %306 = arith.addf %304, %305 : vector<8x8xf32>
    %cst_109 = arith.constant dense<0xFF800000> : vector<8xf32>
    %307 = vector.multi_reduction <maximumf>, %306, %cst_109 [1] : vector<8x8xf32> to vector<8xf32>
    %308 = vector.shape_cast %307 : vector<8xf32> to vector<8x1xf32>
    %309 = vector.broadcast %308 : vector<8x1xf32> to vector<8x8xf32>
    %310 = arith.subf %306, %309 : vector<8x8xf32>
    %311 = math.exp %310 : vector<8x8xf32>
    %cst_110 = arith.constant dense<0.000000e+00> : vector<8xf32>
    %312 = vector.multi_reduction <add>, %311, %cst_110 [1] : vector<8x8xf32> to vector<8xf32>
    %313 = vector.shape_cast %312 : vector<8xf32> to vector<8x1xf32>
    %314 = tpu.reciprocal %313 {approx = true} : vector<8x1xf32> -> vector<8x1xf32>
    %315 = vector.broadcast %314 : vector<8x1xf32> to vector<8x8xf32>
    %316 = arith.mulf %311, %315 : vector<8x8xf32>
    %317 = arith.truncf %316 : vector<8x8xf32> to vector<8x8xbf16>
    %cst_111 = arith.constant dense<0.000000e+00> : vector<8x8xf32>
    %318 = tpu.matmul %317, %301, %cst_111 {dimension_numbers = #tpu.dot_dimension_numbers<[1], [0], [0], [1], [0, 0, 1, 1], [], []>} : vector<8x8xbf16>, vector<8x8xbf16>, vector<8x8xf32> -> vector<8x8xf32>
    %319 = tpu.concatenate %249, %272, %295, %318 in 1 : vector<8x8xf32>, vector<8x8xf32>, vector<8x8xf32>, vector<8x8xf32> -> vector<8x32xf32>
    %320 = arith.truncf %319 : vector<8x32xf32> to vector<8x32xbf16>
    %c1_112 = arith.constant 1 : index
    %c0_113 = arith.constant 0 : index
    %c0_114 = arith.constant 0 : index
    %321 = vector.load %arg7[%c1_112, %c0_113, %c0_114] : memref<2x32x32xbf16, #tpu.memory_space<vmem>>, vector<1x32x32xbf16>
    %322 = vector.shape_cast %321 : vector<1x32x32xbf16> to vector<32x32xbf16>
    %cst_115 = arith.constant dense<0.000000e+00> : vector<8x32xf32>
    %323 = tpu.matmul %320, %322, %cst_115 {dimension_numbers = #tpu.dot_dimension_numbers<[1], [0], [0], [1], [0, 0, 1, 1], [], []>} : vector<8x32xbf16>, vector<32x32xbf16>, vector<8x32xf32> -> vector<8x32xf32>
    %c1_116 = arith.constant 1 : index
    %c0_117 = arith.constant 0 : index
    %c0_118 = arith.constant 0 : index
    %324 = vector.load %arg8[%c1_116, %c0_117, %c0_118] : memref<2x1x32xf32, #tpu.memory_space<vmem>>, vector<1x1x32xf32>
    %325 = vector.shape_cast %324 : vector<1x1x32xf32> to vector<1x32xf32>
    %326 = vector.broadcast %325 : vector<1x32xf32> to vector<8x32xf32>
    %327 = arith.addf %323, %326 : vector<8x32xf32>
    %328 = arith.addf %327, %218 : vector<8x32xf32>
    %c1_119 = arith.constant 1 : index
    %c0_120 = arith.constant 0 : index
    %c0_121 = arith.constant 0 : index
    %329 = vector.load %arg9[%c1_119, %c0_120, %c0_121] : memref<2x1x32xf32, #tpu.memory_space<vmem>>, vector<1x1x32xf32>
    %330 = vector.shape_cast %329 : vector<1x1x32xf32> to vector<1x32xf32>
    %c1_122 = arith.constant 1 : index
    %c0_123 = arith.constant 0 : index
    %c0_124 = arith.constant 0 : index
    %331 = vector.load %arg10[%c1_122, %c0_123, %c0_124] : memref<2x1x32xf32, #tpu.memory_space<vmem>>, vector<1x1x32xf32>
    %332 = vector.shape_cast %331 : vector<1x1x32xf32> to vector<1x32xf32>
    %cst_125 = arith.constant dense<0.000000e+00> : vector<8xf32>
    %333 = vector.multi_reduction <add>, %328, %cst_125 [1] : vector<8x32xf32> to vector<8xf32>
    %334 = vector.shape_cast %333 : vector<8xf32> to vector<8x1xf32>
    %cst_126 = arith.constant 3.200000e+01 : f32
    %335 = vector.broadcast %cst_126 : f32 to vector<8x1xf32>
    %336 = arith.divf %334, %335 : vector<8x1xf32>
    %337 = vector.broadcast %336 : vector<8x1xf32> to vector<8x32xf32>
    %338 = arith.subf %328, %337 : vector<8x32xf32>
    %339 = arith.mulf %338, %338 : vector<8x32xf32>
    %cst_127 = arith.constant dense<0.000000e+00> : vector<8xf32>
    %340 = vector.multi_reduction <add>, %339, %cst_127 [1] : vector<8x32xf32> to vector<8xf32>
    %341 = vector.shape_cast %340 : vector<8xf32> to vector<8x1xf32>
    %cst_128 = arith.constant 3.200000e+01 : f32
    %342 = vector.broadcast %cst_128 : f32 to vector<8x1xf32>
    %343 = arith.divf %341, %342 : vector<8x1xf32>
    %344 = vector.broadcast %336 : vector<8x1xf32> to vector<8x32xf32>
    %345 = arith.subf %328, %344 : vector<8x32xf32>
    %cst_129 = arith.constant 9.99999996E-13 : f32
    %346 = vector.broadcast %cst_129 : f32 to vector<8x1xf32>
    %347 = arith.addf %343, %346 : vector<8x1xf32>
    %348 = math.rsqrt %347 : vector<8x1xf32>
    %349 = vector.broadcast %348 : vector<8x1xf32> to vector<8x32xf32>
    %350 = arith.mulf %345, %349 : vector<8x32xf32>
    %351 = vector.broadcast %330 : vector<1x32xf32> to vector<8x32xf32>
    %352 = arith.mulf %350, %351 : vector<8x32xf32>
    %353 = vector.broadcast %332 : vector<1x32xf32> to vector<8x32xf32>
    %354 = arith.addf %352, %353 : vector<8x32xf32>
    %355 = arith.truncf %354 : vector<8x32xf32> to vector<8x32xbf16>
    %c1_130 = arith.constant 1 : index
    %c0_131 = arith.constant 0 : index
    %c0_132 = arith.constant 0 : index
    %356 = vector.load %arg11[%c1_130, %c0_131, %c0_132] : memref<2x32x64xbf16, #tpu.memory_space<vmem>>, vector<1x32x64xbf16>
    %357 = vector.shape_cast %356 : vector<1x32x64xbf16> to vector<32x64xbf16>
    %cst_133 = arith.constant dense<0.000000e+00> : vector<8x64xf32>
    %358 = tpu.matmul %355, %357, %cst_133 {dimension_numbers = #tpu.dot_dimension_numbers<[1], [0], [0], [1], [0, 0, 1, 1], [], []>} : vector<8x32xbf16>, vector<32x64xbf16>, vector<8x64xf32> -> vector<8x64xf32>
    %c1_134 = arith.constant 1 : index
    %c0_135 = arith.constant 0 : index
    %c0_136 = arith.constant 0 : index
    %359 = vector.load %arg12[%c1_134, %c0_135, %c0_136] : memref<2x1x64xf32, #tpu.memory_space<vmem>>, vector<1x1x64xf32>
    %360 = vector.shape_cast %359 : vector<1x1x64xf32> to vector<1x64xf32>
    %361 = vector.broadcast %360 : vector<1x64xf32> to vector<8x64xf32>
    %362 = arith.addf %358, %361 : vector<8x64xf32>
    %cst_137 = arith.constant 5.000000e-01 : f32
    %363 = vector.broadcast %cst_137 : f32 to vector<8x64xf32>
    %364 = arith.mulf %363, %362 : vector<8x64xf32>
    %cst_138 = arith.constant 4.471500e-02 : f32
    %365 = vector.broadcast %cst_138 : f32 to vector<8x64xf32>
    %366 = arith.mulf %365, %362 : vector<8x64xf32>
    %367 = arith.mulf %366, %362 : vector<8x64xf32>
    %368 = arith.mulf %367, %362 : vector<8x64xf32>
    %369 = arith.addf %362, %368 : vector<8x64xf32>
    %cst_139 = arith.constant 0.797884583 : f32
    %370 = vector.broadcast %cst_139 : f32 to vector<8x64xf32>
    %371 = arith.mulf %370, %369 : vector<8x64xf32>
    %372 = math.tanh %371 : vector<8x64xf32>
    %cst_140 = arith.constant 1.000000e+00 : f32
    %373 = vector.broadcast %cst_140 : f32 to vector<8x64xf32>
    %374 = arith.addf %373, %372 : vector<8x64xf32>
    %375 = arith.mulf %364, %374 : vector<8x64xf32>
    %376 = arith.truncf %375 : vector<8x64xf32> to vector<8x64xbf16>
    %c1_141 = arith.constant 1 : index
    %c0_142 = arith.constant 0 : index
    %c0_143 = arith.constant 0 : index
    %377 = vector.load %arg13[%c1_141, %c0_142, %c0_143] : memref<2x64x32xbf16, #tpu.memory_space<vmem>>, vector<1x64x32xbf16>
    %378 = vector.shape_cast %377 : vector<1x64x32xbf16> to vector<64x32xbf16>
    %cst_144 = arith.constant dense<0.000000e+00> : vector<8x32xf32>
    %379 = tpu.matmul %376, %378, %cst_144 {dimension_numbers = #tpu.dot_dimension_numbers<[1], [0], [0], [1], [0, 0, 1, 1], [], []>} : vector<8x64xbf16>, vector<64x32xbf16>, vector<8x32xf32> -> vector<8x32xf32>
    %c1_145 = arith.constant 1 : index
    %c0_146 = arith.constant 0 : index
    %c0_147 = arith.constant 0 : index
    %380 = vector.load %arg14[%c1_145, %c0_146, %c0_147] : memref<2x1x32xf32, #tpu.memory_space<vmem>>, vector<1x1x32xf32>
    %381 = vector.shape_cast %380 : vector<1x1x32xf32> to vector<1x32xf32>
    %382 = vector.broadcast %381 : vector<1x32xf32> to vector<8x32xf32>
    %383 = arith.addf %379, %382 : vector<8x32xf32>
    %384 = arith.addf %383, %354 : vector<8x32xf32>
    %c1_148 = arith.constant 1 : index
    %c0_149 = arith.constant 0 : index
    %c0_150 = arith.constant 0 : index
    %385 = vector.load %arg15[%c1_148, %c0_149, %c0_150] : memref<2x1x32xf32, #tpu.memory_space<vmem>>, vector<1x1x32xf32>
    %386 = vector.shape_cast %385 : vector<1x1x32xf32> to vector<1x32xf32>
    %c1_151 = arith.constant 1 : index
    %c0_152 = arith.constant 0 : index
    %c0_153 = arith.constant 0 : index
    %387 = vector.load %arg16[%c1_151, %c0_152, %c0_153] : memref<2x1x32xf32, #tpu.memory_space<vmem>>, vector<1x1x32xf32>
    %388 = vector.shape_cast %387 : vector<1x1x32xf32> to vector<1x32xf32>
    %cst_154 = arith.constant dense<0.000000e+00> : vector<8xf32>
    %389 = vector.multi_reduction <add>, %384, %cst_154 [1] : vector<8x32xf32> to vector<8xf32>
    %390 = vector.shape_cast %389 : vector<8xf32> to vector<8x1xf32>
    %cst_155 = arith.constant 3.200000e+01 : f32
    %391 = vector.broadcast %cst_155 : f32 to vector<8x1xf32>
    %392 = arith.divf %390, %391 : vector<8x1xf32>
    %393 = vector.broadcast %392 : vector<8x1xf32> to vector<8x32xf32>
    %394 = arith.subf %384, %393 : vector<8x32xf32>
    %395 = arith.mulf %394, %394 : vector<8x32xf32>
    %cst_156 = arith.constant dense<0.000000e+00> : vector<8xf32>
    %396 = vector.multi_reduction <add>, %395, %cst_156 [1] : vector<8x32xf32> to vector<8xf32>
    %397 = vector.shape_cast %396 : vector<8xf32> to vector<8x1xf32>
    %cst_157 = arith.constant 3.200000e+01 : f32
    %398 = vector.broadcast %cst_157 : f32 to vector<8x1xf32>
    %399 = arith.divf %397, %398 : vector<8x1xf32>
    %400 = vector.broadcast %392 : vector<8x1xf32> to vector<8x32xf32>
    %401 = arith.subf %384, %400 : vector<8x32xf32>
    %cst_158 = arith.constant 9.99999996E-13 : f32
    %402 = vector.broadcast %cst_158 : f32 to vector<8x1xf32>
    %403 = arith.addf %399, %402 : vector<8x1xf32>
    %404 = math.rsqrt %403 : vector<8x1xf32>
    %405 = vector.broadcast %404 : vector<8x1xf32> to vector<8x32xf32>
    %406 = arith.mulf %401, %405 : vector<8x32xf32>
    %407 = vector.broadcast %386 : vector<1x32xf32> to vector<8x32xf32>
    %408 = arith.mulf %406, %407 : vector<8x32xf32>
    %409 = vector.broadcast %388 : vector<1x32xf32> to vector<8x32xf32>
    %410 = arith.addf %408, %409 : vector<8x32xf32>
    %411 = arith.truncf %410 : vector<8x32xf32> to vector<8x32xbf16>
    %c0_159 = arith.constant 0 : index
    %c0_160 = arith.constant 0 : index
    %412 = vector.load %arg17[%c0_159, %c0_160] : memref<32x32xbf16, #tpu.memory_space<vmem>>, vector<32x32xbf16>
    %cst_161 = arith.constant dense<0.000000e+00> : vector<8x32xf32>
    %413 = tpu.matmul %411, %412, %cst_161 {dimension_numbers = #tpu.dot_dimension_numbers<[1], [0], [0], [1], [0, 0, 1, 1], [], []>} : vector<8x32xbf16>, vector<32x32xbf16>, vector<8x32xf32> -> vector<8x32xf32>
    %c0_162 = arith.constant 0 : index
    %c0_163 = arith.constant 0 : index
    %414 = vector.load %arg18[%c0_162, %c0_163] : memref<1x32xf32, #tpu.memory_space<vmem>>, vector<1x32xf32>
    %415 = vector.broadcast %414 : vector<1x32xf32> to vector<8x32xf32>
    %416 = arith.addf %413, %415 : vector<8x32xf32>
    %cst_164 = arith.constant 0.000000e+00 : f32
    %417 = vector.broadcast %cst_164 : f32 to vector<8x32xf32>
    %418 = arith.maximumf %416, %417 : vector<8x32xf32>
    %419 = arith.truncf %418 : vector<8x32xf32> to vector<8x32xbf16>
    %c0_165 = arith.constant 0 : index
    %c0_166 = arith.constant 0 : index
    %420 = vector.load %arg19[%c0_165, %c0_166] : memref<32x16xbf16, #tpu.memory_space<vmem>>, vector<32x16xbf16>
    %cst_167 = arith.constant dense<0.000000e+00> : vector<8x16xf32>
    %421 = tpu.matmul %419, %420, %cst_167 {dimension_numbers = #tpu.dot_dimension_numbers<[1], [0], [0], [1], [0, 0, 1, 1], [], []>} : vector<8x32xbf16>, vector<32x16xbf16>, vector<8x16xf32> -> vector<8x16xf32>
    %c0_168 = arith.constant 0 : index
    %c0_169 = arith.constant 0 : index
    %422 = vector.load %arg20[%c0_168, %c0_169] : memref<1x16xf32, #tpu.memory_space<vmem>>, vector<1x16xf32>
    %423 = vector.broadcast %422 : vector<1x16xf32> to vector<8x16xf32>
    %424 = arith.addf %421, %423 : vector<8x16xf32>
    %c0_170 = arith.constant 0 : index
    %c0_171 = arith.constant 0 : index
    %425 = vector.load %arg21[%c0_170, %c0_171] : memref<8x16xf32, #tpu.memory_space<vmem>>, vector<8x16xf32>
    tpu.vector_store %arg21[%c0_170, %c0_171], %424 {strides = array<i32>} : memref<8x16xf32, #tpu.memory_space<vmem>>, vector<8x16xf32>,
    return
  }
  func.func @transform_0(%arg0: i32) -> (i32, i32, i32) {
    %c0_i32 = arith.constant 0 : i32
    %c0_i32_0 = arith.constant 0 : i32
    %c0_i32_1 = arith.constant 0 : i32
    return %arg0, %c0_i32, %c0_i32_0 : i32, i32, i32
  }
  func.func @transform_1(%arg0: i32) -> (i32, i32) {
    %c0_i32 = arith.constant 0 : i32
    %c0_i32_0 = arith.constant 0 : i32
    return %arg0, %c0_i32 : i32, i32
  }
  func.func @transform_2(%arg0: i32) -> (i32, i32) {
    %c0_i32 = arith.constant 0 : i32
    %c0_i32_0 = arith.constant 0 : i32
    %c0_i32_1 = arith.constant 0 : i32
    return %c0_i32, %c0_i32_0 : i32, i32
  }
  func.func @transform_3(%arg0: i32) -> (i32, i32) {
    %c0_i32 = arith.constant 0 : i32
    %c0_i32_0 = arith.constant 0 : i32
    %c0_i32_1 = arith.constant 0 : i32
    return %c0_i32, %c0_i32_0 : i32, i32
  }
  func.func @transform_4(%arg0: i32) -> (i32, i32, i32) {
    %c0_i32 = arith.constant 0 : i32
    %c0_i32_0 = arith.constant 0 : i32
    %c0_i32_1 = arith.constant 0 : i32
    %c0_i32_2 = arith.constant 0 : i32
    return %c0_i32, %c0_i32_0, %c0_i32_1 : i32, i32, i32
  }
  func.func @transform_5(%arg0: i32) -> (i32, i32, i32) {
    %c0_i32 = arith.constant 0 : i32
    %c0_i32_0 = arith.constant 0 : i32
    %c0_i32_1 = arith.constant 0 : i32
    %c0_i32_2 = arith.constant 0 : i32
    return %c0_i32, %c0_i32_0, %c0_i32_1 : i32, i32, i32
  }
  func.func @transform_6(%arg0: i32) -> (i32, i32, i32) {
    %c0_i32 = arith.constant 0 : i32
    %c0_i32_0 = arith.constant 0 : i32
    %c0_i32_1 = arith.constant 0 : i32
    %c0_i32_2 = arith.constant 0 : i32
    return %c0_i32, %c0_i32_0, %c0_i32_1 : i32, i32, i32
  }
  func.func @transform_7(%arg0: i32) -> (i32, i32, i32) {
    %c0_i32 = arith.constant 0 : i32
    %c0_i32_0 = arith.constant 0 : i32
    %c0_i32_1 = arith.constant 0 : i32
    %c0_i32_2 = arith.constant 0 : i32
    return %c0_i32, %c0_i32_0, %c0_i32_1 : i32, i32, i32
  }
  func.func @transform_8(%arg0: i32) -> (i32, i32, i32) {
    %c0_i32 = arith.constant 0 : i32
    %c0_i32_0 = arith.constant 0 : i32
    %c0_i32_1 = arith.constant 0 : i32
    %c0_i32_2 = arith.constant 0 : i32
    return %c0_i32, %c0_i32_0, %c0_i32_1 : i32, i32, i32
  }
  func.func @transform_9(%arg0: i32) -> (i32, i32, i32) {
    %c0_i32 = arith.constant 0 : i32
    %c0_i32_0 = arith.constant 0 : i32
    %c0_i32_1 = arith.constant 0 : i32
    %c0_i32_2 = arith.constant 0 : i32
    return %c0_i32, %c0_i32_0, %c0_i32_1 : i32, i32, i32
  }
  func.func @transform_10(%arg0: i32) -> (i32, i32, i32) {
    %c0_i32 = arith.constant 0 : i32
    %c0_i32_0 = arith.constant 0 : i32
    %c0_i32_1 = arith.constant 0 : i32
    %c0_i32_2 = arith.constant 0 : i32
    return %c0_i32, %c0_i32_0, %c0_i32_1 : i32, i32, i32
  }
  func.func @transform_11(%arg0: i32) -> (i32, i32, i32) {
    %c0_i32 = arith.constant 0 : i32
    %c0_i32_0 = arith.constant 0 : i32
    %c0_i32_1 = arith.constant 0 : i32
    %c0_i32_2 = arith.constant 0 : i32
    return %c0_i32, %c0_i32_0, %c0_i32_1 : i32, i32, i32
  }
  func.func @transform_12(%arg0: i32) -> (i32, i32, i32) {
    %c0_i32 = arith.constant 0 : i32
    %c0_i32_0 = arith.constant 0 : i32
    %c0_i32_1 = arith.constant 0 : i32
    %c0_i32_2 = arith.constant 0 : i32
    return %c0_i32, %c0_i32_0, %c0_i32_1 : i32, i32, i32
  }
  func.func @transform_13(%arg0: i32) -> (i32, i32, i32) {
    %c0_i32 = arith.constant 0 : i32
    %c0_i32_0 = arith.constant 0 : i32
    %c0_i32_1 = arith.constant 0 : i32
    %c0_i32_2 = arith.constant 0 : i32
    return %c0_i32, %c0_i32_0, %c0_i32_1 : i32, i32, i32
  }
  func.func @transform_14(%arg0: i32) -> (i32, i32, i32) {
    %c0_i32 = arith.constant 0 : i32
    %c0_i32_0 = arith.constant 0 : i32
    %c0_i32_1 = arith.constant 0 : i32
    %c0_i32_2 = arith.constant 0 : i32
    return %c0_i32, %c0_i32_0, %c0_i32_1 : i32, i32, i32
  }
  func.func @transform_15(%arg0: i32) -> (i32, i32, i32) {
    %c0_i32 = arith.constant 0 : i32
    %c0_i32_0 = arith.constant 0 : i32
    %c0_i32_1 = arith.constant 0 : i32
    %c0_i32_2 = arith.constant 0 : i32
    return %c0_i32, %c0_i32_0, %c0_i32_1 : i32, i32, i32
  }
  func.func @transform_16(%arg0: i32) -> (i32, i32) {
    %c0_i32 = arith.constant 0 : i32
    %c0_i32_0 = arith.constant 0 : i32
    %c0_i32_1 = arith.constant 0 : i32
    return %c0_i32, %c0_i32_0 : i32, i32
  }
  func.func @transform_17(%arg0: i32) -> (i32, i32) {
    %c0_i32 = arith.constant 0 : i32
    %c0_i32_0 = arith.constant 0 : i32
    %c0_i32_1 = arith.constant 0 : i32
    return %c0_i32, %c0_i32_0 : i32, i32
  }
  func.func @transform_18(%arg0: i32) -> (i32, i32) {
    %c0_i32 = arith.constant 0 : i32
    %c0_i32_0 = arith.constant 0 : i32
    %c0_i32_1 = arith.constant 0 : i32
    return %c0_i32, %c0_i32_0 : i32, i32
  }
  func.func @transform_19(%arg0: i32) -> (i32, i32) {
    %c0_i32 = arith.constant 0 : i32
    %c0_i32_0 = arith.constant 0 : i32
    %c0_i32_1 = arith.constant 0 : i32
    return %c0_i32, %c0_i32_0 : i32, i32
  }
  func.func @transform_20(%arg0: i32) -> (i32, i32) {
    %c0_i32 = arith.constant 0 : i32
    %c0_i32_0 = arith.constant 0 : i32
    return %arg0, %c0_i32 : i32, i32
  }
}

</mosaic_0001>

<llo_original>
// kernel: bert_enc_forward.1
$region0: #{bert_enc_forward.1}
  #allocation0 [shape = 'u32[]', space=smem, size = 0x4, offset = 0x4, fixed_abs, tag = 'smem constant byte address 0x4 - core index']
  #allocation1 [shape = 'u32[144,128]{1,0:T(1,128)}', space=vmem, size = 0x12000, scoped, tag = 'internal scratch']
  %s0 = inlined_call_operand.vmem [shape: f32[2,1,8], index: 0, kind: input, shape index: {}]
  %s1 = inlined_call_operand.vmem [shape: f32[16,32], index: 1, kind: input, shape index: {}]
  %s2 = inlined_call_operand.vmem [shape: f32[1,32], index: 2, kind: input, shape index: {}]
  %s3 = inlined_call_operand.vmem [shape: f32[1,32], index: 3, kind: input, shape index: {}, may-alias: {3,17}]
  %s4 = inlined_call_operand.vmem [shape: bf16[2,32,96], index: 4, kind: input, shape index: {}]
  %s5 = inlined_call_operand.vmem [shape: f32[2,1,96], index: 5, kind: input, shape index: {}]
  %s6 = inlined_call_operand.vmem [shape: bf16[2,32,32], index: 6, kind: input, shape index: {}]
  %s7 = inlined_call_operand.vmem [shape: f32[2,1,32], index: 7, kind: input, shape index: {}, may-alias: {7,9,13,15}]
  %s8 = inlined_call_operand.vmem [shape: f32[2,1,32], index: 8, kind: input, shape index: {}, may-alias: {8,14}]
  %s9 = inlined_call_operand.vmem [shape: f32[2,1,32], index: 9, kind: input, shape index: {}, may-alias: {7,9,13,15}]
  %s10 = inlined_call_operand.vmem [shape: bf16[2,32,64], index: 10, kind: input, shape index: {}]
  %s11 = inlined_call_operand.vmem [shape: f32[2,1,64], index: 11, kind: input, shape index: {}]
  %s12 = inlined_call_operand.vmem [shape: bf16[2,64,32], index: 12, kind: input, shape index: {}]
  %s13 = inlined_call_operand.vmem [shape: f32[2,1,32], index: 13, kind: input, shape index: {}, may-alias: {7,9,13,15}]
  %s14 = inlined_call_operand.vmem [shape: f32[2,1,32], index: 14, kind: input, shape index: {}, may-alias: {8,14}]
  %s15 = inlined_call_operand.vmem [shape: f32[2,1,32], index: 15, kind: input, shape index: {}, may-alias: {7,9,13,15}]
  %s16 = inlined_call_operand.vmem [shape: bf16[32,32], index: 16, kind: input, shape index: {}]
  %s17 = inlined_call_operand.vmem [shape: f32[1,32], index: 17, kind: input, shape index: {}, may-alias: {3,17}]
  %s18 = inlined_call_operand.vmem [shape: bf16[32,16], index: 18, kind: input, shape index: {}]
  %s19 = inlined_call_operand.vmem [shape: f32[1,16], index: 19, kind: input, shape index: {}]
  %s20 = inlined_call_operand.hbm [shape: f32[16,16], index: 20, kind: output, shape index: {}]
  %s21 = sld [smem:[#allocation0]]
  $region113: #{bert_enc_forward.1} parent=0
    _
  %s23 = ssub.s32 1, %s21
  %s24 = scalar_select 0, %s23, %s21
  $region1: #{bert_enc_forward.1} parent=0
    #allocation2 [shape = 'u8[8192]{0}', space=vmem, size = 0x2000, scoped, tag = 'output window, operand 0']
    #allocation3 [shape = 's32[2]{0}', space=sflag, size = 0x8, scoped, tag = 'scoped memory for bert_enc_forward.1']
    %25 = vsyncpa [#allocation3], 0
    %s26 = scalar_lea.sflag [#allocation3], 1
    %27 = vsyncpa %s26, 0
    loop: start=0, step=1, limit=4
    $region2: #{bert_enc_forward.1} parent=1 // loop_pre_header
      _
    $region3: #{bert_enc_forward.1} parent=1 // loop_header
      %s29 = sphi 0, %s33
      %p30 = scmp.ge.s32.totalorder %s29, 4
      %s39 = sphi 0, %s41
      %s42 = sphi 0, %s39
      %s43 = sphi 0, %s42
      %s59 = sphi 0, %s43
      %s65 = sphi 0, %s67
      %s68 = sphi 0, %s65
      %s69 = sphi 0, %s68
      %s85 = sphi 0, %s69
      %s89 = sphi 0, %s89
      %s91 = sphi 0, %s89
      %s92 = sphi 0, %s91
      %s106 = sphi 0, %s92
      %s110 = sphi 0, %s110
      %s112 = sphi 0, %s110
      %s113 = sphi 0, %s112
      %s127 = sphi 0, %s113
      %s131 = sphi 0, %s131
      %s133 = sphi 0, %s131
      %s134 = sphi 0, %s133
      %s148 = sphi 0, %s134
      %s152 = sphi 0, %s152
      %s154 = sphi 0, %s152
      %s155 = sphi 0, %s154
      %s169 = sphi 0, %s155
      %s173 = sphi 0, %s173
      %s175 = sphi 0, %s173
      %s176 = sphi 0, %s175
      %s190 = sphi 0, %s176
      %s194 = sphi 0, %s194
      %s196 = sphi 0, %s194
      %s197 = sphi 0, %s196
      %s211 = sphi 0, %s197
      %s215 = sphi 0, %s215
      %s217 = sphi 0, %s215
      %s218 = sphi 0, %s217
      %s232 = sphi 0, %s218
      %s236 = sphi 0, %s236
      %s238 = sphi 0, %s236
      %s239 = sphi 0, %s238
      %s253 = sphi 0, %s239
      %s257 = sphi 0, %s257
      %s259 = sphi 0, %s257
      %s260 = sphi 0, %s259
      %s274 = sphi 0, %s260
      %s278 = sphi 0, %s278
      %s280 = sphi 0, %s278
      %s281 = sphi 0, %s280
      %s295 = sphi 0, %s281
      %s299 = sphi 0, %s299
      %s301 = sphi 0, %s299
      %s302 = sphi 0, %s301
      %s316 = sphi 0, %s302
      %s320 = sphi 0, %s320
      %s322 = sphi 0, %s320
      %s323 = sphi 0, %s322
      %s337 = sphi 0, %s323
      %s341 = sphi 0, %s341
      %s343 = sphi 0, %s341
      %s344 = sphi 0, %s343
      %s358 = sphi 0, %s344
      %s362 = sphi 0, %s362
      %s364 = sphi 0, %s362
      %s365 = sphi 0, %s364
      %s379 = sphi 0, %s365
      %s383 = sphi 0, %s383
      %s385 = sphi 0, %s383
      %s386 = sphi 0, %s385
      %s400 = sphi 0, %s386
      %s404 = sphi 0, %s404
      %s406 = sphi 0, %s404
      %s407 = sphi 0, %s406
      %s421 = sphi 0, %s407
      %s425 = sphi 0, %s425
      %s427 = sphi 0, %s425
      %s428 = sphi 0, %s427
      %s442 = sphi 0, %s428
      %s446 = sphi 0, %s446
      %s448 = sphi 0, %s446
      %s449 = sphi 0, %s448
      %s463 = sphi 0, %s449
      %s469 = sphi 0, %s471
      %s472 = sphi 0, %s469
      %s473 = sphi 0, %s472
      %s489 = sphi 0, %s473
    $region4: #{bert_enc_forward.1} parent=1 // loop_header_branch
      %32 = sbr.rel (%p30) target = $region8
    $region5: #{bert_enc_forward.1} parent=1 // loop_body
      %s34 = ssub.s32 %s29, 1
      %s35 = ssub.s32 %s29, 2
      %s36 = sadd.s32 %s29, 1
      %s37 = ssub.s32 %s29, %s36
      %p38 = scmp.eq.s32.totalorder %s37, 0
      %s40 = sadd.s32 %s39, 1
      %s41 = scalar_select %p38, %s39, %s40
      %p44 = pneg %p38
      %p45 = scmp.eq.s32.totalorder %s29, 1
      %p46 = por %p44, %p45
      %p47 = scmp.ne.s32.totalorder %s39, %s42
      %p48 = scmp.eq.s32.totalorder %s29, 0
      %p49 = por %p47, %p48
      %p50 = scmp.ne.s32.totalorder %s39, %s42
      %p51 = scmp.eq.s32.totalorder %s34, 1
      %p52 = por %p50, %p51
      %p53 = scmp.ne.s32.totalorder %s42, %s43
      %p54 = scmp.eq.s32.totalorder %s34, 0
      %p55 = por %p53, %p54
      %p56 = scmp.ne.s32.totalorder %s42, %s43
      %p57 = scmp.eq.s32.totalorder %s35, 1
      %p58 = por %p56, %p57
      %p60 = scmp.ne.s32.totalorder %s43, %s59
      %p61 = scmp.eq.s32.totalorder %s35, 0
      %p62 = por %p60, %p61
      %s63 = ssub.s32 %s29, %s36
      %p64 = scmp.eq.s32.totalorder %s63, 0
      %s66 = sadd.s32 %s65, 1
      %s67 = scalar_select %p64, %s65, %s66
      %p70 = pneg %p64
      %p71 = scmp.eq.s32.totalorder %s29, 1
      %p72 = por %p70, %p71
      %p73 = scmp.ne.s32.totalorder %s65, %s68
      %p74 = scmp.eq.s32.totalorder %s29, 0
      %p75 = por %p73, %p74
      %p76 = scmp.ne.s32.totalorder %s65, %s68
      %p77 = scmp.eq.s32.totalorder %s34, 1
      %p78 = por %p76, %p77
      %p79 = scmp.ne.s32.totalorder %s68, %s69
      %p80 = scmp.eq.s32.totalorder %s34, 0
      %p81 = por %p79, %p80
      %p82 = scmp.ne.s32.totalorder %s68, %s69
      %p83 = scmp.eq.s32.totalorder %s35, 1
      %p84 = por %p82, %p83
      %p86 = scmp.ne.s32.totalorder %s69, %s85
      %p87 = scmp.eq.s32.totalorder %s35, 0
      %p88 = por %p86, %p87
      %s90 = sadd.s32 %s89, 1
      %p93 = scmp.eq.s32.totalorder %s29, 1
      %p94 = scmp.ne.s32.totalorder %s89, %s91
      %p95 = scmp.eq.s32.totalorder %s29, 0
      %p96 = por %p94, %p95
      %p97 = scmp.ne.s32.totalorder %s89, %s91
      %p98 = scmp.eq.s32.totalorder %s34, 1
      %p99 = por %p97, %p98
      %p100 = scmp.ne.s32.totalorder %s91, %s92
      %p101 = scmp.eq.s32.totalorder %s34, 0
      %p102 = por %p100, %p101
      %p103 = scmp.ne.s32.totalorder %s91, %s92
      %p104 = scmp.eq.s32.totalorder %s35, 1
      %p105 = por %p103, %p104
      %p107 = scmp.ne.s32.totalorder %s92, %s106
      %p108 = scmp.eq.s32.totalorder %s35, 0
      %p109 = por %p107, %p108
      %s111 = sadd.s32 %s110, 1
      %p114 = scmp.eq.s32.totalorder %s29, 1
      %p115 = scmp.ne.s32.totalorder %s110, %s112
      %p116 = scmp.eq.s32.totalorder %s29, 0
      %p117 = por %p115, %p116
      %p118 = scmp.ne.s32.totalorder %s110, %s112
      %p119 = scmp.eq.s32.totalorder %s34, 1
      %p120 = por %p118, %p119
      %p121 = scmp.ne.s32.totalorder %s112, %s113
      %p122 = scmp.eq.s32.totalorder %s34, 0
      %p123 = por %p121, %p122
      %p124 = scmp.ne.s32.totalorder %s112, %s113
      %p125 = scmp.eq.s32.totalorder %s35, 1
      %p126 = por %p124, %p125
      %p128 = scmp.ne.s32.totalorder %s113, %s127
      %p129 = scmp.eq.s32.totalorder %s35, 0
      %p130 = por %p128, %p129
      %s132 = sadd.s32 %s131, 1
      %p135 = scmp.eq.s32.totalorder %s29, 1
      %p136 = scmp.ne.s32.totalorder %s131, %s133
      %p137 = scmp.eq.s32.totalorder %s29, 0
      %p138 = por %p136, %p137
      %p139 = scmp.ne.s32.totalorder %s131, %s133
      %p140 = scmp.eq.s32.totalorder %s34, 1
      %p141 = por %p139, %p140
      %p142 = scmp.ne.s32.totalorder %s133, %s134
      %p143 = scmp.eq.s32.totalorder %s34, 0
      %p144 = por %p142, %p143
      %p145 = scmp.ne.s32.totalorder %s133, %s134
      %p146 = scmp.eq.s32.totalorder %s35, 1
      %p147 = por %p145, %p146
      %p149 = scmp.ne.s32.totalorder %s134, %s148
      %p150 = scmp.eq.s32.totalorder %s35, 0
      %p151 = por %p149, %p150
      %s153 = sadd.s32 %s152, 1
      %p156 = scmp.eq.s32.totalorder %s29, 1
      %p157 = scmp.ne.s32.totalorder %s152, %s154
      %p158 = scmp.eq.s32.totalorder %s29, 0
      %p159 = por %p157, %p158
      %p160 = scmp.ne.s32.totalorder %s152, %s154
      %p161 = scmp.eq.s32.totalorder %s34, 1
      %p162 = por %p160, %p161
      %p163 = scmp.ne.s32.totalorder %s154, %s155
      %p164 = scmp.eq.s32.totalorder %s34, 0
      %p165 = por %p163, %p164
      %p166 = scmp.ne.s32.totalorder %s154, %s155
      %p167 = scmp.eq.s32.totalorder %s35, 1
      %p168 = por %p166, %p167
      %p170 = scmp.ne.s32.totalorder %s155, %s169
      %p171 = scmp.eq.s32.totalorder %s35, 0
      %p172 = por %p170, %p171
      %s174 = sadd.s32 %s173, 1
      %p177 = scmp.eq.s32.totalorder %s29, 1
      %p178 = scmp.ne.s32.totalorder %s173, %s175
      %p179 = scmp.eq.s32.totalorder %s29, 0
      %p180 = por %p178, %p179
      %p181 = scmp.ne.s32.totalorder %s173, %s175
      %p182 = scmp.eq.s32.totalorder %s34, 1
      %p183 = por %p181, %p182
      %p184 = scmp.ne.s32.totalorder %s175, %s176
      %p185 = scmp.eq.s32.totalorder %s34, 0
      %p186 = por %p184, %p185
      %p187 = scmp.ne.s32.totalorder %s175, %s176
      %p188 = scmp.eq.s32.totalorder %s35, 1
      %p189 = por %p187, %p188
      %p191 = scmp.ne.s32.totalorder %s176, %s190
      %p192 = scmp.eq.s32.totalorder %s35, 0
      %p193 = por %p191, %p192
      %s195 = sadd.s32 %s194, 1
      %p198 = scmp.eq.s32.totalorder %s29, 1
      %p199 = scmp.ne.s32.totalorder %s194, %s196
      %p200 = scmp.eq.s32.totalorder %s29, 0
      %p201 = por %p199, %p200
      %p202 = scmp.ne.s32.totalorder %s194, %s196
      %p203 = scmp.eq.s32.totalorder %s34, 1
      %p204 = por %p202, %p203
      %p205 = scmp.ne.s32.totalorder %s196, %s197
      %p206 = scmp.eq.s32.totalorder %s34, 0
      %p207 = por %p205, %p206
      %p208 = scmp.ne.s32.totalorder %s196, %s197
      %p209 = scmp.eq.s32.totalorder %s35, 1
      %p210 = por %p208, %p209
      %p212 = scmp.ne.s32.totalorder %s197, %s211
      %p213 = scmp.eq.s32.totalorder %s35, 0
      %p214 = por %p212, %p213
      %s216 = sadd.s32 %s215, 1
      %p219 = scmp.eq.s32.totalorder %s29, 1
      %p220 = scmp.ne.s32.totalorder %s215, %s217
      %p221 = scmp.eq.s32.totalorder %s29, 0
      %p222 = por %p220, %p221
      %p223 = scmp.ne.s32.totalorder %s215, %s217
      %p224 = scmp.eq.s32.totalorder %s34, 1
      %p225 = por %p223, %p224
      %p226 = scmp.ne.s32.totalorder %s217, %s218
      %p227 = scmp.eq.s32.totalorder %s34, 0
      %p228 = por %p226, %p227
      %p229 = scmp.ne.s32.totalorder %s217, %s218
      %p230 = scmp.eq.s32.totalorder %s35, 1
      %p231 = por %p229, %p230
      %p233 = scmp.ne.s32.totalorder %s218, %s232
      %p234 = scmp.eq.s32.totalorder %s35, 0
      %p235 = por %p233, %p234
      %s237 = sadd.s32 %s236, 1
      %p240 = scmp.eq.s32.totalorder %s29, 1
      %p241 = scmp.ne.s32.totalorder %s236, %s238
      %p242 = scmp.eq.s32.totalorder %s29, 0
      %p243 = por %p241, %p242
      %p244 = scmp.ne.s32.totalorder %s236, %s238
      %p245 = scmp.eq.s32.totalorder %s34, 1
      %p246 = por %p244, %p245
      %p247 = scmp.ne.s32.totalorder %s238, %s239
      %p248 = scmp.eq.s32.totalorder %s34, 0
      %p249 = por %p247, %p248
      %p250 = scmp.ne.s32.totalorder %s238, %s239
      %p251 = scmp.eq.s32.totalorder %s35, 1
      %p252 = por %p250, %p251
      %p254 = scmp.ne.s32.totalorder %s239, %s253
      %p255 = scmp.eq.s32.totalorder %s35, 0
      %p256 = por %p254, %p255
      %s258 = sadd.s32 %s257, 1
      %p261 = scmp.eq.s32.totalorder %s29, 1
      %p262 = scmp.ne.s32.totalorder %s257, %s259
      %p263 = scmp.eq.s32.totalorder %s29, 0
      %p264 = por %p262, %p263
      %p265 = scmp.ne.s32.totalorder %s257, %s259
      %p266 = scmp.eq.s32.totalorder %s34, 1
      %p267 = por %p265, %p266
      %p268 = scmp.ne.s32.totalorder %s259, %s260
      %p269 = scmp.eq.s32.totalorder %s34, 0
      %p270 = por %p268, %p269
      %p271 = scmp.ne.s32.totalorder %s259, %s260
      %p272 = scmp.eq.s32.totalorder %s35, 1
      %p273 = por %p271, %p272
      %p275 = scmp.ne.s32.totalorder %s260, %s274
      %p276 = scmp.eq.s32.totalorder %s35, 0
      %p277 = por %p275, %p276
      %s279 = sadd.s32 %s278, 1
      %p282 = scmp.eq.s32.totalorder %s29, 1
      %p283 = scmp.ne.s32.totalorder %s278, %s280
      %p284 = scmp.eq.s32.totalorder %s29, 0
      %p285 = por %p283, %p284
      %p286 = scmp.ne.s32.totalorder %s278, %s280
      %p287 = scmp.eq.s32.totalorder %s34, 1
      %p288 = por %p286, %p287
      %p289 = scmp.ne.s32.totalorder %s280, %s281
      %p290 = scmp.eq.s32.totalorder %s34, 0
      %p291 = por %p289, %p290
      %p292 = scmp.ne.s32.totalorder %s280, %s281
      %p293 = scmp.eq.s32.totalorder %s35, 1
      %p294 = por %p292, %p293
      %p296 = scmp.ne.s32.totalorder %s281, %s295
      %p297 = scmp.eq.s32.totalorder %s35, 0
      %p298 = por %p296, %p297
      %s300 = sadd.s32 %s299, 1
      %p303 = scmp.eq.s32.totalorder %s29, 1
      %p304 = scmp.ne.s32.totalorder %s299, %s301
      %p305 = scmp.eq.s32.totalorder %s29, 0
      %p306 = por %p304, %p305
      %p307 = scmp.ne.s32.totalorder %s299, %s301
      %p308 = scmp.eq.s32.totalorder %s34, 1
      %p309 = por %p307, %p308
      %p310 = scmp.ne.s32.totalorder %s301, %s302
      %p311 = scmp.eq.s32.totalorder %s34, 0
      %p312 = por %p310, %p311
      %p313 = scmp.ne.s32.totalorder %s301, %s302
      %p314 = scmp.eq.s32.totalorder %s35, 1
      %p315 = por %p313, %p314
      %p317 = scmp.ne.s32.totalorder %s302, %s316
      %p318 = scmp.eq.s32.totalorder %s35, 0
      %p319 = por %p317, %p318
      %s321 = sadd.s32 %s320, 1
      %p324 = scmp.eq.s32.totalorder %s29, 1
      %p325 = scmp.ne.s32.totalorder %s320, %s322
      %p326 = scmp.eq.s32.totalorder %s29, 0
      %p327 = por %p325, %p326
      %p328 = scmp.ne.s32.totalorder %s320, %s322
      %p329 = scmp.eq.s32.totalorder %s34, 1
      %p330 = por %p328, %p329
      %p331 = scmp.ne.s32.totalorder %s322, %s323
      %p332 = scmp.eq.s32.totalorder %s34, 0
      %p333 = por %p331, %p332
      %p334 = scmp.ne.s32.totalorder %s322, %s323
      %p335 = scmp.eq.s32.totalorder %s35, 1
      %p336 = por %p334, %p335
      %p338 = scmp.ne.s32.totalorder %s323, %s337
      %p339 = scmp.eq.s32.totalorder %s35, 0
      %p340 = por %p338, %p339
      %s342 = sadd.s32 %s341, 1
      %p345 = scmp.eq.s32.totalorder %s29, 1
      %p346 = scmp.ne.s32.totalorder %s341, %s343
      %p347 = scmp.eq.s32.totalorder %s29, 0
      %p348 = por %p346, %p347
      %p349 = scmp.ne.s32.totalorder %s341, %s343
      %p350 = scmp.eq.s32.totalorder %s34, 1
      %p351 = por %p349, %p350
      %p352 = scmp.ne.s32.totalorder %s343, %s344
      %p353 = scmp.eq.s32.totalorder %s34, 0
      %p354 = por %p352, %p353
      %p355 = scmp.ne.s32.totalorder %s343, %s344
      %p356 = scmp.eq.s32.totalorder %s35, 1
      %p357 = por %p355, %p356
      %p359 = scmp.ne.s32.totalorder %s344, %s358
      %p360 = scmp.eq.s32.totalorder %s35, 0
      %p361 = por %p359, %p360
      %s363 = sadd.s32 %s362, 1
      %p366 = scmp.eq.s32.totalorder %s29, 1
      %p367 = scmp.ne.s32.totalorder %s362, %s364
      %p368 = scmp.eq.s32.totalorder %s29, 0
      %p369 = por %p367, %p368
      %p370 = scmp.ne.s32.totalorder %s362, %s364
      %p371 = scmp.eq.s32.totalorder %s34, 1
      %p372 = por %p370, %p371
      %p373 = scmp.ne.s32.totalorder %s364, %s365
      %p374 = scmp.eq.s32.totalorder %s34, 0
      %p375 = por %p373, %p374
      %p376 = scmp.ne.s32.totalorder %s364, %s365
      %p377 = scmp.eq.s32.totalorder %s35, 1
      %p378 = por %p376, %p377
      %p380 = scmp.ne.s32.totalorder %s365, %s379
      %p381 = scmp.eq.s32.totalorder %s35, 0
      %p382 = por %p380, %p381
      %s384 = sadd.s32 %s383, 1
      %p387 = scmp.eq.s32.totalorder %s29, 1
      %p388 = scmp.ne.s32.totalorder %s383, %s385
      %p389 = scmp.eq.s32.totalorder %s29, 0
      %p390 = por %p388, %p389
      %p391 = scmp.ne.s32.totalorder %s383, %s385
      %p392 = scmp.eq.s32.totalorder %s34, 1
      %p393 = por %p391, %p392
      %p394 = scmp.ne.s32.totalorder %s385, %s386
      %p395 = scmp.eq.s32.totalorder %s34, 0
      %p396 = por %p394, %p395
      %p397 = scmp.ne.s32.totalorder %s385, %s386
      %p398 = scmp.eq.s32.totalorder %s35, 1
      %p399 = por %p397, %p398
      %p401 = scmp.ne.s32.totalorder %s386, %s400
      %p402 = scmp.eq.s32.totalorder %s35, 0
      %p403 = por %p401, %p402
      %s405 = sadd.s32 %s404, 1
      %p408 = scmp.eq.s32.totalorder %s29, 1
      %p409 = scmp.ne.s32.totalorder %s404, %s406
      %p410 = scmp.eq.s32.totalorder %s29, 0
      %p411 = por %p409, %p410
      %p412 = scmp.ne.s32.totalorder %s404, %s406
      %p413 = scmp.eq.s32.totalorder %s34, 1
      %p414 = por %p412, %p413
      %p415 = scmp.ne.s32.totalorder %s406, %s407
      %p416 = scmp.eq.s32.totalorder %s34, 0
      %p417 = por %p415, %p416
      %p418 = scmp.ne.s32.totalorder %s406, %s407
      %p419 = scmp.eq.s32.totalorder %s35, 1
      %p420 = por %p418, %p419
      %p422 = scmp.ne.s32.totalorder %s407, %s421
      %p423 = scmp.eq.s32.totalorder %s35, 0
      %p424 = por %p422, %p423
      %s426 = sadd.s32 %s425, 1
      %p429 = scmp.eq.s32.totalorder %s29, 1
      %p430 = scmp.ne.s32.totalorder %s425, %s427
      %p431 = scmp.eq.s32.totalorder %s29, 0
      %p432 = por %p430, %p431
      %p433 = scmp.ne.s32.totalorder %s425, %s427
      %p434 = scmp.eq.s32.totalorder %s34, 1
      %p435 = por %p433, %p434
      %p436 = scmp.ne.s32.totalorder %s427, %s428
      %p437 = scmp.eq.s32.totalorder %s34, 0
      %p438 = por %p436, %p437
      %p439 = scmp.ne.s32.totalorder %s427, %s428
      %p440 = scmp.eq.s32.totalorder %s35, 1
      %p441 = por %p439, %p440
      %p443 = scmp.ne.s32.totalorder %s428, %s442
      %p444 = scmp.eq.s32.totalorder %s35, 0
      %p445 = por %p443, %p444
      %s447 = sadd.s32 %s446, 1
      %p450 = scmp.eq.s32.totalorder %s29, 1
      %p451 = scmp.ne.s32.totalorder %s446, %s448
      %p452 = scmp.eq.s32.totalorder %s29, 0
      %p453 = por %p451, %p452
      %p454 = scmp.ne.s32.totalorder %s446, %s448
      %p455 = scmp.eq.s32.totalorder %s34, 1
      %p456 = por %p454, %p455
      %p457 = scmp.ne.s32.totalorder %s448, %s449
      %p458 = scmp.eq.s32.totalorder %s34, 0
      %p459 = por %p457, %p458
      %p460 = scmp.ne.s32.totalorder %s448, %s449
      %p461 = scmp.eq.s32.totalorder %s35, 1
      %p462 = por %p460, %p461
      %p464 = scmp.ne.s32.totalorder %s449, %s463
      %p465 = scmp.eq.s32.totalorder %s35, 0
      %p466 = por %p464, %p465
      %s467 = ssub.s32 %s29, %s36
      %p468 = scmp.eq.s32.totalorder %s467, 0
      %s470 = sadd.s32 %s469, 1
      %s471 = scalar_select %p468, %s469, %s470
      %p474 = pneg %p468
      %p475 = scmp.eq.s32.totalorder %s29, 1
      %p476 = por %p474, %p475
      %p477 = scmp.ne.s32.totalorder %s469, %s472
      %p478 = scmp.eq.s32.totalorder %s29, 0
      %p479 = por %p477, %p478
      %p480 = scmp.ne.s32.totalorder %s469, %s472
      %p481 = scmp.eq.s32.totalorder %s34, 1
      %p482 = por %p480, %p481
      %p483 = scmp.ne.s32.totalorder %s472, %s473
      %p484 = scmp.eq.s32.totalorder %s34, 0
      %p485 = por %p483, %p484
      %p486 = scmp.ne.s32.totalorder %s472, %s473
      %p487 = scmp.eq.s32.totalorder %s35, 1
      %p488 = por %p486, %p487
      %p490 = scmp.ne.s32.totalorder %s473, %s489
      %p491 = scmp.eq.s32.totalorder %s35, 0
      %p492 = por %p490, %p491
      %p493 = scmp.le.s32.totalorder 1, %s29
      %p494 = scmp.lt.s32.totalorder %s29, 3
      %p495 = pnand %p493, %p494
      %p496 = pneg %p495
      // Predicated region
      $region9: #{bert_enc_forward.1} parent=5 // pred_check
        _
      $region10: #{bert_enc_forward.1} parent=5 // pred_check_branch
        %498 = sbr.rel (%p495) target = $region12
      $region11: #{bert_enc_forward.1} parent=5 // pred_region
        %s499 = ssub.s32 %s29, 1
        // Predicated region
        $region13: #{bert_enc_forward.1} parent=11 // pred_check
          %p500 = pneg %p102
        $region14: #{bert_enc_forward.1} parent=11 // pred_check_branch
          %502 = sbr.rel (%p500) target = $region16
        $region15: #{bert_enc_forward.1} parent=11 // pred_region
          _
        $region16: #{bert_enc_forward.1} parent=11 // pred_fallthru
          _
        // Predicated region
        $region17: #{bert_enc_forward.1} parent=11 // pred_check
          %p503 = pneg %p123
        $region18: #{bert_enc_forward.1} parent=11 // pred_check_branch
          %505 = sbr.rel (%p503) target = $region20
        $region19: #{bert_enc_forward.1} parent=11 // pred_region
          _
        $region20: #{bert_enc_forward.1} parent=11 // pred_fallthru
          _
        // Predicated region
        $region21: #{bert_enc_forward.1} parent=11 // pred_check
          %p506 = pneg %p144
        $region22: #{bert_enc_forward.1} parent=11 // pred_check_branch
          %508 = sbr.rel (%p506) target = $region24
        $region23: #{bert_enc_forward.1} parent=11 // pred_region
          _
        $region24: #{bert_enc_forward.1} parent=11 // pred_fallthru
          _
        // Predicated region
        $region25: #{bert_enc_forward.1} parent=11 // pred_check
          %p509 = pneg %p165
        $region26: #{bert_enc_forward.1} parent=11 // pred_check_branch
          %511 = sbr.rel (%p509) target = $region28
        $region27: #{bert_enc_forward.1} parent=11 // pred_region
          _
        $region28: #{bert_enc_forward.1} parent=11 // pred_fallthru
          _
        // Predicated region
        $region29: #{bert_enc_forward.1} parent=11 // pred_check
          %p512 = pneg %p186
        $region30: #{bert_enc_forward.1} parent=11 // pred_check_branch
          %514 = sbr.rel (%p512) target = $region32
        $region31: #{bert_enc_forward.1} parent=11 // pred_region
          _
        $region32: #{bert_enc_forward.1} parent=11 // pred_fallthru
          _
        // Predicated region
        $region33: #{bert_enc_forward.1} parent=11 // pred_check
          %p515 = pneg %p207
        $region34: #{bert_enc_forward.1} parent=11 // pred_check_branch
          %517 = sbr.rel (%p515) target = $region36
        $region35: #{bert_enc_forward.1} parent=11 // pred_region
          _
        $region36: #{bert_enc_forward.1} parent=11 // pred_fallthru
          _
        // Predicated region
        $region37: #{bert_enc_forward.1} parent=11 // pred_check
          %p518 = pneg %p228
        $region38: #{bert_enc_forward.1} parent=11 // pred_check_branch
          %520 = sbr.rel (%p518) target = $region40
        $region39: #{bert_enc_forward.1} parent=11 // pred_region
          _
        $region40: #{bert_enc_forward.1} parent=11 // pred_fallthru
          _
        // Predicated region
        $region41: #{bert_enc_forward.1} parent=11 // pred_check
          %p521 = pneg %p249
        $region42: #{bert_enc_forward.1} parent=11 // pred_check_branch
          %523 = sbr.rel (%p521) target = $region44
        $region43: #{bert_enc_forward.1} parent=11 // pred_region
          _
        $region44: #{bert_enc_forward.1} parent=11 // pred_fallthru
          _
        // Predicated region
        $region45: #{bert_enc_forward.1} parent=11 // pred_check
          %p524 = pneg %p270
        $region46: #{bert_enc_forward.1} parent=11 // pred_check_branch
          %526 = sbr.rel (%p524) target = $region48
        $region47: #{bert_enc_forward.1} parent=11 // pred_region
          _
        $region48: #{bert_enc_forward.1} parent=11 // pred_fallthru
          _
        // Predicated region
        $region49: #{bert_enc_forward.1} parent=11 // pred_check
          %p527 = pneg %p291
        $region50: #{bert_enc_forward.1} parent=11 // pred_check_branch
          %529 = sbr.rel (%p527) target = $region52
        $region51: #{bert_enc_forward.1} parent=11 // pred_region
          _
        $region52: #{bert_enc_forward.1} parent=11 // pred_fallthru
          _
        // Predicated region
        $region53: #{bert_enc_forward.1} parent=11 // pred_check
          %p530 = pneg %p312
        $region54: #{bert_enc_forward.1} parent=11 // pred_check_branch
          %532 = sbr.rel (%p530) target = $region56
        $region55: #{bert_enc_forward.1} parent=11 // pred_region
          _
        $region56: #{bert_enc_forward.1} parent=11 // pred_fallthru
          _
        // Predicated region
        $region57: #{bert_enc_forward.1} parent=11 // pred_check
          %p533 = pneg %p333
        $region58: #{bert_enc_forward.1} parent=11 // pred_check_branch
          %535 = sbr.rel (%p533) target = $region60
        $region59: #{bert_enc_forward.1} parent=11 // pred_region
          _
        $region60: #{bert_enc_forward.1} parent=11 // pred_fallthru
          _
        // Predicated region
        $region61: #{bert_enc_forward.1} parent=11 // pred_check
          %p536 = pneg %p354
        $region62: #{bert_enc_forward.1} parent=11 // pred_check_branch
          %538 = sbr.rel (%p536) target = $region64
        $region63: #{bert_enc_forward.1} parent=11 // pred_region
          _
        $region64: #{bert_enc_forward.1} parent=11 // pred_fallthru
          _
        // Predicated region
        $region65: #{bert_enc_forward.1} parent=11 // pred_check
          %p539 = pneg %p375
        $region66: #{bert_enc_forward.1} parent=11 // pred_check_branch
          %541 = sbr.rel (%p539) target = $region68
        $region67: #{bert_enc_forward.1} parent=11 // pred_region
          _
        $region68: #{bert_enc_forward.1} parent=11 // pred_fallthru
          _
        // Predicated region
        $region69: #{bert_enc_forward.1} parent=11 // pred_check
          %p542 = pneg %p396
        $region70: #{bert_enc_forward.1} parent=11 // pred_check_branch
          %544 = sbr.rel (%p542) target = $region72
        $region71: #{bert_enc_forward.1} parent=11 // pred_region
          _
        $region72: #{bert_enc_forward.1} parent=11 // pred_fallthru
          _
        // Predicated region
        $region73: #{bert_enc_forward.1} parent=11 // pred_check
          %p545 = pneg %p417
        $region74: #{bert_enc_forward.1} parent=11 // pred_check_branch
          %547 = sbr.rel (%p545) target = $region76
        $region75: #{bert_enc_forward.1} parent=11 // pred_region
          _
        $region76: #{bert_enc_forward.1} parent=11 // pred_fallthru
          _
        // Predicated region
        $region77: #{bert_enc_forward.1} parent=11 // pred_check
          %p548 = pneg %p438
        $region78: #{bert_enc_forward.1} parent=11 // pred_check_branch
          %550 = sbr.rel (%p548) target = $region80
        $region79: #{bert_enc_forward.1} parent=11 // pred_region
          _
        $region80: #{bert_enc_forward.1} parent=11 // pred_fallthru
          _
        // Predicated region
        $region81: #{bert_enc_forward.1} parent=11 // pred_check
          %p551 = pneg %p459
        $region82: #{bert_enc_forward.1} parent=11 // pred_check_branch
          %553 = sbr.rel (%p551) target = $region84
        $region83: #{bert_enc_forward.1} parent=11 // pred_region
          _
        $region84: #{bert_enc_forward.1} parent=11 // pred_fallthru
          _
      $region12: #{bert_enc_forward.1} parent=5 // pred_fallthru
        _
      %p554 = scmp.lt.s32.totalorder %s29, 2
      // Predicated region
      $region85: #{bert_enc_forward.1} parent=5 // pred_check
        %p555 = pneg %p554
      $region86: #{bert_enc_forward.1} parent=5 // pred_check_branch
        %557 = sbr.rel (%p555) target = $region88
      $region87: #{bert_enc_forward.1} parent=5 // pred_region
        // Predicated region
        $region89: #{bert_enc_forward.1} parent=87 // pred_check
          %p558 = pneg %p49
        $region90: #{bert_enc_forward.1} parent=87 // pred_check_branch
          %560 = sbr.rel (%p558) target = $region92
        $region91: #{bert_enc_forward.1} parent=87 // pred_region
          %p561 = scmp.lt.s32.totalorder %s29, 1
          %s562 = scalar_select %p561, %s29, 1
          %s563 = scalar_lea.vmem %s0, %s562
        $region92: #{bert_enc_forward.1} parent=87 // pred_fallthru
          _
        // Predicated region
        $region93: #{bert_enc_forward.1} parent=87 // pred_check
          %p564 = pneg %p75
        $region94: #{bert_enc_forward.1} parent=87 // pred_check_branch
          %566 = sbr.rel (%p564) target = $region96
        $region95: #{bert_enc_forward.1} parent=87 // pred_region
          %p567 = scmp.lt.s32.totalorder %s29, 1
          %s568 = scalar_select %p567, %s29, 1
          %s569 = smul.addr %s568, 8
          %s570 = scalar_lea.vmem %s1, %s569
        $region96: #{bert_enc_forward.1} parent=87 // pred_fallthru
          _
      $region88: #{bert_enc_forward.1} parent=5 // pred_fallthru
        _
      %p571 = scmp.le.s32.totalorder 1, %s29
      %p572 = scmp.lt.s32.totalorder %s29, 3
      %p573 = pnand %p571, %p572
      %p574 = pneg %p573
      // Predicated region
      $region97: #{bert_enc_forward.1} parent=5 // pred_check
        _
      $region98: #{bert_enc_forward.1} parent=5 // pred_check_branch
        %576 = sbr.rel (%p573) target = $region100
      $region99: #{bert_enc_forward.1} parent=5 // pred_region
        %s577 = ssub.s32 %s29, 1
        %p578 = scmp.lt.s32.totalorder %s34, 1
        %s579 = scalar_select %p578, %s34, 1
        %s580 = scalar_lea.vmem %s0, %s579
        %p581 = pneg %p55
        %p582 = pneg %p52
        %p583 = scmp.lt.s32.totalorder %s34, 1
        %s584 = scalar_select %p583, %s34, 1
        %s585 = smul.addr %s584, 8
        %s586 = scalar_lea.vmem %s1, %s585
        %p587 = pneg %p81
        %p588 = pneg %p78
        %p589 = pneg %p102
        %p590 = pneg %p99
        %p591 = pneg %p123
        %p592 = pneg %p120
        %p593 = pneg %p144
        %p594 = pneg %p141
        %p595 = pneg %p165
        %p596 = pneg %p162
        %p597 = pneg %p186
        %p598 = pneg %p183
        %p599 = pneg %p207
        %p600 = pneg %p204
        %p601 = pneg %p228
        %p602 = pneg %p225
        %p603 = pneg %p249
        %p604 = pneg %p246
        %p605 = pneg %p270
        %p606 = pneg %p267
        %p607 = pneg %p291
        %p608 = pneg %p288
        %p609 = pneg %p312
        %p610 = pneg %p309
        %p611 = pneg %p333
        %p612 = pneg %p330
        %p613 = pneg %p354
        %p614 = pneg %p351
        %p615 = pneg %p375
        %p616 = pneg %p372
        %p617 = pneg %p396
        %p618 = pneg %p393
        %p619 = pneg %p417
        %p620 = pneg %p414
        %p621 = pneg %p438
        %p622 = pneg %p435
        %p623 = pneg %p459
        %p624 = pneg %p456
        %p625 = pneg %p485
        %p626 = pneg %p482
        %s627 = sand.u32 %s472, 1
        %s628 = scalar_lea.sflag [#allocation3], %s627
        %s629 = sand.u32 %s472, 1
        %s630 = smul.addr %s629, 8
        %s631 = scalar_lea.vmem [#allocation2], %s630
        %p632 = scmp.lt.s32.totalorder %s34, 1
        %s633 = scalar_select %p632, %s34, 1
        %s634 = scalar_lea.vmem %s0, %s633
        %p635 = scmp.lt.s32.totalorder %s34, 1
        %s636 = scalar_select %p635, %s34, 1
        %s637 = smul.addr %s636, 8
        %s638 = scalar_lea.vmem %s1, %s637
        %v640 = vld [vmem:[%s634] sm:$0x1]
        %v641 = vld [vmem:[%s638] sm:$0xff]
        %v642 = vld [vmem:[%s2] sm:$0x1]
        %v643 = vld [vmem:[%s3] sm:$0x1]
        %vm644 = vcmask 261120
        %v645 = vsel %vm644, %v641, 0.0
        %646 = vadd.xlane.f32.xlu0 %v645
        %v647 = vpop.xlane.xlu0 %646
        %v648 = vrcp.pop 32.0
        %v649 = vmul.f32 %v647, %v648
        %v650 = vsub.f32 %v641, %v649
        %v651 = vmul.f32 %v650, %v650
        %v652 = vsel %vm644, %v651, 0.0
        %653 = vadd.xlane.f32.xlu0 %v652
        %v654 = vpop.xlane.xlu0 %653
        %v655 = vmul.f32 %v654, %v648
        %v656 = vadd.f32 %v655, 1e-12
        %v657 = vrsqrt.pop %v656
        %v658 = vmul.f32 %v650, %v657
        %v660 = vlaneseq
        %v661 = vshrl.u32 %v660, 7
        %v662 = vsub.s32 0, %v661
        %v663 = vrot.slane %v642, %v662
        %v665 = vmul.f32 %v658, %v663
        %v667 = vlaneseq
        %v668 = vshrl.u32 %v667, 7
        %v669 = vsub.s32 0, %v668
        %v670 = vrot.slane %v643, %v669
        %v672 = vadd.f32 %v665, %v670
        %v673 = vpack.c.bf16 %v672, %v672
        %v674 = vld [vmem:[%s4] sm:$0xf]
        %v675 = vld [vmem:[%s4 + $0x4] sm:$0xf]
        %v676 = vld [vmem:[%s4 + $0x8] sm:$0xf]
        %v677 = vld [vmem:[%s4 + $0xc] sm:$0xf]
        %v678 = vld [vmem:[%s5] sm:$0x1]
        %v680 = vlaneseq
        %v681 = vshrl.u32 %v680, 7
        %v682 = vsub.s32 0, %v681
        %v683 = vrot.slane %v678, %v682
        %v689 = vunpack.c.l.b16 %v674
        %v690 = vunpack.c.l.b16 %v675
        %v691 = vunpack.c.l.b16 %v676
        %v692 = vunpack.c.l.b16 %v677
        %v693 = vpack.c.b16 %v690, %v689
        %v694 = vpack.c.b16 %v692, %v691
        %v698 = vsel %vm644, %v673, 0
        %700 = vmatprep.subr.bf16.mxu0 0
        %701 = vmatpush1.bf16.msra.mxu0 %v693
        %702 = vmatprep.subr.bf16.mxu0 0
        %703 = vmatpush1.bf16.msra.mxu0 %v694
        %704 = vmatprep.subr.bf16.mxu0 0
        %705 = vmatpush1.bf16.msra.mxu0 0
        %706 = vmatprep.subr.bf16.mxu0 0
        %707 = vmatpush1.bf16.msra.mxu0 0
        %708 = vmatprep.subr.bf16.mxu0 0
        %709 = vmatpush1.bf16.msra.mxu0 0
        %710 = vmatprep.subr.bf16.mxu0 0
        %711 = vmatpush1.bf16.msra.mxu0 0
        %712 = vmatprep.subr.bf16.mxu0 0
        %713 = vmatpush1.bf16.msra.mxu0 0
        %714 = vmatprep.subr.bf16.mxu0 0
        %715 = vmatpush1.bf16.msra.mxu0 0
        %716 = vmatprep.subr.bf16.mxu0 0
        %717 = vmatpush1.bf16.msra.mxu0 0
        %718 = vmatprep.subr.bf16.mxu0 0
        %719 = vmatpush1.bf16.msra.mxu0 0
        %720 = vmatprep.subr.bf16.mxu0 0
        %721 = vmatpush1.bf16.msra.mxu0 0
        %722 = vmatprep.subr.bf16.mxu0 0
        %723 = vmatpush1.bf16.msra.mxu0 0
        %724 = vmatprep.subr.bf16.mxu0 0
        %725 = vmatpush1.bf16.msra.mxu0 0
        %726 = vmatprep.subr.bf16.mxu0 0
        %727 = vmatpush1.bf16.msra.mxu0 0
        %728 = vmatprep.subr.bf16.mxu0 0
        %729 = vmatpush1.bf16.msra.mxu0 0
        %730 = vmatprep.subr.bf16.mxu0 0
        %731 = vmatpush1.bf16.msra.mxu0 0
        %732 = vmatprep.mubr.bf16.mxu0 0
        %733 = vmatmul.mubr.bf16.gmra.mrb[0].mxu0 %v698
        %v734 = vpop.f32.mrb[0].mxu0
        %v735 = vadd.f32 %v683, %v734
        %v736 = vpop.f32.mrb[0].mxu0
        %v737 = vpop.f32.mrb[0].mxu0
        %v738 = vpop.f32.mrb[0].mxu0
        %739 = vdwg.mxu0
        %v740 = vpack.c.bf16 %v735, %v735
        %742 = vrot.lane.b32.xlu0 %v740, 96
        %v743 = vpop.permute.xlu0 %742
        %vm744 = vcmask 64512
        %v746 = vsel %vm744, %v740, 0
        %v749 = vsel %vm744, %v743, 0
        %751 = vmatprep.subr.bf16.mxu0 0
        %752 = vmatpush1.bf16.xpose.msra.mxu0 %v749
        %753 = vmatprep.subr.bf16.mxu0 0
        %754 = vmatpush1.bf16.xpose.msra.mxu0 0
        %755 = vmatprep.subr.bf16.mxu0 0
        %756 = vmatpush1.bf16.xpose.msra.mxu0 0
        %757 = vmatprep.subr.bf16.mxu0 0
        %758 = vmatpush1.bf16.xpose.msra.mxu0 0
        %759 = vmatprep.subr.bf16.mxu0 0
        %760 = vmatpush1.bf16.xpose.msra.mxu0 0
        %761 = vmatprep.subr.bf16.mxu0 0
        %762 = vmatpush1.bf16.xpose.msra.mxu0 0
        %763 = vmatprep.subr.bf16.mxu0 0
        %764 = vmatpush1.bf16.xpose.msra.mxu0 0
        %765 = vmatprep.subr.bf16.mxu0 0
        %766 = vmatpush1.bf16.xpose.msra.mxu0 0
        %767 = vmatprep.subr.bf16.mxu0 0
        %768 = vmatpush1.bf16.xpose.msra.mxu0 0
        %769 = vmatprep.subr.bf16.mxu0 0
        %770 = vmatpush1.bf16.xpose.msra.mxu0 0
        %771 = vmatprep.subr.bf16.mxu0 0
        %772 = vmatpush1.bf16.xpose.msra.mxu0 0
        %773 = vmatprep.subr.bf16.mxu0 0
        %774 = vmatpush1.bf16.xpose.msra.mxu0 0
        %775 = vmatprep.subr.bf16.mxu0 0
        %776 = vmatpush1.bf16.xpose.msra.mxu0 0
        %777 = vmatprep.subr.bf16.mxu0 0
        %778 = vmatpush1.bf16.xpose.msra.mxu0 0
        %779 = vmatprep.subr.bf16.mxu0 0
        %780 = vmatpush1.bf16.xpose.msra.mxu0 0
        %781 = vmatprep.subr.bf16.mxu0 0
        %782 = vmatpush1.bf16.xpose.msra.mxu0 0
        %783 = vmatprep.mubr.bf16.mxu0 0
        %784 = vmatmul.mubr.bf16.gmra.mrb[0].mxu0 %v746
        %v785 = vpop.f32.mrb[0].mxu0
        %v786 = vadd.f32 0.0, %v785
        %v787 = vpop.f32.mrb[0].mxu0
        %v788 = vpop.f32.mrb[0].mxu0
        %v789 = vpop.f32.mrb[0].mxu0
        %790 = vdwg.mxu0
        %v791 = vmul.f32 %v786, 0.35355338
        %v793 = vlaneseq
        %v794 = vshrl.u32 %v793, 7
        %v795 = vsub.s32 0, %v794
        %v796 = vrot.slane %v640, %v795
        %v798 = vadd.f32 %v791, %v796
        %v799 = vsel %vm744, %v798, -inf
        %800 = vmax.xlane.f32.xlu0 %v799
        %v801 = vpop.xlane.xlu0 %800
        %v802 = vsub.f32 %v798, %v801
        %v803 = vmul.f32 %v802, 1.442695
        %v804 = vpow.pop %v803
        %v805 = vsel %vm744, %v804, 0.0
        %806 = vadd.xlane.f32.xlu0 %v805
        %v807 = vpop.xlane.xlu0 %806
        %v808 = vrcp.pop %v807
        %v809 = vmul.f32 %v804, %v808
        %v810 = vpack.c.bf16 %v809, %v809
        %811 = vrot.lane.b32.xlu0 %v740, 64
        %v812 = vpop.permute.xlu0 %811
        %v814 = vsel %vm744, %v810, 0
        %vm816 = vcmask 1043456
        %v818 = vsel %vm816, %v812, 0
        %820 = vmatprep.subr.bf16.mxu0 0
        %821 = vmatpush1.bf16.msra.mxu0 %v818
        %822 = vmatprep.subr.bf16.mxu0 0
        %823 = vmatpush1.bf16.msra.mxu0 0
        %824 = vmatprep.subr.bf16.mxu0 0
        %825 = vmatpush1.bf16.msra.mxu0 0
        %826 = vmatprep.subr.bf16.mxu0 0
        %827 = vmatpush1.bf16.msra.mxu0 0
        %828 = vmatprep.subr.bf16.mxu0 0
        %829 = vmatpush1.bf16.msra.mxu0 0
        %830 = vmatprep.subr.bf16.mxu0 0
        %831 = vmatpush1.bf16.msra.mxu0 0
        %832 = vmatprep.subr.bf16.mxu0 0
        %833 = vmatpush1.bf16.msra.mxu0 0
        %834 = vmatprep.subr.bf16.mxu0 0
        %835 = vmatpush1.bf16.msra.mxu0 0
        %836 = vmatprep.subr.bf16.mxu0 0
        %837 = vmatpush1.bf16.msra.mxu0 0
        %838 = vmatprep.subr.bf16.mxu0 0
        %839 = vmatpush1.bf16.msra.mxu0 0
        %840 = vmatprep.subr.bf16.mxu0 0
        %841 = vmatpush1.bf16.msra.mxu0 0
        %842 = vmatprep.subr.bf16.mxu0 0
        %843 = vmatpush1.bf16.msra.mxu0 0
        %844 = vmatprep.subr.bf16.mxu0 0
        %845 = vmatpush1.bf16.msra.mxu0 0
        %846 = vmatprep.subr.bf16.mxu0 0
        %847 = vmatpush1.bf16.msra.mxu0 0
        %848 = vmatprep.subr.bf16.mxu0 0
        %849 = vmatpush1.bf16.msra.mxu0 0
        %850 = vmatprep.subr.bf16.mxu0 0
        %851 = vmatpush1.bf16.msra.mxu0 0
        %852 = vmatprep.mubr.bf16.mxu0 0
        %853 = vmatmul.mubr.bf16.gmra.mrb[0].mxu0 %v814
        %v854 = vpop.f32.mrb[0].mxu0
        %v855 = vadd.f32 0.0, %v854
        %v856 = vpop.f32.mrb[0].mxu0
        %v857 = vpop.f32.mrb[0].mxu0
        %v858 = vpop.f32.mrb[0].mxu0
        %859 = vdwg.mxu0
        %860 = vrot.lane.b32.xlu0 %v740, 120
        %v861 = vpop.permute.xlu0 %860
        %862 = vrot.lane.b32.xlu0 %v740, 88
        %v863 = vpop.permute.xlu0 %862
        %v865 = vsel %vm744, %v861, 0
        %v868 = vsel %vm744, %v863, 0
        %870 = vmatprep.subr.bf16.mxu0 0
        %871 = vmatpush1.bf16.xpose.msra.mxu0 %v868
        %872 = vmatprep.subr.bf16.mxu0 0
        %873 = vmatpush1.bf16.xpose.msra.mxu0 0
        %874 = vmatprep.subr.bf16.mxu0 0
        %875 = vmatpush1.bf16.xpose.msra.mxu0 0
        %876 = vmatprep.subr.bf16.mxu0 0
        %877 = vmatpush1.bf16.xpose.msra.mxu0 0
        %878 = vmatprep.subr.bf16.mxu0 0
        %879 = vmatpush1.bf16.xpose.msra.mxu0 0
        %880 = vmatprep.subr.bf16.mxu0 0
        %881 = vmatpush1.bf16.xpose.msra.mxu0 0
        %882 = vmatprep.subr.bf16.mxu0 0
        %883 = vmatpush1.bf16.xpose.msra.mxu0 0
        %884 = vmatprep.subr.bf16.mxu0 0
        %885 = vmatpush1.bf16.xpose.msra.mxu0 0
        %886 = vmatprep.subr.bf16.mxu0 0
        %887 = vmatpush1.bf16.xpose.msra.mxu0 0
        %888 = vmatprep.subr.bf16.mxu0 0
        %889 = vmatpush1.bf16.xpose.msra.mxu0 0
        %890 = vmatprep.subr.bf16.mxu0 0
        %891 = vmatpush1.bf16.xpose.msra.mxu0 0
        %892 = vmatprep.subr.bf16.mxu0 0
        %893 = vmatpush1.bf16.xpose.msra.mxu0 0
        %894 = vmatprep.subr.bf16.mxu0 0
        %895 = vmatpush1.bf16.xpose.msra.mxu0 0
        %896 = vmatprep.subr.bf16.mxu0 0
        %897 = vmatpush1.bf16.xpose.msra.mxu0 0
        %898 = vmatprep.subr.bf16.mxu0 0
        %899 = vmatpush1.bf16.xpose.msra.mxu0 0
        %900 = vmatprep.subr.bf16.mxu0 0
        %901 = vmatpush1.bf16.xpose.msra.mxu0 0
        %902 = vmatprep.mubr.bf16.mxu0 0
        %903 = vmatmul.mubr.bf16.gmra.mrb[0].mxu0 %v865
        %v904 = vpop.f32.mrb[0].mxu0
        %v905 = vadd.f32 0.0, %v904
        %v906 = vpop.f32.mrb[0].mxu0
        %v907 = vpop.f32.mrb[0].mxu0
        %v908 = vpop.f32.mrb[0].mxu0
        %909 = vdwg.mxu0
        %v910 = vmul.f32 %v905, 0.35355338
        %v911 = vadd.f32 %v910, %v796
        %v912 = vsel %vm744, %v911, -inf
        %913 = vmax.xlane.f32.xlu0 %v912
        %v914 = vpop.xlane.xlu0 %913
        %v915 = vsub.f32 %v911, %v914
        %v916 = vmul.f32 %v915, 1.442695
        %v917 = vpow.pop %v916
        %v918 = vsel %vm744, %v917, 0.0
        %919 = vadd.xlane.f32.xlu0 %v918
        %v920 = vpop.xlane.xlu0 %919
        %v921 = vrcp.pop %v920
        %v922 = vmul.f32 %v917, %v921
        %v923 = vpack.c.bf16 %v922, %v922
        %924 = vrot.lane.b32.xlu0 %v740, 56
        %v925 = vpop.permute.xlu0 %924
        %v927 = vsel %vm744, %v923, 0
        %v930 = vsel %vm816, %v925, 0
        %932 = vmatprep.subr.bf16.mxu0 0
        %933 = vmatpush1.bf16.msra.mxu0 %v930
        %934 = vmatprep.subr.bf16.mxu0 0
        %935 = vmatpush1.bf16.msra.mxu0 0
        %936 = vmatprep.subr.bf16.mxu0 0
        %937 = vmatpush1.bf16.msra.mxu0 0
        %938 = vmatprep.subr.bf16.mxu0 0
        %939 = vmatpush1.bf16.msra.mxu0 0
        %940 = vmatprep.subr.bf16.mxu0 0
        %941 = vmatpush1.bf16.msra.mxu0 0
        %942 = vmatprep.subr.bf16.mxu0 0
        %943 = vmatpush1.bf16.msra.mxu0 0
        %944 = vmatprep.subr.bf16.mxu0 0
        %945 = vmatpush1.bf16.msra.mxu0 0
        %946 = vmatprep.subr.bf16.mxu0 0
        %947 = vmatpush1.bf16.msra.mxu0 0
        %948 = vmatprep.subr.bf16.mxu0 0
        %949 = vmatpush1.bf16.msra.mxu0 0
        %950 = vmatprep.subr.bf16.mxu0 0
        %951 = vmatpush1.bf16.msra.mxu0 0
        %952 = vmatprep.subr.bf16.mxu0 0
        %953 = vmatpush1.bf16.msra.mxu0 0
        %954 = vmatprep.subr.bf16.mxu0 0
        %955 = vmatpush1.bf16.msra.mxu0 0
        %956 = vmatprep.subr.bf16.mxu0 0
        %957 = vmatpush1.bf16.msra.mxu0 0
        %958 = vmatprep.subr.bf16.mxu0 0
        %959 = vmatpush1.bf16.msra.mxu0 0
        %960 = vmatprep.subr.bf16.mxu0 0
        %961 = vmatpush1.bf16.msra.mxu0 0
        %962 = vmatprep.subr.bf16.mxu0 0
        %963 = vmatpush1.bf16.msra.mxu0 0
        %964 = vmatprep.mubr.bf16.mxu0 0
        %965 = vmatmul.mubr.bf16.gmra.mrb[0].mxu0 %v927
        %v966 = vpop.f32.mrb[0].mxu0
        %v967 = vadd.f32 0.0, %v966
        %v968 = vpop.f32.mrb[0].mxu0
        %v969 = vpop.f32.mrb[0].mxu0
        %v970 = vpop.f32.mrb[0].mxu0
        %971 = vdwg.mxu0
        %972 = vrot.lane.b32.xlu0 %v740, 112
        %v973 = vpop.permute.xlu0 %972
        %974 = vrot.lane.b32.xlu0 %v740, 80
        %v975 = vpop.permute.xlu0 %974
        %v977 = vsel %vm744, %v973, 0
        %v980 = vsel %vm744, %v975, 0
        %982 = vmatprep.subr.bf16.mxu0 0
        %983 = vmatpush1.bf16.xpose.msra.mxu0 %v980
        %984 = vmatprep.subr.bf16.mxu0 0
        %985 = vmatpush1.bf16.xpose.msra.mxu0 0
        %986 = vmatprep.subr.bf16.mxu0 0
        %987 = vmatpush1.bf16.xpose.msra.mxu0 0
        %988 = vmatprep.subr.bf16.mxu0 0
        %989 = vmatpush1.bf16.xpose.msra.mxu0 0
        %990 = vmatprep.subr.bf16.mxu0 0
        %991 = vmatpush1.bf16.xpose.msra.mxu0 0
        %992 = vmatprep.subr.bf16.mxu0 0
        %993 = vmatpush1.bf16.xpose.msra.mxu0 0
        %994 = vmatprep.subr.bf16.mxu0 0
        %995 = vmatpush1.bf16.xpose.msra.mxu0 0
        %996 = vmatprep.subr.bf16.mxu0 0
        %997 = vmatpush1.bf16.xpose.msra.mxu0 0
        %998 = vmatprep.subr.bf16.mxu0 0
        %999 = vmatpush1.bf16.xpose.msra.mxu0 0
        %1000 = vmatprep.subr.bf16.mxu0 0
        %1001 = vmatpush1.bf16.xpose.msra.mxu0 0
        %1002 = vmatprep.subr.bf16.mxu0 0
        %1003 = vmatpush1.bf16.xpose.msra.mxu0 0
        %1004 = vmatprep.subr.bf16.mxu0 0
        %1005 = vmatpush1.bf16.xpose.msra.mxu0 0
        %1006 = vmatprep.subr.bf16.mxu0 0
        %1007 = vmatpush1.bf16.xpose.msra.mxu0 0
        %1008 = vmatprep.subr.bf16.mxu0 0
        %1009 = vmatpush1.bf16.xpose.msra.mxu0 0
        %1010 = vmatprep.subr.bf16.mxu0 0
        %1011 = vmatpush1.bf16.xpose.msra.mxu0 0
        %1012 = vmatprep.subr.bf16.mxu0 0
        %1013 = vmatpush1.bf16.xpose.msra.mxu0 0
        %1014 = vmatprep.mubr.bf16.mxu0 0
        %1015 = vmatmul.mubr.bf16.gmra.mrb[0].mxu0 %v977
        %v1016 = vpop.f32.mrb[0].mxu0
        %v1017 = vadd.f32 0.0, %v1016
        %v1018 = vpop.f32.mrb[0].mxu0
        %v1019 = vpop.f32.mrb[0].mxu0
        %v1020 = vpop.f32.mrb[0].mxu0
        %1021 = vdwg.mxu0
        %v1022 = vmul.f32 %v1017, 0.35355338
        %v1023 = vadd.f32 %v1022, %v796
        %v1024 = vsel %vm744, %v1023, -inf
        %1025 = vmax.xlane.f32.xlu0 %v1024
        %v1026 = vpop.xlane.xlu0 %1025
        %v1027 = vsub.f32 %v1023, %v1026
        %v1028 = vmul.f32 %v1027, 1.442695
        %v1029 = vpow.pop %v1028
        %v1030 = vsel %vm744, %v1029, 0.0
        %1031 = vadd.xlane.f32.xlu0 %v1030
        %v1032 = vpop.xlane.xlu0 %1031
        %v1033 = vrcp.pop %v1032
        %v1034 = vmul.f32 %v1029, %v1033
        %v1035 = vpack.c.bf16 %v1034, %v1034
        %1036 = vrot.lane.b32.xlu0 %v740, 48
        %v1037 = vpop.permute.xlu0 %1036
        %v1039 = vsel %vm744, %v1035, 0
        %v1042 = vsel %vm816, %v1037, 0
        %1044 = vmatprep.subr.bf16.mxu0 0
        %1045 = vmatpush1.bf16.msra.mxu0 %v1042
        %1046 = vmatprep.subr.bf16.mxu0 0
        %1047 = vmatpush1.bf16.msra.mxu0 0
        %1048 = vmatprep.subr.bf16.mxu0 0
        %1049 = vmatpush1.bf16.msra.mxu0 0
        %1050 = vmatprep.subr.bf16.mxu0 0
        %1051 = vmatpush1.bf16.msra.mxu0 0
        %1052 = vmatprep.subr.bf16.mxu0 0
        %1053 = vmatpush1.bf16.msra.mxu0 0
        %1054 = vmatprep.subr.bf16.mxu0 0
        %1055 = vmatpush1.bf16.msra.mxu0 0
        %1056 = vmatprep.subr.bf16.mxu0 0
        %1057 = vmatpush1.bf16.msra.mxu0 0
        %1058 = vmatprep.subr.bf16.mxu0 0
        %1059 = vmatpush1.bf16.msra.mxu0 0
        %1060 = vmatprep.subr.bf16.mxu0 0
        %1061 = vmatpush1.bf16.msra.mxu0 0
        %1062 = vmatprep.subr.bf16.mxu0 0
        %1063 = vmatpush1.bf16.msra.mxu0 0
        %1064 = vmatprep.subr.bf16.mxu0 0
        %1065 = vmatpush1.bf16.msra.mxu0 0
        %1066 = vmatprep.subr.bf16.mxu0 0
        %1067 = vmatpush1.bf16.msra.mxu0 0
        %1068 = vmatprep.subr.bf16.mxu0 0
        %1069 = vmatpush1.bf16.msra.mxu0 0
        %1070 = vmatprep.subr.bf16.mxu0 0
        %1071 = vmatpush1.bf16.msra.mxu0 0
        %1072 = vmatprep.subr.bf16.mxu0 0
        %1073 = vmatpush1.bf16.msra.mxu0 0
        %1074 = vmatprep.subr.bf16.mxu0 0
        %1075 = vmatpush1.bf16.msra.mxu0 0
        %1076 = vmatprep.mubr.bf16.mxu0 0
        %1077 = vmatmul.mubr.bf16.gmra.mrb[0].mxu0 %v1039
        %v1078 = vpop.f32.mrb[0].mxu0
        %v1079 = vadd.f32 0.0, %v1078
        %v1080 = vpop.f32.mrb[0].mxu0
        %v1081 = vpop.f32.mrb[0].mxu0
        %v1082 = vpop.f32.mrb[0].mxu0
        %1083 = vdwg.mxu0
        %1084 = vrot.lane.b32.xlu0 %v740, 104
        %v1085 = vpop.permute.xlu0 %1084
        %1086 = vrot.lane.b32.xlu0 %v740, 72
        %v1087 = vpop.permute.xlu0 %1086
        %v1089 = vsel %vm744, %v1085, 0
        %v1092 = vsel %vm744, %v1087, 0
        %1094 = vmatprep.subr.bf16.mxu0 0
        %1095 = vmatpush1.bf16.xpose.msra.mxu0 %v1092
        %1096 = vmatprep.subr.bf16.mxu0 0
        %1097 = vmatpush1.bf16.xpose.msra.mxu0 0
        %1098 = vmatprep.subr.bf16.mxu0 0
        %1099 = vmatpush1.bf16.xpose.msra.mxu0 0
        %1100 = vmatprep.subr.bf16.mxu0 0
        %1101 = vmatpush1.bf16.xpose.msra.mxu0 0
        %1102 = vmatprep.subr.bf16.mxu0 0
        %1103 = vmatpush1.bf16.xpose.msra.mxu0 0
        %1104 = vmatprep.subr.bf16.mxu0 0
        %1105 = vmatpush1.bf16.xpose.msra.mxu0 0
        %1106 = vmatprep.subr.bf16.mxu0 0
        %1107 = vmatpush1.bf16.xpose.msra.mxu0 0
        %1108 = vmatprep.subr.bf16.mxu0 0
        %1109 = vmatpush1.bf16.xpose.msra.mxu0 0
        %1110 = vmatprep.subr.bf16.mxu0 0
        %1111 = vmatpush1.bf16.xpose.msra.mxu0 0
        %1112 = vmatprep.subr.bf16.mxu0 0
        %1113 = vmatpush1.bf16.xpose.msra.mxu0 0
        %1114 = vmatprep.subr.bf16.mxu0 0
        %1115 = vmatpush1.bf16.xpose.msra.mxu0 0
        %1116 = vmatprep.subr.bf16.mxu0 0
        %1117 = vmatpush1.bf16.xpose.msra.mxu0 0
        %1118 = vmatprep.subr.bf16.mxu0 0
        %1119 = vmatpush1.bf16.xpose.msra.mxu0 0
        %1120 = vmatprep.subr.bf16.mxu0 0
        %1121 = vmatpush1.bf16.xpose.msra.mxu0 0
        %1122 = vmatprep.subr.bf16.mxu0 0
        %1123 = vmatpush1.bf16.xpose.msra.mxu0 0
        %1124 = vmatprep.subr.bf16.mxu0 0
        %1125 = vmatpush1.bf16.xpose.msra.mxu0 0
        %1126 = vmatprep.mubr.bf16.mxu0 0
        %1127 = vmatmul.mubr.bf16.gmra.mrb[0].mxu0 %v1089
        %v1128 = vpop.f32.mrb[0].mxu0
        %v1129 = vadd.f32 0.0, %v1128
        %v1130 = vpop.f32.mrb[0].mxu0
        %v1131 = vpop.f32.mrb[0].mxu0
        %v1132 = vpop.f32.mrb[0].mxu0
        %1133 = vdwg.mxu0
        %v1134 = vmul.f32 %v1129, 0.35355338
        %v1135 = vadd.f32 %v1134, %v796
        %v1136 = vsel %vm744, %v1135, -inf
        %1137 = vmax.xlane.f32.xlu0 %v1136
        %v1138 = vpop.xlane.xlu0 %1137
        %v1139 = vsub.f32 %v1135, %v1138
        %v1140 = vmul.f32 %v1139, 1.442695
        %v1141 = vpow.pop %v1140
        %v1142 = vsel %vm744, %v1141, 0.0
        %1143 = vadd.xlane.f32.xlu0 %v1142
        %v1144 = vpop.xlane.xlu0 %1143
        %v1145 = vrcp.pop %v1144
        %v1146 = vmul.f32 %v1141, %v1145
        %v1147 = vpack.c.bf16 %v1146, %v1146
        %1148 = vrot.lane.b32.xlu0 %v740, 40
        %v1149 = vpop.permute.xlu0 %1148
        %v1151 = vsel %vm744, %v1147, 0
        %v1154 = vsel %vm816, %v1149, 0
        %1156 = vmatprep.subr.bf16.mxu0 0
        %1157 = vmatpush1.bf16.msra.mxu0 %v1154
        %1158 = vmatprep.subr.bf16.mxu0 0
        %1159 = vmatpush1.bf16.msra.mxu0 0
        %1160 = vmatprep.subr.bf16.mxu0 0
        %1161 = vmatpush1.bf16.msra.mxu0 0
        %1162 = vmatprep.subr.bf16.mxu0 0
        %1163 = vmatpush1.bf16.msra.mxu0 0
        %1164 = vmatprep.subr.bf16.mxu0 0
        %1165 = vmatpush1.bf16.msra.mxu0 0
        %1166 = vmatprep.subr.bf16.mxu0 0
        %1167 = vmatpush1.bf16.msra.mxu0 0
        %1168 = vmatprep.subr.bf16.mxu0 0
        %1169 = vmatpush1.bf16.msra.mxu0 0
        %1170 = vmatprep.subr.bf16.mxu0 0
        %1171 = vmatpush1.bf16.msra.mxu0 0
        %1172 = vmatprep.subr.bf16.mxu0 0
        %1173 = vmatpush1.bf16.msra.mxu0 0
        %1174 = vmatprep.subr.bf16.mxu0 0
        %1175 = vmatpush1.bf16.msra.mxu0 0
        %1176 = vmatprep.subr.bf16.mxu0 0
        %1177 = vmatpush1.bf16.msra.mxu0 0
        %1178 = vmatprep.subr.bf16.mxu0 0
        %1179 = vmatpush1.bf16.msra.mxu0 0
        %1180 = vmatprep.subr.bf16.mxu0 0
        %1181 = vmatpush1.bf16.msra.mxu0 0
        %1182 = vmatprep.subr.bf16.mxu0 0
        %1183 = vmatpush1.bf16.msra.mxu0 0
        %1184 = vmatprep.subr.bf16.mxu0 0
        %1185 = vmatpush1.bf16.msra.mxu0 0
        %1186 = vmatprep.subr.bf16.mxu0 0
        %1187 = vmatpush1.bf16.msra.mxu0 0
        %1188 = vmatprep.mubr.bf16.mxu0 0
        %1189 = vmatmul.mubr.bf16.gmra.mrb[0].mxu0 %v1151
        %v1190 = vpop.f32.mrb[0].mxu0
        %v1191 = vadd.f32 0.0, %v1190
        %v1192 = vpop.f32.mrb[0].mxu0
        %v1193 = vpop.f32.mrb[0].mxu0
        %v1194 = vpop.f32.mrb[0].mxu0
        %1195 = vdwg.mxu0
        %1197 = vrot.lane.b32.xlu0 %v967, 8
        %v1198 = vpop.permute.xlu0 %1197
        %1201 = vrot.lane.b32.xlu0 %v1079, 16
        %v1202 = vpop.permute.xlu0 %1201
        %1205 = vrot.lane.b32.xlu0 %v1191, 24
        %v1206 = vpop.permute.xlu0 %1205
        %v1208 = vsel %vm744, %v855, %v1198
        %vm1209 = vcmask 130048
        %v1210 = vsel %vm1209, %v1208, %v1202
        %vm1211 = vcmask 195584
        %v1212 = vsel %vm1211, %v1210, %v1206
        %v1213 = vpack.c.bf16 %v1212, %v1212
        %v1214 = vld [vmem:[%s6] sm:$0xf]
        %v1215 = vld [vmem:[%s6 + $0x4] sm:$0xf]
        %v1216 = vld [vmem:[%s6 + $0x8] sm:$0xf]
        %v1217 = vld [vmem:[%s6 + $0xc] sm:$0xf]
        %v1218 = vld [vmem:[%s7] sm:$0x1]
        %v1220 = vlaneseq
        %v1221 = vshrl.u32 %v1220, 7
        %v1222 = vsub.s32 0, %v1221
        %v1223 = vrot.slane %v1218, %v1222
        %v1229 = vunpack.c.l.b16 %v1214
        %v1230 = vunpack.c.l.b16 %v1215
        %v1231 = vunpack.c.l.b16 %v1216
        %v1232 = vunpack.c.l.b16 %v1217
        %v1233 = vpack.c.b16 %v1230, %v1229
        %v1234 = vpack.c.b16 %v1232, %v1231
        %v1238 = vsel %vm644, %v1213, 0
        %1240 = vmatprep.subr.bf16.mxu0 0
        %1241 = vmatpush1.bf16.msra.mxu0 %v1233
        %1242 = vmatprep.subr.bf16.mxu0 0
        %1243 = vmatpush1.bf16.msra.mxu0 %v1234
        %1244 = vmatprep.subr.bf16.mxu0 0
        %1245 = vmatpush1.bf16.msra.mxu0 0
        %1246 = vmatprep.subr.bf16.mxu0 0
        %1247 = vmatpush1.bf16.msra.mxu0 0
        %1248 = vmatprep.subr.bf16.mxu0 0
        %1249 = vmatpush1.bf16.msra.mxu0 0
        %1250 = vmatprep.subr.bf16.mxu0 0
        %1251 = vmatpush1.bf16.msra.mxu0 0
        %1252 = vmatprep.subr.bf16.mxu0 0
        %1253 = vmatpush1.bf16.msra.mxu0 0
        %1254 = vmatprep.subr.bf16.mxu0 0
        %1255 = vmatpush1.bf16.msra.mxu0 0
        %1256 = vmatprep.subr.bf16.mxu0 0
        %1257 = vmatpush1.bf16.msra.mxu0 0
        %1258 = vmatprep.subr.bf16.mxu0 0
        %1259 = vmatpush1.bf16.msra.mxu0 0
        %1260 = vmatprep.subr.bf16.mxu0 0
        %1261 = vmatpush1.bf16.msra.mxu0 0
        %1262 = vmatprep.subr.bf16.mxu0 0
        %1263 = vmatpush1.bf16.msra.mxu0 0
        %1264 = vmatprep.subr.bf16.mxu0 0
        %1265 = vmatpush1.bf16.msra.mxu0 0
        %1266 = vmatprep.subr.bf16.mxu0 0
        %1267 = vmatpush1.bf16.msra.mxu0 0
        %1268 = vmatprep.subr.bf16.mxu0 0
        %1269 = vmatpush1.bf16.msra.mxu0 0
        %1270 = vmatprep.subr.bf16.mxu0 0
        %1271 = vmatpush1.bf16.msra.mxu0 0
        %1272 = vmatprep.mubr.bf16.mxu0 0
        %1273 = vmatmul.mubr.bf16.gmra.mrb[0].mxu0 %v1238
        %v1274 = vpop.f32.mrb[0].mxu0
        %v1275 = vadd.f32 %v1223, %v1274
        %v1276 = vpop.f32.mrb[0].mxu0
        %v1277 = vpop.f32.mrb[0].mxu0
        %v1278 = vpop.f32.mrb[0].mxu0
        %1279 = vdwg.mxu0
        %v1280 = vadd.f32 %v1275, %v672
        %v1281 = vld [vmem:[%s8] sm:$0x1]
        %v1282 = vld [vmem:[%s9] sm:$0x1]
        %v1283 = vsel %vm644, %v1280, 0.0
        %1284 = vadd.xlane.f32.xlu0 %v1283
        %v1285 = vpop.xlane.xlu0 %1284
        %v1286 = vmul.f32 %v1285, %v648
        %v1287 = vsub.f32 %v1280, %v1286
        %v1288 = vmul.f32 %v1287, %v1287
        %v1289 = vsel %vm644, %v1288, 0.0
        %1290 = vadd.xlane.f32.xlu0 %v1289
        %v1291 = vpop.xlane.xlu0 %1290
        %v1292 = vmul.f32 %v1291, %v648
        %v1293 = vadd.f32 %v1292, 1e-12
        %v1294 = vrsqrt.pop %v1293
        %v1295 = vmul.f32 %v1287, %v1294
        %v1297 = vlaneseq
        %v1298 = vshrl.u32 %v1297, 7
        %v1299 = vsub.s32 0, %v1298
        %v1300 = vrot.slane %v1281, %v1299
        %v1302 = vmul.f32 %v1295, %v1300
        %v1304 = vlaneseq
        %v1305 = vshrl.u32 %v1304, 7
        %v1306 = vsub.s32 0, %v1305
        %v1307 = vrot.slane %v1282, %v1306
        %v1309 = vadd.f32 %v1302, %v1307
        %v1310 = vpack.c.bf16 %v1309, %v1309
        %v1311 = vld [vmem:[%s10] sm:$0xf]
        %v1312 = vld [vmem:[%s10 + $0x4] sm:$0xf]
        %v1313 = vld [vmem:[%s10 + $0x8] sm:$0xf]
        %v1314 = vld [vmem:[%s10 + $0xc] sm:$0xf]
        %v1315 = vld [vmem:[%s11] sm:$0x1]
        %v1317 = vlaneseq
        %v1318 = vshrl.u32 %v1317, 7
        %v1319 = vsub.s32 0, %v1318
        %v1320 = vrot.slane %v1315, %v1319
        %v1326 = vunpack.c.l.b16 %v1311
        %v1327 = vunpack.c.l.b16 %v1312
        %v1328 = vunpack.c.l.b16 %v1313
        %v1329 = vunpack.c.l.b16 %v1314
        %v1330 = vpack.c.b16 %v1327, %v1326
        %v1331 = vpack.c.b16 %v1329, %v1328
        %v1335 = vsel %vm644, %v1310, 0
        %1337 = vmatprep.subr.bf16.mxu0 0
        %1338 = vmatpush1.bf16.msra.mxu0 %v1330
        %1339 = vmatprep.subr.bf16.mxu0 0
        %1340 = vmatpush1.bf16.msra.mxu0 %v1331
        %1341 = vmatprep.subr.bf16.mxu0 0
        %1342 = vmatpush1.bf16.msra.mxu0 0
        %1343 = vmatprep.subr.bf16.mxu0 0
        %1344 = vmatpush1.bf16.msra.mxu0 0
        %1345 = vmatprep.subr.bf16.mxu0 0
        %1346 = vmatpush1.bf16.msra.mxu0 0
        %1347 = vmatprep.subr.bf16.mxu0 0
        %1348 = vmatpush1.bf16.msra.mxu0 0
        %1349 = vmatprep.subr.bf16.mxu0 0
        %1350 = vmatpush1.bf16.msra.mxu0 0
        %1351 = vmatprep.subr.bf16.mxu0 0
        %1352 = vmatpush1.bf16.msra.mxu0 0
        %1353 = vmatprep.subr.bf16.mxu0 0
        %1354 = vmatpush1.bf16.msra.mxu0 0
        %1355 = vmatprep.subr.bf16.mxu0 0
        %1356 = vmatpush1.bf16.msra.mxu0 0
        %1357 = vmatprep.subr.bf16.mxu0 0
        %1358 = vmatpush1.bf16.msra.mxu0 0
        %1359 = vmatprep.subr.bf16.mxu0 0
        %1360 = vmatpush1.bf16.msra.mxu0 0
        %1361 = vmatprep.subr.bf16.mxu0 0
        %1362 = vmatpush1.bf16.msra.mxu0 0
        %1363 = vmatprep.subr.bf16.mxu0 0
        %1364 = vmatpush1.bf16.msra.mxu0 0
        %1365 = vmatprep.subr.bf16.mxu0 0
        %1366 = vmatpush1.bf16.msra.mxu0 0
        %1367 = vmatprep.subr.bf16.mxu0 0
        %1368 = vmatpush1.bf16.msra.mxu0 0
        %1369 = vmatprep.mubr.bf16.mxu0 0
        %1370 = vmatmul.mubr.bf16.gmra.mrb[0].mxu0 %v1335
        %v1371 = vpop.f32.mrb[0].mxu0
        %v1372 = vadd.f32 %v1320, %v1371
        %v1373 = vpop.f32.mrb[0].mxu0
        %v1374 = vpop.f32.mrb[0].mxu0
        %v1375 = vpop.f32.mrb[0].mxu0
        %1376 = vdwg.mxu0
        %v1377 = vmul.f32 %v1372, 0.5
        %v1378 = vmul.f32 %v1372, 0.044715
        %v1379 = vmul.f32 %v1378, %v1372
        %v1380 = vmul.f32 %v1379, %v1372
        %v1381 = vadd.f32 %v1372, %v1380
        %v1382 = vmul.f32 %v1381, 0.7978846
        %v1383 = vtanh.pop %v1382
        %v1384 = vadd.f32 %v1383, 1.0
        %v1385 = vmul.f32 %v1377, %v1384
        %v1386 = vpack.c.bf16 %v1385, %v1385
        %v1387 = vld [vmem:[%s12] sm:$0xf]
        %v1388 = vld [vmem:[%s12 + $0x4] sm:$0xf]
        %v1389 = vld [vmem:[%s12 + $0x8] sm:$0xf]
        %v1390 = vld [vmem:[%s12 + $0xc] sm:$0xf]
        %v1391 = vld [vmem:[%s12 + $0x10] sm:$0xf]
        %v1392 = vld [vmem:[%s12 + $0x14] sm:$0xf]
        %v1393 = vld [vmem:[%s12 + $0x18] sm:$0xf]
        %v1394 = vld [vmem:[%s12 + $0x1c] sm:$0xf]
        %v1395 = vld [vmem:[%s13] sm:$0x1]
        %v1397 = vlaneseq
        %v1398 = vshrl.u32 %v1397, 7
        %v1399 = vsub.s32 0, %v1398
        %v1400 = vrot.slane %v1395, %v1399
        %v1410 = vunpack.c.l.b16 %v1387
        %v1411 = vunpack.c.l.b16 %v1388
        %v1412 = vunpack.c.l.b16 %v1389
        %v1413 = vunpack.c.l.b16 %v1390
        %v1414 = vunpack.c.l.b16 %v1391
        %v1415 = vunpack.c.l.b16 %v1392
        %v1416 = vunpack.c.l.b16 %v1393
        %v1417 = vunpack.c.l.b16 %v1394
        %v1418 = vpack.c.b16 %v1411, %v1410
        %v1419 = vpack.c.b16 %v1413, %v1412
        %v1420 = vpack.c.b16 %v1415, %v1414
        %v1421 = vpack.c.b16 %v1417, %v1416
        %vm1426 = vcmask 523264
        %v1428 = vsel %vm1426, %v1386, 0
        %1430 = vmatprep.subr.bf16.mxu0 0
        %1431 = vmatpush1.bf16.msra.mxu0 %v1418
        %1432 = vmatprep.subr.bf16.mxu0 0
        %1433 = vmatpush1.bf16.msra.mxu0 %v1419
        %1434 = vmatprep.subr.bf16.mxu0 0
        %1435 = vmatpush1.bf16.msra.mxu0 %v1420
        %1436 = vmatprep.subr.bf16.mxu0 0
        %1437 = vmatpush1.bf16.msra.mxu0 %v1421
        %1438 = vmatprep.subr.bf16.mxu0 0
        %1439 = vmatpush1.bf16.msra.mxu0 0
        %1440 = vmatprep.subr.bf16.mxu0 0
        %1441 = vmatpush1.bf16.msra.mxu0 0
        %1442 = vmatprep.subr.bf16.mxu0 0
        %1443 = vmatpush1.bf16.msra.mxu0 0
        %1444 = vmatprep.subr.bf16.mxu0 0
        %1445 = vmatpush1.bf16.msra.mxu0 0
        %1446 = vmatprep.subr.bf16.mxu0 0
        %1447 = vmatpush1.bf16.msra.mxu0 0
        %1448 = vmatprep.subr.bf16.mxu0 0
        %1449 = vmatpush1.bf16.msra.mxu0 0
        %1450 = vmatprep.subr.bf16.mxu0 0
        %1451 = vmatpush1.bf16.msra.mxu0 0
        %1452 = vmatprep.subr.bf16.mxu0 0
        %1453 = vmatpush1.bf16.msra.mxu0 0
        %1454 = vmatprep.subr.bf16.mxu0 0
        %1455 = vmatpush1.bf16.msra.mxu0 0
        %1456 = vmatprep.subr.bf16.mxu0 0
        %1457 = vmatpush1.bf16.msra.mxu0 0
        %1458 = vmatprep.subr.bf16.mxu0 0
        %1459 = vmatpush1.bf16.msra.mxu0 0
        %1460 = vmatprep.subr.bf16.mxu0 0
        %1461 = vmatpush1.bf16.msra.mxu0 0
        %1462 = vmatprep.mubr.bf16.mxu0 0
        %1463 = vmatmul.mubr.bf16.gmra.mrb[0].mxu0 %v1428
        %v1464 = vpop.f32.mrb[0].mxu0
        %v1465 = vadd.f32 %v1400, %v1464
        %v1466 = vpop.f32.mrb[0].mxu0
        %v1467 = vpop.f32.mrb[0].mxu0
        %v1468 = vpop.f32.mrb[0].mxu0
        %1469 = vdwg.mxu0
        %v1470 = vadd.f32 %v1465, %v1309
        %v1471 = vld [vmem:[%s14] sm:$0x1]
        %v1472 = vld [vmem:[%s15] sm:$0x1]
        %v1473 = vsel %vm644, %v1470, 0.0
        %1474 = vadd.xlane.f32.xlu0 %v1473
        %v1475 = vpop.xlane.xlu0 %1474
        %v1476 = vmul.f32 %v1475, %v648
        %v1477 = vsub.f32 %v1470, %v1476
        %v1478 = vmul.f32 %v1477, %v1477
        %v1479 = vsel %vm644, %v1478, 0.0
        %1480 = vadd.xlane.f32.xlu0 %v1479
        %v1481 = vpop.xlane.xlu0 %1480
        %v1482 = vmul.f32 %v1481, %v648
        %v1483 = vadd.f32 %v1482, 1e-12
        %v1484 = vrsqrt.pop %v1483
        %v1485 = vmul.f32 %v1477, %v1484
        %v1487 = vlaneseq
        %v1488 = vshrl.u32 %v1487, 7
        %v1489 = vsub.s32 0, %v1488
        %v1490 = vrot.slane %v1471, %v1489
        %v1492 = vmul.f32 %v1485, %v1490
        %v1494 = vlaneseq
        %v1495 = vshrl.u32 %v1494, 7
        %v1496 = vsub.s32 0, %v1495
        %v1497 = vrot.slane %v1472, %v1496
        %v1499 = vadd.f32 %v1492, %v1497
        %v1500 = vpack.c.bf16 %v1499, %v1499
        %s1501 = scalar_lea.vmem %s4, 16
        %v1502 = vld [vmem:[%s1501] sm:$0xf]
        %v1503 = vld [vmem:[%s1501 + $0x4] sm:$0xf]
        %v1504 = vld [vmem:[%s1501 + $0x8] sm:$0xf]
        %v1505 = vld [vmem:[%s1501 + $0xc] sm:$0xf]
        %s1506 = scalar_lea.vmem %s5, 1
        %v1507 = vld [vmem:[%s1506] sm:$0x1]
        %v1509 = vlaneseq
        %v1510 = vshrl.u32 %v1509, 7
        %v1511 = vsub.s32 0, %v1510
        %v1512 = vrot.slane %v1507, %v1511
        %v1518 = vunpack.c.l.b16 %v1502
        %v1519 = vunpack.c.l.b16 %v1503
        %v1520 = vunpack.c.l.b16 %v1504
        %v1521 = vunpack.c.l.b16 %v1505
        %v1522 = vpack.c.b16 %v1519, %v1518
        %v1523 = vpack.c.b16 %v1521, %v1520
        %v1527 = vsel %vm644, %v1500, 0
        %1529 = vmatprep.subr.bf16.mxu0 0
        %1530 = vmatpush1.bf16.msra.mxu0 %v1522
        %1531 = vmatprep.subr.bf16.mxu0 0
        %1532 = vmatpush1.bf16.msra.mxu0 %v1523
        %1533 = vmatprep.subr.bf16.mxu0 0
        %1534 = vmatpush1.bf16.msra.mxu0 0
        %1535 = vmatprep.subr.bf16.mxu0 0
        %1536 = vmatpush1.bf16.msra.mxu0 0
        %1537 = vmatprep.subr.bf16.mxu0 0
        %1538 = vmatpush1.bf16.msra.mxu0 0
        %1539 = vmatprep.subr.bf16.mxu0 0
        %1540 = vmatpush1.bf16.msra.mxu0 0
        %1541 = vmatprep.subr.bf16.mxu0 0
        %1542 = vmatpush1.bf16.msra.mxu0 0
        %1543 = vmatprep.subr.bf16.mxu0 0
        %1544 = vmatpush1.bf16.msra.mxu0 0
        %1545 = vmatprep.subr.bf16.mxu0 0
        %1546 = vmatpush1.bf16.msra.mxu0 0
        %1547 = vmatprep.subr.bf16.mxu0 0
        %1548 = vmatpush1.bf16.msra.mxu0 0
        %1549 = vmatprep.subr.bf16.mxu0 0
        %1550 = vmatpush1.bf16.msra.mxu0 0
        %1551 = vmatprep.subr.bf16.mxu0 0
        %1552 = vmatpush1.bf16.msra.mxu0 0
        %1553 = vmatprep.subr.bf16.mxu0 0
        %1554 = vmatpush1.bf16.msra.mxu0 0
        %1555 = vmatprep.subr.bf16.mxu0 0
        %1556 = vmatpush1.bf16.msra.mxu0 0
        %1557 = vmatprep.subr.bf16.mxu0 0
        %1558 = vmatpush1.bf16.msra.mxu0 0
        %1559 = vmatprep.subr.bf16.mxu0 0
        %1560 = vmatpush1.bf16.msra.mxu0 0
        %1561 = vmatprep.mubr.bf16.mxu0 0
        %1562 = vmatmul.mubr.bf16.gmra.mrb[0].mxu0 %v1527
        %v1563 = vpop.f32.mrb[0].mxu0
        %v1564 = vadd.f32 %v1512, %v1563
        %v1565 = vpop.f32.mrb[0].mxu0
        %v1566 = vpop.f32.mrb[0].mxu0
        %v1567 = vpop.f32.mrb[0].mxu0
        %1568 = vdwg.mxu0
        %v1569 = vpack.c.bf16 %v1564, %v1564
        %1571 = vrot.lane.b32.xlu0 %v1569, 96
        %v1572 = vpop.permute.xlu0 %1571
        %v1574 = vsel %vm744, %v1569, 0
        %v1577 = vsel %vm744, %v1572, 0
        %1579 = vmatprep.subr.bf16.mxu0 0
        %1580 = vmatpush1.bf16.xpose.msra.mxu0 %v1577
        %1581 = vmatprep.subr.bf16.mxu0 0
        %1582 = vmatpush1.bf16.xpose.msra.mxu0 0
        %1583 = vmatprep.subr.bf16.mxu0 0
        %1584 = vmatpush1.bf16.xpose.msra.mxu0 0
        %1585 = vmatprep.subr.bf16.mxu0 0
        %1586 = vmatpush1.bf16.xpose.msra.mxu0 0
        %1587 = vmatprep.subr.bf16.mxu0 0
        %1588 = vmatpush1.bf16.xpose.msra.mxu0 0
        %1589 = vmatprep.subr.bf16.mxu0 0
        %1590 = vmatpush1.bf16.xpose.msra.mxu0 0
        %1591 = vmatprep.subr.bf16.mxu0 0
        %1592 = vmatpush1.bf16.xpose.msra.mxu0 0
        %1593 = vmatprep.subr.bf16.mxu0 0
        %1594 = vmatpush1.bf16.xpose.msra.mxu0 0
        %1595 = vmatprep.subr.bf16.mxu0 0
        %1596 = vmatpush1.bf16.xpose.msra.mxu0 0
        %1597 = vmatprep.subr.bf16.mxu0 0
        %1598 = vmatpush1.bf16.xpose.msra.mxu0 0
        %1599 = vmatprep.subr.bf16.mxu0 0
        %1600 = vmatpush1.bf16.xpose.msra.mxu0 0
        %1601 = vmatprep.subr.bf16.mxu0 0
        %1602 = vmatpush1.bf16.xpose.msra.mxu0 0
        %1603 = vmatprep.subr.bf16.mxu0 0
        %1604 = vmatpush1.bf16.xpose.msra.mxu0 0
        %1605 = vmatprep.subr.bf16.mxu0 0
        %1606 = vmatpush1.bf16.xpose.msra.mxu0 0
        %1607 = vmatprep.subr.bf16.mxu0 0
        %1608 = vmatpush1.bf16.xpose.msra.mxu0 0
        %1609 = vmatprep.subr.bf16.mxu0 0
        %1610 = vmatpush1.bf16.xpose.msra.mxu0 0
        %1611 = vmatprep.mubr.bf16.mxu0 0
        %1612 = vmatmul.mubr.bf16.gmra.mrb[0].mxu0 %v1574
        %v1613 = vpop.f32.mrb[0].mxu0
        %v1614 = vadd.f32 0.0, %v1613
        %v1615 = vpop.f32.mrb[0].mxu0
        %v1616 = vpop.f32.mrb[0].mxu0
        %v1617 = vpop.f32.mrb[0].mxu0
        %1618 = vdwg.mxu0
        %v1619 = vmul.f32 %v1614, 0.35355338
        %v1620 = vadd.f32 %v1619, %v796
        %v1621 = vsel %vm744, %v1620, -inf
        %1622 = vmax.xlane.f32.xlu0 %v1621
        %v1623 = vpop.xlane.xlu0 %1622
        %v1624 = vsub.f32 %v1620, %v1623
        %v1625 = vmul.f32 %v1624, 1.442695
        %v1626 = vpow.pop %v1625
        %v1627 = vsel %vm744, %v1626, 0.0
        %1628 = vadd.xlane.f32.xlu0 %v1627
        %v1629 = vpop.xlane.xlu0 %1628
        %v1630 = vrcp.pop %v1629
        %v1631 = vmul.f32 %v1626, %v1630
        %v1632 = vpack.c.bf16 %v1631, %v1631
        %1633 = vrot.lane.b32.xlu0 %v1569, 64
        %v1634 = vpop.permute.xlu0 %1633
        %v1636 = vsel %vm744, %v1632, 0
        %v1639 = vsel %vm816, %v1634, 0
        %1641 = vmatprep.subr.bf16.mxu0 0
        %1642 = vmatpush1.bf16.msra.mxu0 %v1639
        %1643 = vmatprep.subr.bf16.mxu0 0
        %1644 = vmatpush1.bf16.msra.mxu0 0
        %1645 = vmatprep.subr.bf16.mxu0 0
        %1646 = vmatpush1.bf16.msra.mxu0 0
        %1647 = vmatprep.subr.bf16.mxu0 0
        %1648 = vmatpush1.bf16.msra.mxu0 0
        %1649 = vmatprep.subr.bf16.mxu0 0
        %1650 = vmatpush1.bf16.msra.mxu0 0
        %1651 = vmatprep.subr.bf16.mxu0 0
        %1652 = vmatpush1.bf16.msra.mxu0 0
        %1653 = vmatprep.subr.bf16.mxu0 0
        %1654 = vmatpush1.bf16.msra.mxu0 0
        %1655 = vmatprep.subr.bf16.mxu0 0
        %1656 = vmatpush1.bf16.msra.mxu0 0
        %1657 = vmatprep.subr.bf16.mxu0 0
        %1658 = vmatpush1.bf16.msra.mxu0 0
        %1659 = vmatprep.subr.bf16.mxu0 0
        %1660 = vmatpush1.bf16.msra.mxu0 0
        %1661 = vmatprep.subr.bf16.mxu0 0
        %1662 = vmatpush1.bf16.msra.mxu0 0
        %1663 = vmatprep.subr.bf16.mxu0 0
        %1664 = vmatpush1.bf16.msra.mxu0 0
        %1665 = vmatprep.subr.bf16.mxu0 0
        %1666 = vmatpush1.bf16.msra.mxu0 0
        %1667 = vmatprep.subr.bf16.mxu0 0
        %1668 = vmatpush1.bf16.msra.mxu0 0
        %1669 = vmatprep.subr.bf16.mxu0 0
        %1670 = vmatpush1.bf16.msra.mxu0 0
        %1671 = vmatprep.subr.bf16.mxu0 0
        %1672 = vmatpush1.bf16.msra.mxu0 0
        %1673 = vmatprep.mubr.bf16.mxu0 0
        %1674 = vmatmul.mubr.bf16.gmra.mrb[0].mxu0 %v1636
        %v1675 = vpop.f32.mrb[0].mxu0
        %v1676 = vadd.f32 0.0, %v1675
        %v1677 = vpop.f32.mrb[0].mxu0
        %v1678 = vpop.f32.mrb[0].mxu0
        %v1679 = vpop.f32.mrb[0].mxu0
        %1680 = vdwg.mxu0
        %1681 = vrot.lane.b32.xlu0 %v1569, 120
        %v1682 = vpop.permute.xlu0 %1681
        %1683 = vrot.lane.b32.xlu0 %v1569, 88
        %v1684 = vpop.permute.xlu0 %1683
        %v1686 = vsel %vm744, %v1682, 0
        %v1689 = vsel %vm744, %v1684, 0
        %1691 = vmatprep.subr.bf16.mxu0 0
        %1692 = vmatpush1.bf16.xpose.msra.mxu0 %v1689
        %1693 = vmatprep.subr.bf16.mxu0 0
        %1694 = vmatpush1.bf16.xpose.msra.mxu0 0
        %1695 = vmatprep.subr.bf16.mxu0 0
        %1696 = vmatpush1.bf16.xpose.msra.mxu0 0
        %1697 = vmatprep.subr.bf16.mxu0 0
        %1698 = vmatpush1.bf16.xpose.msra.mxu0 0
        %1699 = vmatprep.subr.bf16.mxu0 0
        %1700 = vmatpush1.bf16.xpose.msra.mxu0 0
        %1701 = vmatprep.subr.bf16.mxu0 0
        %1702 = vmatpush1.bf16.xpose.msra.mxu0 0
        %1703 = vmatprep.subr.bf16.mxu0 0
        %1704 = vmatpush1.bf16.xpose.msra.mxu0 0
        %1705 = vmatprep.subr.bf16.mxu0 0
        %1706 = vmatpush1.bf16.xpose.msra.mxu0 0
        %1707 = vmatprep.subr.bf16.mxu0 0
        %1708 = vmatpush1.bf16.xpose.msra.mxu0 0
        %1709 = vmatprep.subr.bf16.mxu0 0
        %1710 = vmatpush1.bf16.xpose.msra.mxu0 0
        %1711 = vmatprep.subr.bf16.mxu0 0
        %1712 = vmatpush1.bf16.xpose.msra.mxu0 0
        %1713 = vmatprep.subr.bf16.mxu0 0
        %1714 = vmatpush1.bf16.xpose.msra.mxu0 0
        %1715 = vmatprep.subr.bf16.mxu0 0
        %1716 = vmatpush1.bf16.xpose.msra.mxu0 0
        %1717 = vmatprep.subr.bf16.mxu0 0
        %1718 = vmatpush1.bf16.xpose.msra.mxu0 0
        %1719 = vmatprep.subr.bf16.mxu0 0
        %1720 = vmatpush1.bf16.xpose.msra.mxu0 0
        %1721 = vmatprep.subr.bf16.mxu0 0
        %1722 = vmatpush1.bf16.xpose.msra.mxu0 0
        %1723 = vmatprep.mubr.bf16.mxu0 0
        %1724 = vmatmul.mubr.bf16.gmra.mrb[0].mxu0 %v1686
        %v1725 = vpop.f32.mrb[0].mxu0
        %v1726 = vadd.f32 0.0, %v1725
        %v1727 = vpop.f32.mrb[0].mxu0
        %v1728 = vpop.f32.mrb[0].mxu0
        %v1729 = vpop.f32.mrb[0].mxu0
        %1730 = vdwg.mxu0
        %v1731 = vmul.f32 %v1726, 0.35355338
        %v1732 = vadd.f32 %v1731, %v796
        %v1733 = vsel %vm744, %v1732, -inf
        %1734 = vmax.xlane.f32.xlu0 %v1733
        %v1735 = vpop.xlane.xlu0 %1734
        %v1736 = vsub.f32 %v1732, %v1735
        %v1737 = vmul.f32 %v1736, 1.442695
        %v1738 = vpow.pop %v1737
        %v1739 = vsel %vm744, %v1738, 0.0
        %1740 = vadd.xlane.f32.xlu0 %v1739
        %v1741 = vpop.xlane.xlu0 %1740
        %v1742 = vrcp.pop %v1741
        %v1743 = vmul.f32 %v1738, %v1742
        %v1744 = vpack.c.bf16 %v1743, %v1743
        %1745 = vrot.lane.b32.xlu0 %v1569, 56
        %v1746 = vpop.permute.xlu0 %1745
        %v1748 = vsel %vm744, %v1744, 0
        %v1751 = vsel %vm816, %v1746, 0
        %1753 = vmatprep.subr.bf16.mxu0 0
        %1754 = vmatpush1.bf16.msra.mxu0 %v1751
        %1755 = vmatprep.subr.bf16.mxu0 0
        %1756 = vmatpush1.bf16.msra.mxu0 0
        %1757 = vmatprep.subr.bf16.mxu0 0
        %1758 = vmatpush1.bf16.msra.mxu0 0
        %1759 = vmatprep.subr.bf16.mxu0 0
        %1760 = vmatpush1.bf16.msra.mxu0 0
        %1761 = vmatprep.subr.bf16.mxu0 0
        %1762 = vmatpush1.bf16.msra.mxu0 0
        %1763 = vmatprep.subr.bf16.mxu0 0
        %1764 = vmatpush1.bf16.msra.mxu0 0
        %1765 = vmatprep.subr.bf16.mxu0 0
        %1766 = vmatpush1.bf16.msra.mxu0 0
        %1767 = vmatprep.subr.bf16.mxu0 0
        %1768 = vmatpush1.bf16.msra.mxu0 0
        %1769 = vmatprep.subr.bf16.mxu0 0
        %1770 = vmatpush1.bf16.msra.mxu0 0
        %1771 = vmatprep.subr.bf16.mxu0 0
        %1772 = vmatpush1.bf16.msra.mxu0 0
        %1773 = vmatprep.subr.bf16.mxu0 0
        %1774 = vmatpush1.bf16.msra.mxu0 0
        %1775 = vmatprep.subr.bf16.mxu0 0
        %1776 = vmatpush1.bf16.msra.mxu0 0
        %1777 = vmatprep.subr.bf16.mxu0 0
        %1778 = vmatpush1.bf16.msra.mxu0 0
        %1779 = vmatprep.subr.bf16.mxu0 0
        %1780 = vmatpush1.bf16.msra.mxu0 0
        %1781 = vmatprep.subr.bf16.mxu0 0
        %1782 = vmatpush1.bf16.msra.mxu0 0
        %1783 = vmatprep.subr.bf16.mxu0 0
        %1784 = vmatpush1.bf16.msra.mxu0 0
        %1785 = vmatprep.mubr.bf16.mxu0 0
        %1786 = vmatmul.mubr.bf16.gmra.mrb[0].mxu0 %v1748
        %v1787 = vpop.f32.mrb[0].mxu0
        %v1788 = vadd.f32 0.0, %v1787
        %v1789 = vpop.f32.mrb[0].mxu0
        %v1790 = vpop.f32.mrb[0].mxu0
        %v1791 = vpop.f32.mrb[0].mxu0
        %1792 = vdwg.mxu0
        %1793 = vrot.lane.b32.xlu0 %v1569, 112
        %v1794 = vpop.permute.xlu0 %1793
        %1795 = vrot.lane.b32.xlu0 %v1569, 80
        %v1796 = vpop.permute.xlu0 %1795
        %v1798 = vsel %vm744, %v1794, 0
        %v1801 = vsel %vm744, %v1796, 0
        %1803 = vmatprep.subr.bf16.mxu0 0
        %1804 = vmatpush1.bf16.xpose.msra.mxu0 %v1801
        %1805 = vmatprep.subr.bf16.mxu0 0
        %1806 = vmatpush1.bf16.xpose.msra.mxu0 0
        %1807 = vmatprep.subr.bf16.mxu0 0
        %1808 = vmatpush1.bf16.xpose.msra.mxu0 0
        %1809 = vmatprep.subr.bf16.mxu0 0
        %1810 = vmatpush1.bf16.xpose.msra.mxu0 0
        %1811 = vmatprep.subr.bf16.mxu0 0
        %1812 = vmatpush1.bf16.xpose.msra.mxu0 0
        %1813 = vmatprep.subr.bf16.mxu0 0
        %1814 = vmatpush1.bf16.xpose.msra.mxu0 0
        %1815 = vmatprep.subr.bf16.mxu0 0
        %1816 = vmatpush1.bf16.xpose.msra.mxu0 0
        %1817 = vmatprep.subr.bf16.mxu0 0
        %1818 = vmatpush1.bf16.xpose.msra.mxu0 0
        %1819 = vmatprep.subr.bf16.mxu0 0
        %1820 = vmatpush1.bf16.xpose.msra.mxu0 0
        %1821 = vmatprep.subr.bf16.mxu0 0
        %1822 = vmatpush1.bf16.xpose.msra.mxu0 0
        %1823 = vmatprep.subr.bf16.mxu0 0
        %1824 = vmatpush1.bf16.xpose.msra.mxu0 0
        %1825 = vmatprep.subr.bf16.mxu0 0
        %1826 = vmatpush1.bf16.xpose.msra.mxu0 0
        %1827 = vmatprep.subr.bf16.mxu0 0
        %1828 = vmatpush1.bf16.xpose.msra.mxu0 0
        %1829 = vmatprep.subr.bf16.mxu0 0
        %1830 = vmatpush1.bf16.xpose.msra.mxu0 0
        %1831 = vmatprep.subr.bf16.mxu0 0
        %1832 = vmatpush1.bf16.xpose.msra.mxu0 0
        %1833 = vmatprep.subr.bf16.mxu0 0
        %1834 = vmatpush1.bf16.xpose.msra.mxu0 0
        %1835 = vmatprep.mubr.bf16.mxu0 0
        %1836 = vmatmul.mubr.bf16.gmra.mrb[0].mxu0 %v1798
        %v1837 = vpop.f32.mrb[0].mxu0
        %v1838 = vadd.f32 0.0, %v1837
        %v1839 = vpop.f32.mrb[0].mxu0
        %v1840 = vpop.f32.mrb[0].mxu0
        %v1841 = vpop.f32.mrb[0].mxu0
        %1842 = vdwg.mxu0
        %v1843 = vmul.f32 %v1838, 0.35355338
        %v1844 = vadd.f32 %v1843, %v796
        %v1845 = vsel %vm744, %v1844, -inf
        %1846 = vmax.xlane.f32.xlu0 %v1845
        %v1847 = vpop.xlane.xlu0 %1846
        %v1848 = vsub.f32 %v1844, %v1847
        %v1849 = vmul.f32 %v1848, 1.442695
        %v1850 = vpow.pop %v1849
        %v1851 = vsel %vm744, %v1850, 0.0
        %1852 = vadd.xlane.f32.xlu0 %v1851
        %v1853 = vpop.xlane.xlu0 %1852
        %v1854 = vrcp.pop %v1853
        %v1855 = vmul.f32 %v1850, %v1854
        %v1856 = vpack.c.bf16 %v1855, %v1855
        %1857 = vrot.lane.b32.xlu0 %v1569, 48
        %v1858 = vpop.permute.xlu0 %1857
        %v1860 = vsel %vm744, %v1856, 0
        %v1863 = vsel %vm816, %v1858, 0
        %1865 = vmatprep.subr.bf16.mxu0 0
        %1866 = vmatpush1.bf16.msra.mxu0 %v1863
        %1867 = vmatprep.subr.bf16.mxu0 0
        %1868 = vmatpush1.bf16.msra.mxu0 0
        %1869 = vmatprep.subr.bf16.mxu0 0
        %1870 = vmatpush1.bf16.msra.mxu0 0
        %1871 = vmatprep.subr.bf16.mxu0 0
        %1872 = vmatpush1.bf16.msra.mxu0 0
        %1873 = vmatprep.subr.bf16.mxu0 0
        %1874 = vmatpush1.bf16.msra.mxu0 0
        %1875 = vmatprep.subr.bf16.mxu0 0
        %1876 = vmatpush1.bf16.msra.mxu0 0
        %1877 = vmatprep.subr.bf16.mxu0 0
        %1878 = vmatpush1.bf16.msra.mxu0 0
        %1879 = vmatprep.subr.bf16.mxu0 0
        %1880 = vmatpush1.bf16.msra.mxu0 0
        %1881 = vmatprep.subr.bf16.mxu0 0
        %1882 = vmatpush1.bf16.msra.mxu0 0
        %1883 = vmatprep.subr.bf16.mxu0 0
        %1884 = vmatpush1.bf16.msra.mxu0 0
        %1885 = vmatprep.subr.bf16.mxu0 0
        %1886 = vmatpush1.bf16.msra.mxu0 0
        %1887 = vmatprep.subr.bf16.mxu0 0
        %1888 = vmatpush1.bf16.msra.mxu0 0
        %1889 = vmatprep.subr.bf16.mxu0 0
        %1890 = vmatpush1.bf16.msra.mxu0 0
        %1891 = vmatprep.subr.bf16.mxu0 0
        %1892 = vmatpush1.bf16.msra.mxu0 0
        %1893 = vmatprep.subr.bf16.mxu0 0
        %1894 = vmatpush1.bf16.msra.mxu0 0
        %1895 = vmatprep.subr.bf16.mxu0 0
        %1896 = vmatpush1.bf16.msra.mxu0 0
        %1897 = vmatprep.mubr.bf16.mxu0 0
        %1898 = vmatmul.mubr.bf16.gmra.mrb[0].mxu0 %v1860
        %v1899 = vpop.f32.mrb[0].mxu0
        %v1900 = vadd.f32 0.0, %v1899
        %v1901 = vpop.f32.mrb[0].mxu0
        %v1902 = vpop.f32.mrb[0].mxu0
        %v1903 = vpop.f32.mrb[0].mxu0
        %1904 = vdwg.mxu0
        %1905 = vrot.lane.b32.xlu0 %v1569, 104
        %v1906 = vpop.permute.xlu0 %1905
        %1907 = vrot.lane.b32.xlu0 %v1569, 72
        %v1908 = vpop.permute.xlu0 %1907
        %v1910 = vsel %vm744, %v1906, 0
        %v1913 = vsel %vm744, %v1908, 0
        %1915 = vmatprep.subr.bf16.mxu0 0
        %1916 = vmatpush1.bf16.xpose.msra.mxu0 %v1913
        %1917 = vmatprep.subr.bf16.mxu0 0
        %1918 = vmatpush1.bf16.xpose.msra.mxu0 0
        %1919 = vmatprep.subr.bf16.mxu0 0
        %1920 = vmatpush1.bf16.xpose.msra.mxu0 0
        %1921 = vmatprep.subr.bf16.mxu0 0
        %1922 = vmatpush1.bf16.xpose.msra.mxu0 0
        %1923 = vmatprep.subr.bf16.mxu0 0
        %1924 = vmatpush1.bf16.xpose.msra.mxu0 0
        %1925 = vmatprep.subr.bf16.mxu0 0
        %1926 = vmatpush1.bf16.xpose.msra.mxu0 0
        %1927 = vmatprep.subr.bf16.mxu0 0
        %1928 = vmatpush1.bf16.xpose.msra.mxu0 0
        %1929 = vmatprep.subr.bf16.mxu0 0
        %1930 = vmatpush1.bf16.xpose.msra.mxu0 0
        %1931 = vmatprep.subr.bf16.mxu0 0
        %1932 = vmatpush1.bf16.xpose.msra.mxu0 0
        %1933 = vmatprep.subr.bf16.mxu0 0
        %1934 = vmatpush1.bf16.xpose.msra.mxu0 0
        %1935 = vmatprep.subr.bf16.mxu0 0
        %1936 = vmatpush1.bf16.xpose.msra.mxu0 0
        %1937 = vmatprep.subr.bf16.mxu0 0
        %1938 = vmatpush1.bf16.xpose.msra.mxu0 0
        %1939 = vmatprep.subr.bf16.mxu0 0
        %1940 = vmatpush1.bf16.xpose.msra.mxu0 0
        %1941 = vmatprep.subr.bf16.mxu0 0
        %1942 = vmatpush1.bf16.xpose.msra.mxu0 0
        %1943 = vmatprep.subr.bf16.mxu0 0
        %1944 = vmatpush1.bf16.xpose.msra.mxu0 0
        %1945 = vmatprep.subr.bf16.mxu0 0
        %1946 = vmatpush1.bf16.xpose.msra.mxu0 0
        %1947 = vmatprep.mubr.bf16.mxu0 0
        %1948 = vmatmul.mubr.bf16.gmra.mrb[0].mxu0 %v1910
        %v1949 = vpop.f32.mrb[0].mxu0
        %v1950 = vadd.f32 0.0, %v1949
        %v1951 = vpop.f32.mrb[0].mxu0
        %v1952 = vpop.f32.mrb[0].mxu0
        %v1953 = vpop.f32.mrb[0].mxu0
        %1954 = vdwg.mxu0
        %v1955 = vmul.f32 %v1950, 0.35355338
        %v1956 = vadd.f32 %v1955, %v796
        %v1957 = vsel %vm744, %v1956, -inf
        %1958 = vmax.xlane.f32.xlu0 %v1957
        %v1959 = vpop.xlane.xlu0 %1958
        %v1960 = vsub.f32 %v1956, %v1959
        %v1961 = vmul.f32 %v1960, 1.442695
        %v1962 = vpow.pop %v1961
        %v1963 = vsel %vm744, %v1962, 0.0
        %1964 = vadd.xlane.f32.xlu0 %v1963
        %v1965 = vpop.xlane.xlu0 %1964
        %v1966 = vrcp.pop %v1965
        %v1967 = vmul.f32 %v1962, %v1966
        %v1968 = vpack.c.bf16 %v1967, %v1967
        %1969 = vrot.lane.b32.xlu0 %v1569, 40
        %v1970 = vpop.permute.xlu0 %1969
        %v1972 = vsel %vm744, %v1968, 0
        %v1975 = vsel %vm816, %v1970, 0
        %1977 = vmatprep.subr.bf16.mxu0 0
        %1978 = vmatpush1.bf16.msra.mxu0 %v1975
        %1979 = vmatprep.subr.bf16.mxu0 0
        %1980 = vmatpush1.bf16.msra.mxu0 0
        %1981 = vmatprep.subr.bf16.mxu0 0
        %1982 = vmatpush1.bf16.msra.mxu0 0
        %1983 = vmatprep.subr.bf16.mxu0 0
        %1984 = vmatpush1.bf16.msra.mxu0 0
        %1985 = vmatprep.subr.bf16.mxu0 0
        %1986 = vmatpush1.bf16.msra.mxu0 0
        %1987 = vmatprep.subr.bf16.mxu0 0
        %1988 = vmatpush1.bf16.msra.mxu0 0
        %1989 = vmatprep.subr.bf16.mxu0 0
        %1990 = vmatpush1.bf16.msra.mxu0 0
        %1991 = vmatprep.subr.bf16.mxu0 0
        %1992 = vmatpush1.bf16.msra.mxu0 0
        %1993 = vmatprep.subr.bf16.mxu0 0
        %1994 = vmatpush1.bf16.msra.mxu0 0
        %1995 = vmatprep.subr.bf16.mxu0 0
        %1996 = vmatpush1.bf16.msra.mxu0 0
        %1997 = vmatprep.subr.bf16.mxu0 0
        %1998 = vmatpush1.bf16.msra.mxu0 0
        %1999 = vmatprep.subr.bf16.mxu0 0
        %2000 = vmatpush1.bf16.msra.mxu0 0
        %2001 = vmatprep.subr.bf16.mxu0 0
        %2002 = vmatpush1.bf16.msra.mxu0 0
        %2003 = vmatprep.subr.bf16.mxu0 0
        %2004 = vmatpush1.bf16.msra.mxu0 0
        %2005 = vmatprep.subr.bf16.mxu0 0
        %2006 = vmatpush1.bf16.msra.mxu0 0
        %2007 = vmatprep.subr.bf16.mxu0 0
        %2008 = vmatpush1.bf16.msra.mxu0 0
        %2009 = vmatprep.mubr.bf16.mxu0 0
        %2010 = vmatmul.mubr.bf16.gmra.mrb[0].mxu0 %v1972
        %v2011 = vpop.f32.mrb[0].mxu0
        %v2012 = vadd.f32 0.0, %v2011
        %v2013 = vpop.f32.mrb[0].mxu0
        %v2014 = vpop.f32.mrb[0].mxu0
        %v2015 = vpop.f32.mrb[0].mxu0
        %2016 = vdwg.mxu0
        %2018 = vrot.lane.b32.xlu0 %v1788, 8
        %v2019 = vpop.permute.xlu0 %2018
        %2022 = vrot.lane.b32.xlu0 %v1900, 16
        %v2023 = vpop.permute.xlu0 %2022
        %2026 = vrot.lane.b32.xlu0 %v2012, 24
        %v2027 = vpop.permute.xlu0 %2026
        %v2029 = vsel %vm744, %v1676, %v2019
        %v2030 = vsel %vm1209, %v2029, %v2023
        %v2031 = vsel %vm1211, %v2030, %v2027
        %v2032 = vpack.c.bf16 %v2031, %v2031
        %s2033 = scalar_lea.vmem %s6, 16
        %v2034 = vld [vmem:[%s2033] sm:$0xf]
        %v2035 = vld [vmem:[%s2033 + $0x4] sm:$0xf]
        %v2036 = vld [vmem:[%s2033 + $0x8] sm:$0xf]
        %v2037 = vld [vmem:[%s2033 + $0xc] sm:$0xf]
        %s2038 = scalar_lea.vmem %s7, 1
        %v2039 = vld [vmem:[%s2038] sm:$0x1]
        %v2041 = vlaneseq
        %v2042 = vshrl.u32 %v2041, 7
        %v2043 = vsub.s32 0, %v2042
        %v2044 = vrot.slane %v2039, %v2043
        %v2050 = vunpack.c.l.b16 %v2034
        %v2051 = vunpack.c.l.b16 %v2035
        %v2052 = vunpack.c.l.b16 %v2036
        %v2053 = vunpack.c.l.b16 %v2037
        %v2054 = vpack.c.b16 %v2051, %v2050
        %v2055 = vpack.c.b16 %v2053, %v2052
        %v2059 = vsel %vm644, %v2032, 0
        %2061 = vmatprep.subr.bf16.mxu0 0
        %2062 = vmatpush1.bf16.msra.mxu0 %v2054
        %2063 = vmatprep.subr.bf16.mxu0 0
        %2064 = vmatpush1.bf16.msra.mxu0 %v2055
        %2065 = vmatprep.subr.bf16.mxu0 0
        %2066 = vmatpush1.bf16.msra.mxu0 0
        %2067 = vmatprep.subr.bf16.mxu0 0
        %2068 = vmatpush1.bf16.msra.mxu0 0
        %2069 = vmatprep.subr.bf16.mxu0 0
        %2070 = vmatpush1.bf16.msra.mxu0 0
        %2071 = vmatprep.subr.bf16.mxu0 0
        %2072 = vmatpush1.bf16.msra.mxu0 0
        %2073 = vmatprep.subr.bf16.mxu0 0
        %2074 = vmatpush1.bf16.msra.mxu0 0
        %2075 = vmatprep.subr.bf16.mxu0 0
        %2076 = vmatpush1.bf16.msra.mxu0 0
        %2077 = vmatprep.subr.bf16.mxu0 0
        %2078 = vmatpush1.bf16.msra.mxu0 0
        %2079 = vmatprep.subr.bf16.mxu0 0
        %2080 = vmatpush1.bf16.msra.mxu0 0
        %2081 = vmatprep.subr.bf16.mxu0 0
        %2082 = vmatpush1.bf16.msra.mxu0 0
        %2083 = vmatprep.subr.bf16.mxu0 0
        %2084 = vmatpush1.bf16.msra.mxu0 0
        %2085 = vmatprep.subr.bf16.mxu0 0
        %2086 = vmatpush1.bf16.msra.mxu0 0
        %2087 = vmatprep.subr.bf16.mxu0 0
        %2088 = vmatpush1.bf16.msra.mxu0 0
        %2089 = vmatprep.subr.bf16.mxu0 0
        %2090 = vmatpush1.bf16.msra.mxu0 0
        %2091 = vmatprep.subr.bf16.mxu0 0
        %2092 = vmatpush1.bf16.msra.mxu0 0
        %2093 = vmatprep.mubr.bf16.mxu0 0
        %2094 = vmatmul.mubr.bf16.gmra.mrb[0].mxu0 %v2059
        %v2095 = vpop.f32.mrb[0].mxu0
        %v2096 = vadd.f32 %v2044, %v2095
        %v2097 = vpop.f32.mrb[0].mxu0
        %v2098 = vpop.f32.mrb[0].mxu0
        %v2099 = vpop.f32.mrb[0].mxu0
        %2100 = vdwg.mxu0
        %v2101 = vadd.f32 %v2096, %v1499
        %s2102 = scalar_lea.vmem %s8, 1
        %v2103 = vld [vmem:[%s2102] sm:$0x1]
        %s2104 = scalar_lea.vmem %s9, 1
        %v2105 = vld [vmem:[%s2104] sm:$0x1]
        %v2106 = vsel %vm644, %v2101, 0.0
        %2107 = vadd.xlane.f32.xlu0 %v2106
        %v2108 = vpop.xlane.xlu0 %2107
        %v2109 = vmul.f32 %v2108, %v648
        %v2110 = vsub.f32 %v2101, %v2109
        %v2111 = vmul.f32 %v2110, %v2110
        %v2112 = vsel %vm644, %v2111, 0.0
        %2113 = vadd.xlane.f32.xlu0 %v2112
        %v2114 = vpop.xlane.xlu0 %2113
        %v2115 = vmul.f32 %v2114, %v648
        %v2116 = vadd.f32 %v2115, 1e-12
        %v2117 = vrsqrt.pop %v2116
        %v2118 = vmul.f32 %v2110, %v2117
        %v2120 = vlaneseq
        %v2121 = vshrl.u32 %v2120, 7
        %v2122 = vsub.s32 0, %v2121
        %v2123 = vrot.slane %v2103, %v2122
        %v2125 = vmul.f32 %v2118, %v2123
        %v2127 = vlaneseq
        %v2128 = vshrl.u32 %v2127, 7
        %v2129 = vsub.s32 0, %v2128
        %v2130 = vrot.slane %v2105, %v2129
        %v2132 = vadd.f32 %v2125, %v2130
        %v2133 = vpack.c.bf16 %v2132, %v2132
        %s2134 = scalar_lea.vmem %s10, 16
        %v2135 = vld [vmem:[%s2134] sm:$0xf]
        %v2136 = vld [vmem:[%s2134 + $0x4] sm:$0xf]
        %v2137 = vld [vmem:[%s2134 + $0x8] sm:$0xf]
        %v2138 = vld [vmem:[%s2134 + $0xc] sm:$0xf]
        %s2139 = scalar_lea.vmem %s11, 1
        %v2140 = vld [vmem:[%s2139] sm:$0x1]
        %v2142 = vlaneseq
        %v2143 = vshrl.u32 %v2142, 7
        %v2144 = vsub.s32 0, %v2143
        %v2145 = vrot.slane %v2140, %v2144
        %v2151 = vunpack.c.l.b16 %v2135
        %v2152 = vunpack.c.l.b16 %v2136
        %v2153 = vunpack.c.l.b16 %v2137
        %v2154 = vunpack.c.l.b16 %v2138
        %v2155 = vpack.c.b16 %v2152, %v2151
        %v2156 = vpack.c.b16 %v2154, %v2153
        %v2160 = vsel %vm644, %v2133, 0
        %2162 = vmatprep.subr.bf16.mxu0 0
        %2163 = vmatpush1.bf16.msra.mxu0 %v2155
        %2164 = vmatprep.subr.bf16.mxu0 0
        %2165 = vmatpush1.bf16.msra.mxu0 %v2156
        %2166 = vmatprep.subr.bf16.mxu0 0
        %2167 = vmatpush1.bf16.msra.mxu0 0
        %2168 = vmatprep.subr.bf16.mxu0 0
        %2169 = vmatpush1.bf16.msra.mxu0 0
        %2170 = vmatprep.subr.bf16.mxu0 0
        %2171 = vmatpush1.bf16.msra.mxu0 0
        %2172 = vmatprep.subr.bf16.mxu0 0
        %2173 = vmatpush1.bf16.msra.mxu0 0
        %2174 = vmatprep.subr.bf16.mxu0 0
        %2175 = vmatpush1.bf16.msra.mxu0 0
        %2176 = vmatprep.subr.bf16.mxu0 0
        %2177 = vmatpush1.bf16.msra.mxu0 0
        %2178 = vmatprep.subr.bf16.mxu0 0
        %2179 = vmatpush1.bf16.msra.mxu0 0
        %2180 = vmatprep.subr.bf16.mxu0 0
        %2181 = vmatpush1.bf16.msra.mxu0 0
        %2182 = vmatprep.subr.bf16.mxu0 0
        %2183 = vmatpush1.bf16.msra.mxu0 0
        %2184 = vmatprep.subr.bf16.mxu0 0
        %2185 = vmatpush1.bf16.msra.mxu0 0
        %2186 = vmatprep.subr.bf16.mxu0 0
        %2187 = vmatpush1.bf16.msra.mxu0 0
        %2188 = vmatprep.subr.bf16.mxu0 0
        %2189 = vmatpush1.bf16.msra.mxu0 0
        %2190 = vmatprep.subr.bf16.mxu0 0
        %2191 = vmatpush1.bf16.msra.mxu0 0
        %2192 = vmatprep.subr.bf16.mxu0 0
        %2193 = vmatpush1.bf16.msra.mxu0 0
        %2194 = vmatprep.mubr.bf16.mxu0 0
        %2195 = vmatmul.mubr.bf16.gmra.mrb[0].mxu0 %v2160
        %v2196 = vpop.f32.mrb[0].mxu0
        %v2197 = vadd.f32 %v2145, %v2196
        %v2198 = vpop.f32.mrb[0].mxu0
        %v2199 = vpop.f32.mrb[0].mxu0
        %v2200 = vpop.f32.mrb[0].mxu0
        %2201 = vdwg.mxu0
        %v2202 = vmul.f32 %v2197, 0.5
        %v2203 = vmul.f32 %v2197, 0.044715
        %v2204 = vmul.f32 %v2203, %v2197
        %v2205 = vmul.f32 %v2204, %v2197
        %v2206 = vadd.f32 %v2197, %v2205
        %v2207 = vmul.f32 %v2206, 0.7978846
        %v2208 = vtanh.pop %v2207
        %v2209 = vadd.f32 %v2208, 1.0
        %v2210 = vmul.f32 %v2202, %v2209
        %v2211 = vpack.c.bf16 %v2210, %v2210
        %s2212 = scalar_lea.vmem %s12, 32
        %v2213 = vld [vmem:[%s2212] sm:$0xf]
        %v2214 = vld [vmem:[%s2212 + $0x4] sm:$0xf]
        %v2215 = vld [vmem:[%s2212 + $0x8] sm:$0xf]
        %v2216 = vld [vmem:[%s2212 + $0xc] sm:$0xf]
        %v2217 = vld [vmem:[%s2212 + $0x10] sm:$0xf]
        %v2218 = vld [vmem:[%s2212 + $0x14] sm:$0xf]
        %v2219 = vld [vmem:[%s2212 + $0x18] sm:$0xf]
        %v2220 = vld [vmem:[%s2212 + $0x1c] sm:$0xf]
        %s2221 = scalar_lea.vmem %s13, 1
        %v2222 = vld [vmem:[%s2221] sm:$0x1]
        %v2224 = vlaneseq
        %v2225 = vshrl.u32 %v2224, 7
        %v2226 = vsub.s32 0, %v2225
        %v2227 = vrot.slane %v2222, %v2226
        %v2237 = vunpack.c.l.b16 %v2213
        %v2238 = vunpack.c.l.b16 %v2214
        %v2239 = vunpack.c.l.b16 %v2215
        %v2240 = vunpack.c.l.b16 %v2216
        %v2241 = vunpack.c.l.b16 %v2217
        %v2242 = vunpack.c.l.b16 %v2218
        %v2243 = vunpack.c.l.b16 %v2219
        %v2244 = vunpack.c.l.b16 %v2220
        %v2245 = vpack.c.b16 %v2238, %v2237
        %v2246 = vpack.c.b16 %v2240, %v2239
        %v2247 = vpack.c.b16 %v2242, %v2241
        %v2248 = vpack.c.b16 %v2244, %v2243
        %v2254 = vsel %vm1426, %v2211, 0
        %2256 = vmatprep.subr.bf16.mxu0 0
        %2257 = vmatpush1.bf16.msra.mxu0 %v2245
        %2258 = vmatprep.subr.bf16.mxu0 0
        %2259 = vmatpush1.bf16.msra.mxu0 %v2246
        %2260 = vmatprep.subr.bf16.mxu0 0
        %2261 = vmatpush1.bf16.msra.mxu0 %v2247
        %2262 = vmatprep.subr.bf16.mxu0 0
        %2263 = vmatpush1.bf16.msra.mxu0 %v2248
        %2264 = vmatprep.subr.bf16.mxu0 0
        %2265 = vmatpush1.bf16.msra.mxu0 0
        %2266 = vmatprep.subr.bf16.mxu0 0
        %2267 = vmatpush1.bf16.msra.mxu0 0
        %2268 = vmatprep.subr.bf16.mxu0 0
        %2269 = vmatpush1.bf16.msra.mxu0 0
        %2270 = vmatprep.subr.bf16.mxu0 0
        %2271 = vmatpush1.bf16.msra.mxu0 0
        %2272 = vmatprep.subr.bf16.mxu0 0
        %2273 = vmatpush1.bf16.msra.mxu0 0
        %2274 = vmatprep.subr.bf16.mxu0 0
        %2275 = vmatpush1.bf16.msra.mxu0 0
        %2276 = vmatprep.subr.bf16.mxu0 0
        %2277 = vmatpush1.bf16.msra.mxu0 0
        %2278 = vmatprep.subr.bf16.mxu0 0
        %2279 = vmatpush1.bf16.msra.mxu0 0
        %2280 = vmatprep.subr.bf16.mxu0 0
        %2281 = vmatpush1.bf16.msra.mxu0 0
        %2282 = vmatprep.subr.bf16.mxu0 0
        %2283 = vmatpush1.bf16.msra.mxu0 0
        %2284 = vmatprep.subr.bf16.mxu0 0
        %2285 = vmatpush1.bf16.msra.mxu0 0
        %2286 = vmatprep.subr.bf16.mxu0 0
        %2287 = vmatpush1.bf16.msra.mxu0 0
        %2288 = vmatprep.mubr.bf16.mxu0 0
        %2289 = vmatmul.mubr.bf16.gmra.mrb[0].mxu0 %v2254
        %v2290 = vpop.f32.mrb[0].mxu0
        %v2291 = vadd.f32 %v2227, %v2290
        %v2292 = vpop.f32.mrb[0].mxu0
        %v2293 = vpop.f32.mrb[0].mxu0
        %v2294 = vpop.f32.mrb[0].mxu0
        %2295 = vdwg.mxu0
        %v2296 = vadd.f32 %v2291, %v2132
        %s2297 = scalar_lea.vmem %s14, 1
        %v2298 = vld [vmem:[%s2297] sm:$0x1]
        %s2299 = scalar_lea.vmem %s15, 1
        %v2300 = vld [vmem:[%s2299] sm:$0x1]
        %v2301 = vsel %vm644, %v2296, 0.0
        %2302 = vadd.xlane.f32.xlu0 %v2301
        %v2303 = vpop.xlane.xlu0 %2302
        %v2304 = vmul.f32 %v2303, %v648
        %v2305 = vsub.f32 %v2296, %v2304
        %v2306 = vmul.f32 %v2305, %v2305
        %v2307 = vsel %vm644, %v2306, 0.0
        %2308 = vadd.xlane.f32.xlu0 %v2307
        %v2309 = vpop.xlane.xlu0 %2308
        %v2310 = vmul.f32 %v2309, %v648
        %v2311 = vadd.f32 %v2310, 1e-12
        %v2312 = vrsqrt.pop %v2311
        %v2313 = vmul.f32 %v2305, %v2312
        %v2315 = vlaneseq
        %v2316 = vshrl.u32 %v2315, 7
        %v2317 = vsub.s32 0, %v2316
        %v2318 = vrot.slane %v2298, %v2317
        %v2320 = vmul.f32 %v2313, %v2318
        %v2322 = vlaneseq
        %v2323 = vshrl.u32 %v2322, 7
        %v2324 = vsub.s32 0, %v2323
        %v2325 = vrot.slane %v2300, %v2324
        %v2327 = vadd.f32 %v2320, %v2325
        %v2328 = vpack.c.bf16 %v2327, %v2327
        %v2329 = vld [vmem:[%s16] sm:$0xf]
        %v2330 = vld [vmem:[%s16 + $0x4] sm:$0xf]
        %v2331 = vld [vmem:[%s16 + $0x8] sm:$0xf]
        %v2332 = vld [vmem:[%s16 + $0xc] sm:$0xf]
        %v2333 = vld [vmem:[%s17] sm:$0x1]
        %v2335 = vlaneseq
        %v2336 = vshrl.u32 %v2335, 7
        %v2337 = vsub.s32 0, %v2336
        %v2338 = vrot.slane %v2333, %v2337
        %v2344 = vunpack.c.l.b16 %v2329
        %v2345 = vunpack.c.l.b16 %v2330
        %v2346 = vunpack.c.l.b16 %v2331
        %v2347 = vunpack.c.l.b16 %v2332
        %v2348 = vpack.c.b16 %v2345, %v2344
        %v2349 = vpack.c.b16 %v2347, %v2346
        %v2353 = vsel %vm644, %v2328, 0
        %2355 = vmatprep.subr.bf16.mxu0 0
        %2356 = vmatpush1.bf16.msra.mxu0 %v2348
        %2357 = vmatprep.subr.bf16.mxu0 0
        %2358 = vmatpush1.bf16.msra.mxu0 %v2349
        %2359 = vmatprep.subr.bf16.mxu0 0
        %2360 = vmatpush1.bf16.msra.mxu0 0
        %2361 = vmatprep.subr.bf16.mxu0 0
        %2362 = vmatpush1.bf16.msra.mxu0 0
        %2363 = vmatprep.subr.bf16.mxu0 0
        %2364 = vmatpush1.bf16.msra.mxu0 0
        %2365 = vmatprep.subr.bf16.mxu0 0
        %2366 = vmatpush1.bf16.msra.mxu0 0
        %2367 = vmatprep.subr.bf16.mxu0 0
        %2368 = vmatpush1.bf16.msra.mxu0 0
        %2369 = vmatprep.subr.bf16.mxu0 0
        %2370 = vmatpush1.bf16.msra.mxu0 0
        %2371 = vmatprep.subr.bf16.mxu0 0
        %2372 = vmatpush1.bf16.msra.mxu0 0
        %2373 = vmatprep.subr.bf16.mxu0 0
        %2374 = vmatpush1.bf16.msra.mxu0 0
        %2375 = vmatprep.subr.bf16.mxu0 0
        %2376 = vmatpush1.bf16.msra.mxu0 0
        %2377 = vmatprep.subr.bf16.mxu0 0
        %2378 = vmatpush1.bf16.msra.mxu0 0
        %2379 = vmatprep.subr.bf16.mxu0 0
        %2380 = vmatpush1.bf16.msra.mxu0 0
        %2381 = vmatprep.subr.bf16.mxu0 0
        %2382 = vmatpush1.bf16.msra.mxu0 0
        %2383 = vmatprep.subr.bf16.mxu0 0
        %2384 = vmatpush1.bf16.msra.mxu0 0
        %2385 = vmatprep.subr.bf16.mxu0 0
        %2386 = vmatpush1.bf16.msra.mxu0 0
        %2387 = vmatprep.mubr.bf16.mxu0 0
        %2388 = vmatmul.mubr.bf16.gmra.mrb[0].mxu0 %v2353
        %v2389 = vpop.f32.mrb[0].mxu0
        %v2390 = vadd.f32 %v2338, %v2389
        %v2391 = vpop.f32.mrb[0].mxu0
        %v2392 = vpop.f32.mrb[0].mxu0
        %v2393 = vpop.f32.mrb[0].mxu0
        %2394 = vdwg.mxu0
        %v2395 = vmax.f32 %v2390, 0.0
        %v2396 = vpack.c.bf16 %v2395, %v2395
        %v2397 = vld [vmem:[%s18] sm:$0xf]
        %v2398 = vld [vmem:[%s18 + $0x4] sm:$0xf]
        %v2399 = vld [vmem:[%s18 + $0x8] sm:$0xf]
        %v2400 = vld [vmem:[%s18 + $0xc] sm:$0xf]
        %v2401 = vld [vmem:[%s19] sm:$0x1]
        %v2403 = vlaneseq
        %v2404 = vshrl.u32 %v2403, 7
        %v2405 = vsub.s32 0, %v2404
        %v2406 = vrot.slane %v2401, %v2405
        %v2412 = vunpack.c.l.b16 %v2397
        %v2413 = vunpack.c.l.b16 %v2398
        %v2414 = vunpack.c.l.b16 %v2399
        %v2415 = vunpack.c.l.b16 %v2400
        %v2416 = vpack.c.b16 %v2413, %v2412
        %v2417 = vpack.c.b16 %v2415, %v2414
        %v2421 = vsel %vm644, %v2396, 0
        %2423 = vmatprep.subr.bf16.mxu0 0
        %2424 = vmatpush1.bf16.msra.mxu0 %v2416
        %2425 = vmatprep.subr.bf16.mxu0 0
        %2426 = vmatpush1.bf16.msra.mxu0 %v2417
        %2427 = vmatprep.subr.bf16.mxu0 0
        %2428 = vmatpush1.bf16.msra.mxu0 0
        %2429 = vmatprep.subr.bf16.mxu0 0
        %2430 = vmatpush1.bf16.msra.mxu0 0
        %2431 = vmatprep.subr.bf16.mxu0 0
        %2432 = vmatpush1.bf16.msra.mxu0 0
        %2433 = vmatprep.subr.bf16.mxu0 0
        %2434 = vmatpush1.bf16.msra.mxu0 0
        %2435 = vmatprep.subr.bf16.mxu0 0
        %2436 = vmatpush1.bf16.msra.mxu0 0
        %2437 = vmatprep.subr.bf16.mxu0 0
        %2438 = vmatpush1.bf16.msra.mxu0 0
        %2439 = vmatprep.subr.bf16.mxu0 0
        %2440 = vmatpush1.bf16.msra.mxu0 0
        %2441 = vmatprep.subr.bf16.mxu0 0
        %2442 = vmatpush1.bf16.msra.mxu0 0
        %2443 = vmatprep.subr.bf16.mxu0 0
        %2444 = vmatpush1.bf16.msra.mxu0 0
        %2445 = vmatprep.subr.bf16.mxu0 0
        %2446 = vmatpush1.bf16.msra.mxu0 0
        %2447 = vmatprep.subr.bf16.mxu0 0
        %2448 = vmatpush1.bf16.msra.mxu0 0
        %2449 = vmatprep.subr.bf16.mxu0 0
        %2450 = vmatpush1.bf16.msra.mxu0 0
        %2451 = vmatprep.subr.bf16.mxu0 0
        %2452 = vmatpush1.bf16.msra.mxu0 0
        %2453 = vmatprep.subr.bf16.mxu0 0
        %2454 = vmatpush1.bf16.msra.mxu0 0
        %2455 = vmatprep.mubr.bf16.mxu0 0
        %2456 = vmatmul.mubr.bf16.gmra.mrb[0].mxu0 %v2421
        %v2457 = vpop.f32.mrb[0].mxu0
        %v2458 = vadd.f32 %v2406, %v2457
        %v2459 = vpop.f32.mrb[0].mxu0
        %v2460 = vpop.f32.mrb[0].mxu0
        %v2461 = vpop.f32.mrb[0].mxu0
        %2462 = vdwg.mxu0
        %2463 = vst.msk [vmem:[%s631] sm:$0xff] %vm1209, %v2458
        %s2464 = sand.u32 %s472, 1
        %s2465 = scalar_lea.sflag [#allocation3], %s2464
        %s2466 = sand.u32 %s472, 1
        %s2467 = smul.addr %s2466, 8
        %s2468 = scalar_lea.vmem [#allocation2], %s2467
        // Predicated region
        $region101: #{bert_enc_forward.1} parent=99 // pred_check
          %p2469 = pneg %p482
        $region102: #{bert_enc_forward.1} parent=99 // pred_check_branch
          %2471 = sbr.rel (%p2469) target = $region104
        $region103: #{bert_enc_forward.1} parent=99 // pred_region
          %s2473 = ssub.s32 128, 128
          %2474 = vsyncadd %s2465, %s2473
          %s2475 = smul.addr %s34, 128
          %s2476 = scalar_lea.hbm %s20, %s2475
          %s2478 = sshll.u32 %s2468, 4
          %s2479 = int_to_ptr.vmem [resolvable:$true] %s2478
          %2481 = dma.vmem_to_hbm [thread:$0]  %s2479, 128, %s2476, %s2465
        $region104: #{bert_enc_forward.1} parent=99 // pred_fallthru
          _
      $region100: #{bert_enc_forward.1} parent=5 // pred_fallthru
        _
      %p2482 = scmp.le.s32.totalorder 2, %s29
      // Predicated region
      $region105: #{bert_enc_forward.1} parent=5 // pred_check
        %p2483 = pneg %p2482
      $region106: #{bert_enc_forward.1} parent=5 // pred_check_branch
        %2485 = sbr.rel (%p2483) target = $region108
      $region107: #{bert_enc_forward.1} parent=5 // pred_region
        %s2486 = ssub.s32 %s29, 2
        // Predicated region
        $region109: #{bert_enc_forward.1} parent=107 // pred_check
          %p2487 = pneg %p488
        $region110: #{bert_enc_forward.1} parent=107 // pred_check_branch
          %2489 = sbr.rel (%p2487) target = $region112
        $region111: #{bert_enc_forward.1} parent=107 // pred_region
          %s2490 = sand.u32 %s473, 1
          %s2491 = scalar_lea.sflag [#allocation3], %s2490
          %s2492 = sand.u32 %s473, 1
          %s2493 = smul.addr %s2492, 8
          %s2494 = scalar_lea.vmem [#allocation2], %s2493
          %2495 = dma.done %s2491, 128
        $region112: #{bert_enc_forward.1} parent=107 // pred_fallthru
          _
      $region108: #{bert_enc_forward.1} parent=5 // pred_fallthru
        _
    $region6: #{bert_enc_forward.1} parent=1 // loop_footer
      %s33 = sadd.s32 1, %s29
    $region7: #{bert_enc_forward.1} parent=1 // loop_footer_branch
      %28 = sbr.rel target = $region3
    $region8: #{bert_enc_forward.1} parent=1 // loop_exit
      _
    %2496 = vsyncpa [#allocation3], 1
    %s2497 = scalar_lea.sflag [#allocation3], 1
    %2498 = vsyncpa %s2497, 1

</llo_original>
